<compile_context>
chip_gen: v7x
topology: tpu7x:2x2x1
jax: 0.10.0
libtpu: 0.0.40
codegen_flags: <defaults>
</compile_context>

<pallas_src>
import math

import jax
import jax.numpy as jnp
from jax.experimental import pallas as pl
from jax.experimental.pallas import tpu as pltpu


def _make_kernel(hidden_size: int, num_heads: int):
    H = hidden_size
    NH = num_heads
    HD = H // NH
    assert HD * NH == H, "hidden_size must be divisible by num_heads"
    scale = 1.0 / math.sqrt(HD)

    def kernel(q_in_ref, kv_in_ref, gamma_ref, beta_ref,
               wq_ref, bq_ref, wkv_ref, bkv_ref, wo_ref, bo_ref, out_ref):
        Bb, Nq, _ = q_in_ref.shape
        S = kv_in_ref.shape[1]

        q_in = q_in_ref[...]        # (Bb, Nq, H) f32
        kv_in = kv_in_ref[...]      # (Bb, S,  H) f32
        gamma = gamma_ref[...]      # (1, H) f32
        beta = beta_ref[...]        # (1, H) f32

        # Flatten batch into rows; LayerNorm and projections are batch-independent.
        q_rows = q_in.reshape(Bb * Nq, H)
        kv_rows = kv_in.reshape(Bb * S, H)

        def layernorm(x):           # f32 elementwise
            mu = jnp.mean(x, axis=-1, keepdims=True)
            xc = x - mu
            var = jnp.mean(xc * xc, axis=-1, keepdims=True)
            return xc * jax.lax.rsqrt(var + 1e-6) * gamma + beta

        q_norm = layernorm(q_rows).astype(jnp.bfloat16)
        kv_norm = layernorm(kv_rows).astype(jnp.bfloat16)

        # Projections: bf16 operands, f32 accumulation on the MXU.
        q = jnp.dot(q_norm, wq_ref[...],
                    preferred_element_type=jnp.float32) + bq_ref[...]     # (Mq, H)
        q = q * scale               # fold 1/sqrt(head_dim) into q (smaller tensor)
        kv = jnp.dot(kv_norm, wkv_ref[...],
                     preferred_element_type=jnp.float32) + bkv_ref[...]   # (Mkv, 2H)
        k = kv[:, :H]               # lane-aligned splits of the fused projection
        v = kv[:, H:]

        def to_heads(x):
            # (rows, H) -> (NH, rows, HD): static lane slices stacked along a new
            # major axis (no lane-splitting reshape, no tiled-dim transpose).
            return jnp.stack([x[:, h * HD:(h + 1) * HD] for h in range(NH)],
                             axis=0).astype(jnp.bfloat16)

        outs = []
        for b in range(Bb):   # small static unroll over packed batch elements
            qh = to_heads(q[b * Nq:(b + 1) * Nq, :])   # (NH, Nq, HD)
            kh = to_heads(k[b * S:(b + 1) * S, :])     # (NH, S,  HD)
            vh = to_heads(v[b * S:(b + 1) * S, :])     # (NH, S,  HD)

            # Head-batched attention: single 3-D MXU contractions.
            scores = jnp.einsum("hqd,hkd->hqk", qh, kh,
                                preferred_element_type=jnp.float32)   # (NH, Nq, S)
            m = jnp.max(scores, axis=-1, keepdims=True)
            e = jnp.exp(scores - m)                                   # f32 softmax
            denom = jnp.sum(e, axis=-1, keepdims=True)
            probs = e * pl.reciprocal(denom, approx=True)             # EUP recip
            # TODO(synk): dropout on attn_probs omitted (inference / eval mode).

            ob = jnp.einsum("hqk,hkd->hqd", probs.astype(jnp.bfloat16), vh,
                            preferred_element_type=jnp.float32)       # (NH, Nq, HD)
            # Merge heads back onto the lane axis (RoPE-style lane concat).
            attn_b = jnp.concatenate([ob[h] for h in range(NH)], axis=-1)  # (Nq, H)
            outs.append(attn_b)

        attn = jnp.concatenate(outs, axis=0) if Bb > 1 else outs[0]   # (Bb*Nq, H)

        proj = jnp.dot(attn.astype(jnp.bfloat16), wo_ref[...],
                       preferred_element_type=jnp.float32) + bo_ref[...]
        # TODO(synk): output dropout omitted (inference / eval mode).
        out_ref[...] = (q_in + proj.reshape(Bb, Nq, H)).astype(out_ref.dtype)

    return kernel


def cross_attention_block(queries, keys_values, params, *, num_heads: int,
                          block_b: int | None = None):
    """queries: (B, Nq, H), keys_values: (B, S, H) -> (B, Nq, H)."""
    B, Nq, H = queries.shape
    _, S, _ = keys_values.shape

    if block_b is None:
        block_b = next(c for c in (8, 4, 2, 1) if B % c == 0)
    assert B % block_b == 0

    gamma = params["ln_gamma"].reshape(1, H).astype(jnp.float32)
    beta = params["ln_beta"].reshape(1, H).astype(jnp.float32)

    wqkv_t = params["qkv_w"].T                      # (H, 3H): x @ W.T semantics
    w_q = wqkv_t[:, :H].astype(jnp.bfloat16)        # (H, H)
    w_kv = wqkv_t[:, H:].astype(jnp.bfloat16)       # (H, 2H) fused K|V projection
    b_q = params["qkv_b"][:H].reshape(1, H).astype(jnp.float32)
    b_kv = params["qkv_b"][H:].reshape(1, 2 * H).astype(jnp.float32)
    w_o = params["out_w"].T.astype(jnp.bfloat16)    # (H, H)
    b_o = params["out_b"].reshape(1, H).astype(jnp.float32)

    kernel = _make_kernel(H, num_heads)

    def const(shape):
        return pl.BlockSpec(shape, lambda b: (0,) * len(shape))

    grid = (B // block_b,)
    return pl.pallas_call(
        kernel,
        out_shape=jax.ShapeDtypeStruct((B, Nq, H), queries.dtype),
        grid_spec=pltpu.PrefetchScalarGridSpec(
            num_scalar_prefetch=0,
            grid=grid,
            in_specs=[
                pl.BlockSpec((block_b, Nq, H), lambda b: (b, 0, 0)),  # queries
                pl.BlockSpec((block_b, S, H), lambda b: (b, 0, 0)),   # keys_values
                const((1, H)),          # ln gamma
                const((1, H)),          # ln beta
                const((H, H)),          # W_q  (bf16, pre-transposed)
                const((1, H)),          # b_q
                const((H, 2 * H)),      # W_kv (bf16, fused K|V, pre-transposed)
                const((1, 2 * H)),      # b_kv
                const((H, H)),          # W_o  (bf16, pre-transposed)
                const((1, H)),          # b_o
            ],
            out_specs=pl.BlockSpec((block_b, Nq, H), lambda b: (b, 0, 0)),
        ),
        compiler_params=pltpu.CompilerParams(
            dimension_semantics=("parallel",),
            vmem_limit_bytes=64 * 1024 * 1024),
    )(queries, keys_values, gamma, beta, w_q, b_q, w_kv, b_kv, w_o, b_o)


def init_params(key, hidden_size: int):
    k1, k2 = jax.random.split(key)
    return {
        "qkv_w": 0.02 * jax.random.normal(k1, (3 * hidden_size, hidden_size),
                                          jnp.float32),
        "qkv_b": jnp.zeros((3 * hidden_size,), jnp.float32),
        "out_w": 0.02 * jax.random.normal(k2, (hidden_size, hidden_size),
                                          jnp.float32),
        "out_b": jnp.zeros((hidden_size,), jnp.float32),
        "ln_gamma": jnp.ones((hidden_size,), jnp.float32),
        "ln_beta": jnp.zeros((hidden_size,), jnp.float32),
    }


def _reference(queries, keys_values, params, num_heads):
    """Pure-JAX f32 reference mirroring the PyTorch forward (eval mode)."""
    B, Nq, H = queries.shape
    S = keys_values.shape[1]
    hd = H // num_heads

    def ln(x):
        mu = jnp.mean(x, -1, keepdims=True)
        var = jnp.mean((x - mu) ** 2, -1, keepdims=True)
        return (x - mu) / jnp.sqrt(var + 1e-6) * params["ln_gamma"] + params["ln_beta"]

    qn, kvn = ln(queries), ln(keys_values)
    q = (qn @ params["qkv_w"].T + params["qkv_b"])[..., :H]
    kv = kvn @ params["qkv_w"].T + params["qkv_b"]
    k = kv[..., H:2 * H]
    v = kv[..., 2 * H:]
    q = q.reshape(B, Nq, num_heads, hd).transpose(0, 2, 1, 3)
    k = k.reshape(B, S, num_heads, hd).transpose(0, 2, 1, 3)
    v = v.reshape(B, S, num_heads, hd).transpose(0, 2, 1, 3)
    scores = jnp.einsum("bhqd,bhkd->bhqk", q, k) / math.sqrt(hd)
    probs = jax.nn.softmax(scores, axis=-1)
    out = jnp.einsum("bhqk,bhkd->bhqd", probs, v)
    out = out.transpose(0, 2, 1, 3).reshape(B, Nq, H)
    out = out @ params["out_w"].T + params["out_b"]
    return queries + out


if __name__ == "__main__":
    # Small but lane/sublane aligned shapes: H multiple of 128, Nq/S multiples of 8.
    B, Nq, S, H, NH = 4, 8, 16, 128, 8   # head_dim = 16

    key = jax.random.PRNGKey(0)
    kq, kkv, kp = jax.random.split(key, 3)
    queries = jax.random.normal(kq, (B, Nq, H), jnp.float32)
    keys_values = jax.random.normal(kkv, (B, S, H), jnp.float32)
    params = init_params(kp, H)

    out = cross_attention_block(queries, keys_values, params,
                                num_heads=NH, block_b=2)
    out = jax.block_until_ready(out)

    ref = _reference(queries, keys_values, params, NH)
    assert out.shape == (B, Nq, H)
    # bf16 matmul operands + approx reciprocal -> loosened tolerance.
    assert jnp.allclose(out, ref, atol=2e-2, rtol=2e-2), "mismatch vs reference"

    print("KERNEL_OK")
</pallas_src>

<mosaic_0001>
module attributes {stable_mosaic.version = 11 : i64} {
  func.func @kernel(%arg0: i32, %arg1: memref<2x8x128xf32, #tpu.memory_space<vmem>>, %arg2: memref<2x16x128xf32, #tpu.memory_space<vmem>>, %arg3: memref<1x128xf32, #tpu.memory_space<vmem>>, %arg4: memref<1x128xf32, #tpu.memory_space<vmem>>, %arg5: memref<128x128xbf16, #tpu.memory_space<vmem>>, %arg6: memref<1x128xf32, #tpu.memory_space<vmem>>, %arg7: memref<128x256xbf16, #tpu.memory_space<vmem>>, %arg8: memref<1x256xf32, #tpu.memory_space<vmem>>, %arg9: memref<128x128xbf16, #tpu.memory_space<vmem>>, %arg10: memref<1x128xf32, #tpu.memory_space<vmem>>, %arg11: memref<2x8x128xf32, #tpu.memory_space<vmem>>) attributes {dimension_semantics = [#tpu.dimension_semantics<parallel>], iteration_bounds = array<i64: 2>, scalar_prefetch = 0 : i64, scratch_operands = 0 : i64, tpu.core_type = #tpu.core_type<tc>, window_params = [{transform_indices = @transform_0, window_bounds = array<i64: 2, 8, 128>}, {transform_indices = @transform_1, window_bounds = array<i64: 2, 16, 128>}, {pipeline_mode = #tpu.pipeline_mode<synchronous>, transform_indices = @transform_2, window_bounds = array<i64: 1, 128>}, {pipeline_mode = #tpu.pipeline_mode<synchronous>, transform_indices = @transform_3, window_bounds = array<i64: 1, 128>}, {pipeline_mode = #tpu.pipeline_mode<synchronous>, transform_indices = @transform_4, window_bounds = array<i64: 128, 128>}, {pipeline_mode = #tpu.pipeline_mode<synchronous>, transform_indices = @transform_5, window_bounds = array<i64: 1, 128>}, {pipeline_mode = #tpu.pipeline_mode<synchronous>, transform_indices = @transform_6, window_bounds = array<i64: 128, 256>}, {pipeline_mode = #tpu.pipeline_mode<synchronous>, transform_indices = @transform_7, window_bounds = array<i64: 1, 256>}, {pipeline_mode = #tpu.pipeline_mode<synchronous>, transform_indices = @transform_8, window_bounds = array<i64: 128, 128>}, {pipeline_mode = #tpu.pipeline_mode<synchronous>, transform_indices = @transform_9, window_bounds = array<i64: 1, 128>}, {transform_indices = @transform_10, window_bounds = array<i64: 2, 8, 128>}]} {
    %c0 = arith.constant 0 : index
    %c0_0 = arith.constant 0 : index
    %c0_1 = arith.constant 0 : index
    %0 = vector.load %arg1[%c0, %c0_0, %c0_1] : memref<2x8x128xf32, #tpu.memory_space<vmem>>, vector<2x8x128xf32>
    %c0_2 = arith.constant 0 : index
    %c0_3 = arith.constant 0 : index
    %c0_4 = arith.constant 0 : index
    %1 = vector.load %arg2[%c0_2, %c0_3, %c0_4] : memref<2x16x128xf32, #tpu.memory_space<vmem>>, vector<2x16x128xf32>
    %c0_5 = arith.constant 0 : index
    %c0_6 = arith.constant 0 : index
    %2 = vector.load %arg3[%c0_5, %c0_6] : memref<1x128xf32, #tpu.memory_space<vmem>>, vector<1x128xf32>
    %c0_7 = arith.constant 0 : index
    %c0_8 = arith.constant 0 : index
    %3 = vector.load %arg4[%c0_7, %c0_8] : memref<1x128xf32, #tpu.memory_space<vmem>>, vector<1x128xf32>
    %4 = vector.shape_cast %0 : vector<2x8x128xf32> to vector<16x128xf32>
    %5 = vector.shape_cast %1 : vector<2x16x128xf32> to vector<32x128xf32>
    %cst = arith.constant dense<0.000000e+00> : vector<16xf32>
    %6 = vector.multi_reduction <add>, %4, %cst [1] : vector<16x128xf32> to vector<16xf32>
    %7 = vector.shape_cast %6 : vector<16xf32> to vector<16x1xf32>
    %cst_9 = arith.constant 1.280000e+02 : f32
    %8 = vector.broadcast %cst_9 : f32 to vector<16x1xf32>
    %9 = arith.divf %7, %8 : vector<16x1xf32>
    %10 = vector.broadcast %9 : vector<16x1xf32> to vector<16x128xf32>
    %11 = arith.subf %4, %10 : vector<16x128xf32>
    %12 = arith.mulf %11, %11 : vector<16x128xf32>
    %cst_10 = arith.constant dense<0.000000e+00> : vector<16xf32>
    %13 = vector.multi_reduction <add>, %12, %cst_10 [1] : vector<16x128xf32> to vector<16xf32>
    %14 = vector.shape_cast %13 : vector<16xf32> to vector<16x1xf32>
    %cst_11 = arith.constant 1.280000e+02 : f32
    %15 = vector.broadcast %cst_11 : f32 to vector<16x1xf32>
    %16 = arith.divf %14, %15 : vector<16x1xf32>
    %cst_12 = arith.constant 9.99999997E-7 : f32
    %17 = vector.broadcast %cst_12 : f32 to vector<16x1xf32>
    %18 = arith.addf %16, %17 : vector<16x1xf32>
    %19 = math.rsqrt %18 : vector<16x1xf32>
    %20 = vector.broadcast %19 : vector<16x1xf32> to vector<16x128xf32>
    %21 = arith.mulf %11, %20 : vector<16x128xf32>
    %22 = vector.broadcast %2 : vector<1x128xf32> to vector<16x128xf32>
    %23 = arith.mulf %21, %22 : vector<16x128xf32>
    %24 = vector.broadcast %3 : vector<1x128xf32> to vector<16x128xf32>
    %25 = arith.addf %23, %24 : vector<16x128xf32>
    %26 = arith.truncf %25 : vector<16x128xf32> to vector<16x128xbf16>
    %cst_13 = arith.constant dense<0.000000e+00> : vector<32xf32>
    %27 = vector.multi_reduction <add>, %5, %cst_13 [1] : vector<32x128xf32> to vector<32xf32>
    %28 = vector.shape_cast %27 : vector<32xf32> to vector<32x1xf32>
    %cst_14 = arith.constant 1.280000e+02 : f32
    %29 = vector.broadcast %cst_14 : f32 to vector<32x1xf32>
    %30 = arith.divf %28, %29 : vector<32x1xf32>
    %31 = vector.broadcast %30 : vector<32x1xf32> to vector<32x128xf32>
    %32 = arith.subf %5, %31 : vector<32x128xf32>
    %33 = arith.mulf %32, %32 : vector<32x128xf32>
    %cst_15 = arith.constant dense<0.000000e+00> : vector<32xf32>
    %34 = vector.multi_reduction <add>, %33, %cst_15 [1] : vector<32x128xf32> to vector<32xf32>
    %35 = vector.shape_cast %34 : vector<32xf32> to vector<32x1xf32>
    %cst_16 = arith.constant 1.280000e+02 : f32
    %36 = vector.broadcast %cst_16 : f32 to vector<32x1xf32>
    %37 = arith.divf %35, %36 : vector<32x1xf32>
    %cst_17 = arith.constant 9.99999997E-7 : f32
    %38 = vector.broadcast %cst_17 : f32 to vector<32x1xf32>
    %39 = arith.addf %37, %38 : vector<32x1xf32>
    %40 = math.rsqrt %39 : vector<32x1xf32>
    %41 = vector.broadcast %40 : vector<32x1xf32> to vector<32x128xf32>
    %42 = arith.mulf %32, %41 : vector<32x128xf32>
    %43 = vector.broadcast %2 : vector<1x128xf32> to vector<32x128xf32>
    %44 = arith.mulf %42, %43 : vector<32x128xf32>
    %45 = vector.broadcast %3 : vector<1x128xf32> to vector<32x128xf32>
    %46 = arith.addf %44, %45 : vector<32x128xf32>
    %47 = arith.truncf %46 : vector<32x128xf32> to vector<32x128xbf16>
    %c0_18 = arith.constant 0 : index
    %c0_19 = arith.constant 0 : index
    %48 = vector.load %arg5[%c0_18, %c0_19] : memref<128x128xbf16, #tpu.memory_space<vmem>>, vector<128x128xbf16>
    %cst_20 = arith.constant dense<0.000000e+00> : vector<16x128xf32>
    %49 = tpu.matmul %26, %48, %cst_20 {dimension_numbers = #tpu.dot_dimension_numbers<[1], [0], [0], [1], [0, 0, 1, 1], [], []>} : vector<16x128xbf16>, vector<128x128xbf16>, vector<16x128xf32> -> vector<16x128xf32>
    %c0_21 = arith.constant 0 : index
    %c0_22 = arith.constant 0 : index
    %50 = vector.load %arg6[%c0_21, %c0_22] : memref<1x128xf32, #tpu.memory_space<vmem>>, vector<1x128xf32>
    %51 = vector.broadcast %50 : vector<1x128xf32> to vector<16x128xf32>
    %52 = arith.addf %49, %51 : vector<16x128xf32>
    %cst_23 = arith.constant 2.500000e-01 : f32
    %53 = vector.broadcast %cst_23 : f32 to vector<16x128xf32>
    %54 = arith.mulf %52, %53 : vector<16x128xf32>
    %c0_24 = arith.constant 0 : index
    %c0_25 = arith.constant 0 : index
    %55 = vector.load %arg7[%c0_24, %c0_25] : memref<128x256xbf16, #tpu.memory_space<vmem>>, vector<128x256xbf16>
    %cst_26 = arith.constant dense<0.000000e+00> : vector<32x256xf32>
    %56 = tpu.matmul %47, %55, %cst_26 {dimension_numbers = #tpu.dot_dimension_numbers<[1], [0], [0], [1], [0, 0, 1, 1], [], []>} : vector<32x128xbf16>, vector<128x256xbf16>, vector<32x256xf32> -> vector<32x256xf32>
    %c0_27 = arith.constant 0 : index
    %c0_28 = arith.constant 0 : index
    %57 = vector.load %arg8[%c0_27, %c0_28] : memref<1x256xf32, #tpu.memory_space<vmem>>, vector<1x256xf32>
    %58 = vector.broadcast %57 : vector<1x256xf32> to vector<32x256xf32>
    %59 = arith.addf %56, %58 : vector<32x256xf32>
    %60 = vector.extract_strided_slice %59 {offsets = [0, 0], sizes = [32, 128], strides = [1, 1]} : vector<32x256xf32> to vector<32x128xf32>
    %61 = vector.extract_strided_slice %59 {offsets = [0, 128], sizes = [32, 128], strides = [1, 1]} : vector<32x256xf32> to vector<32x128xf32>
    %62 = vector.extract_strided_slice %54 {offsets = [0, 0], sizes = [8, 128], strides = [1, 1]} : vector<16x128xf32> to vector<8x128xf32>
    %63 = vector.extract_strided_slice %62 {offsets = [0, 0], sizes = [8, 16], strides = [1, 1]} : vector<8x128xf32> to vector<8x16xf32>
    %64 = vector.extract_strided_slice %62 {offsets = [0, 16], sizes = [8, 16], strides = [1, 1]} : vector<8x128xf32> to vector<8x16xf32>
    %65 = vector.extract_strided_slice %62 {offsets = [0, 32], sizes = [8, 16], strides = [1, 1]} : vector<8x128xf32> to vector<8x16xf32>
    %66 = vector.extract_strided_slice %62 {offsets = [0, 48], sizes = [8, 16], strides = [1, 1]} : vector<8x128xf32> to vector<8x16xf32>
    %67 = vector.extract_strided_slice %62 {offsets = [0, 64], sizes = [8, 16], strides = [1, 1]} : vector<8x128xf32> to vector<8x16xf32>
    %68 = vector.extract_strided_slice %62 {offsets = [0, 80], sizes = [8, 16], strides = [1, 1]} : vector<8x128xf32> to vector<8x16xf32>
    %69 = vector.extract_strided_slice %62 {offsets = [0, 96], sizes = [8, 16], strides = [1, 1]} : vector<8x128xf32> to vector<8x16xf32>
    %70 = vector.extract_strided_slice %62 {offsets = [0, 112], sizes = [8, 16], strides = [1, 1]} : vector<8x128xf32> to vector<8x16xf32>
    %71 = vector.shape_cast %63 : vector<8x16xf32> to vector<1x8x16xf32>
    %72 = vector.shape_cast %64 : vector<8x16xf32> to vector<1x8x16xf32>
    %73 = vector.shape_cast %65 : vector<8x16xf32> to vector<1x8x16xf32>
    %74 = vector.shape_cast %66 : vector<8x16xf32> to vector<1x8x16xf32>
    %75 = vector.shape_cast %67 : vector<8x16xf32> to vector<1x8x16xf32>
    %76 = vector.shape_cast %68 : vector<8x16xf32> to vector<1x8x16xf32>
    %77 = vector.shape_cast %69 : vector<8x16xf32> to vector<1x8x16xf32>
    %78 = vector.shape_cast %70 : vector<8x16xf32> to vector<1x8x16xf32>
    %79 = tpu.concatenate %71, %72, %73, %74, %75, %76, %77, %78 in 0 : vector<1x8x16xf32>, vector<1x8x16xf32>, vector<1x8x16xf32>, vector<1x8x16xf32>, vector<1x8x16xf32>, vector<1x8x16xf32>, vector<1x8x16xf32>, vector<1x8x16xf32> -> vector<8x8x16xf32>
    %80 = arith.truncf %79 : vector<8x8x16xf32> to vector<8x8x16xbf16>
    %81 = vector.extract_strided_slice %60 {offsets = [0, 0], sizes = [16, 128], strides = [1, 1]} : vector<32x128xf32> to vector<16x128xf32>
    %82 = vector.extract_strided_slice %81 {offsets = [0, 0], sizes = [16, 16], strides = [1, 1]} : vector<16x128xf32> to vector<16x16xf32>
    %83 = vector.extract_strided_slice %81 {offsets = [0, 16], sizes = [16, 16], strides = [1, 1]} : vector<16x128xf32> to vector<16x16xf32>
    %84 = vector.extract_strided_slice %81 {offsets = [0, 32], sizes = [16, 16], strides = [1, 1]} : vector<16x128xf32> to vector<16x16xf32>
    %85 = vector.extract_strided_slice %81 {offsets = [0, 48], sizes = [16, 16], strides = [1, 1]} : vector<16x128xf32> to vector<16x16xf32>
    %86 = vector.extract_strided_slice %81 {offsets = [0, 64], sizes = [16, 16], strides = [1, 1]} : vector<16x128xf32> to vector<16x16xf32>
    %87 = vector.extract_strided_slice %81 {offsets = [0, 80], sizes = [16, 16], strides = [1, 1]} : vector<16x128xf32> to vector<16x16xf32>
    %88 = vector.extract_strided_slice %81 {offsets = [0, 96], sizes = [16, 16], strides = [1, 1]} : vector<16x128xf32> to vector<16x16xf32>
    %89 = vector.extract_strided_slice %81 {offsets = [0, 112], sizes = [16, 16], strides = [1, 1]} : vector<16x128xf32> to vector<16x16xf32>
    %90 = vector.shape_cast %82 : vector<16x16xf32> to vector<1x16x16xf32>
    %91 = vector.shape_cast %83 : vector<16x16xf32> to vector<1x16x16xf32>
    %92 = vector.shape_cast %84 : vector<16x16xf32> to vector<1x16x16xf32>
    %93 = vector.shape_cast %85 : vector<16x16xf32> to vector<1x16x16xf32>
    %94 = vector.shape_cast %86 : vector<16x16xf32> to vector<1x16x16xf32>
    %95 = vector.shape_cast %87 : vector<16x16xf32> to vector<1x16x16xf32>
    %96 = vector.shape_cast %88 : vector<16x16xf32> to vector<1x16x16xf32>
    %97 = vector.shape_cast %89 : vector<16x16xf32> to vector<1x16x16xf32>
    %98 = tpu.concatenate %90, %91, %92, %93, %94, %95, %96, %97 in 0 : vector<1x16x16xf32>, vector<1x16x16xf32>, vector<1x16x16xf32>, vector<1x16x16xf32>, vector<1x16x16xf32>, vector<1x16x16xf32>, vector<1x16x16xf32>, vector<1x16x16xf32> -> vector<8x16x16xf32>
    %99 = arith.truncf %98 : vector<8x16x16xf32> to vector<8x16x16xbf16>
    %100 = vector.extract_strided_slice %61 {offsets = [0, 0], sizes = [16, 128], strides = [1, 1]} : vector<32x128xf32> to vector<16x128xf32>
    %101 = vector.extract_strided_slice %100 {offsets = [0, 0], sizes = [16, 16], strides = [1, 1]} : vector<16x128xf32> to vector<16x16xf32>
    %102 = vector.extract_strided_slice %100 {offsets = [0, 16], sizes = [16, 16], strides = [1, 1]} : vector<16x128xf32> to vector<16x16xf32>
    %103 = vector.extract_strided_slice %100 {offsets = [0, 32], sizes = [16, 16], strides = [1, 1]} : vector<16x128xf32> to vector<16x16xf32>
    %104 = vector.extract_strided_slice %100 {offsets = [0, 48], sizes = [16, 16], strides = [1, 1]} : vector<16x128xf32> to vector<16x16xf32>
    %105 = vector.extract_strided_slice %100 {offsets = [0, 64], sizes = [16, 16], strides = [1, 1]} : vector<16x128xf32> to vector<16x16xf32>
    %106 = vector.extract_strided_slice %100 {offsets = [0, 80], sizes = [16, 16], strides = [1, 1]} : vector<16x128xf32> to vector<16x16xf32>
    %107 = vector.extract_strided_slice %100 {offsets = [0, 96], sizes = [16, 16], strides = [1, 1]} : vector<16x128xf32> to vector<16x16xf32>
    %108 = vector.extract_strided_slice %100 {offsets = [0, 112], sizes = [16, 16], strides = [1, 1]} : vector<16x128xf32> to vector<16x16xf32>
    %109 = vector.shape_cast %101 : vector<16x16xf32> to vector<1x16x16xf32>
    %110 = vector.shape_cast %102 : vector<16x16xf32> to vector<1x16x16xf32>
    %111 = vector.shape_cast %103 : vector<16x16xf32> to vector<1x16x16xf32>
    %112 = vector.shape_cast %104 : vector<16x16xf32> to vector<1x16x16xf32>
    %113 = vector.shape_cast %105 : vector<16x16xf32> to vector<1x16x16xf32>
    %114 = vector.shape_cast %106 : vector<16x16xf32> to vector<1x16x16xf32>
    %115 = vector.shape_cast %107 : vector<16x16xf32> to vector<1x16x16xf32>
    %116 = vector.shape_cast %108 : vector<16x16xf32> to vector<1x16x16xf32>
    %117 = tpu.concatenate %109, %110, %111, %112, %113, %114, %115, %116 in 0 : vector<1x16x16xf32>, vector<1x16x16xf32>, vector<1x16x16xf32>, vector<1x16x16xf32>, vector<1x16x16xf32>, vector<1x16x16xf32>, vector<1x16x16xf32>, vector<1x16x16xf32> -> vector<8x16x16xf32>
    %118 = arith.truncf %117 : vector<8x16x16xf32> to vector<8x16x16xbf16>
    "tpu.trace_start"() <{level = 10 : i32, message = "hqd,hkd->hqk"}> : () -> ()
    %cst_29 = arith.constant dense<0.000000e+00> : vector<8x8x16xf32>
    %119 = tpu.matmul %80, %99, %cst_29 {dimension_numbers = #tpu.dot_dimension_numbers<[2], [2], [1], [1], [0, 0, 0, 1, 1, 1], [0], [0]>} : vector<8x8x16xbf16>, vector<8x16x16xbf16>, vector<8x8x16xf32> -> vector<8x8x16xf32>
    "tpu.trace_stop"() : () -> ()
    %cst_30 = arith.constant dense<0xFF800000> : vector<8x8xf32>
    %120 = vector.multi_reduction <maximumf>, %119, %cst_30 [2] : vector<8x8x16xf32> to vector<8x8xf32>
    %121 = vector.shape_cast %120 : vector<8x8xf32> to vector<8x8x1xf32>
    %122 = vector.broadcast %121 : vector<8x8x1xf32> to vector<8x8x16xf32>
    %123 = arith.subf %119, %122 : vector<8x8x16xf32>
    %124 = math.exp %123 : vector<8x8x16xf32>
    %cst_31 = arith.constant dense<0.000000e+00> : vector<8x8xf32>
    %125 = vector.multi_reduction <add>, %124, %cst_31 [2] : vector<8x8x16xf32> to vector<8x8xf32>
    %126 = vector.shape_cast %125 : vector<8x8xf32> to vector<8x8x1xf32>
    %127 = tpu.reciprocal %126 {approx = true} : vector<8x8x1xf32> -> vector<8x8x1xf32>
    %128 = vector.broadcast %127 : vector<8x8x1xf32> to vector<8x8x16xf32>
    %129 = arith.mulf %124, %128 : vector<8x8x16xf32>
    %130 = arith.truncf %129 : vector<8x8x16xf32> to vector<8x8x16xbf16>
    "tpu.trace_start"() <{level = 10 : i32, message = "hqk,hkd->hqd"}> : () -> ()
    %cst_32 = arith.constant dense<0.000000e+00> : vector<8x8x16xf32>
    %131 = tpu.matmul %130, %118, %cst_32 {dimension_numbers = #tpu.dot_dimension_numbers<[2], [1], [1], [2], [0, 0, 0, 1, 1, 2], [0], [0]>} : vector<8x8x16xbf16>, vector<8x16x16xbf16>, vector<8x8x16xf32> -> vector<8x8x16xf32>
    "tpu.trace_stop"() : () -> ()
    %132 = vector.extract_strided_slice %131 {offsets = [0, 0, 0], sizes = [1, 8, 16], strides = [1, 1, 1]} : vector<8x8x16xf32> to vector<1x8x16xf32>
    %133 = vector.shape_cast %132 : vector<1x8x16xf32> to vector<8x16xf32>
    %134 = vector.extract_strided_slice %131 {offsets = [1, 0, 0], sizes = [1, 8, 16], strides = [1, 1, 1]} : vector<8x8x16xf32> to vector<1x8x16xf32>
    %135 = vector.shape_cast %134 : vector<1x8x16xf32> to vector<8x16xf32>
    %136 = vector.extract_strided_slice %131 {offsets = [2, 0, 0], sizes = [1, 8, 16], strides = [1, 1, 1]} : vector<8x8x16xf32> to vector<1x8x16xf32>
    %137 = vector.shape_cast %136 : vector<1x8x16xf32> to vector<8x16xf32>
    %138 = vector.extract_strided_slice %131 {offsets = [3, 0, 0], sizes = [1, 8, 16], strides = [1, 1, 1]} : vector<8x8x16xf32> to vector<1x8x16xf32>
    %139 = vector.shape_cast %138 : vector<1x8x16xf32> to vector<8x16xf32>
    %140 = vector.extract_strided_slice %131 {offsets = [4, 0, 0], sizes = [1, 8, 16], strides = [1, 1, 1]} : vector<8x8x16xf32> to vector<1x8x16xf32>
    %141 = vector.shape_cast %140 : vector<1x8x16xf32> to vector<8x16xf32>
    %142 = vector.extract_strided_slice %131 {offsets = [5, 0, 0], sizes = [1, 8, 16], strides = [1, 1, 1]} : vector<8x8x16xf32> to vector<1x8x16xf32>
    %143 = vector.shape_cast %142 : vector<1x8x16xf32> to vector<8x16xf32>
    %144 = vector.extract_strided_slice %131 {offsets = [6, 0, 0], sizes = [1, 8, 16], strides = [1, 1, 1]} : vector<8x8x16xf32> to vector<1x8x16xf32>
    %145 = vector.shape_cast %144 : vector<1x8x16xf32> to vector<8x16xf32>
    %146 = vector.extract_strided_slice %131 {offsets = [7, 0, 0], sizes = [1, 8, 16], strides = [1, 1, 1]} : vector<8x8x16xf32> to vector<1x8x16xf32>
    %147 = vector.shape_cast %146 : vector<1x8x16xf32> to vector<8x16xf32>
    %148 = tpu.concatenate %133, %135, %137, %139, %141, %143, %145, %147 in 1 : vector<8x16xf32>, vector<8x16xf32>, vector<8x16xf32>, vector<8x16xf32>, vector<8x16xf32>, vector<8x16xf32>, vector<8x16xf32>, vector<8x16xf32> -> vector<8x128xf32>
    %149 = vector.extract_strided_slice %54 {offsets = [8, 0], sizes = [8, 128], strides = [1, 1]} : vector<16x128xf32> to vector<8x128xf32>
    %150 = vector.extract_strided_slice %149 {offsets = [0, 0], sizes = [8, 16], strides = [1, 1]} : vector<8x128xf32> to vector<8x16xf32>
    %151 = vector.extract_strided_slice %149 {offsets = [0, 16], sizes = [8, 16], strides = [1, 1]} : vector<8x128xf32> to vector<8x16xf32>
    %152 = vector.extract_strided_slice %149 {offsets = [0, 32], sizes = [8, 16], strides = [1, 1]} : vector<8x128xf32> to vector<8x16xf32>
    %153 = vector.extract_strided_slice %149 {offsets = [0, 48], sizes = [8, 16], strides = [1, 1]} : vector<8x128xf32> to vector<8x16xf32>
    %154 = vector.extract_strided_slice %149 {offsets = [0, 64], sizes = [8, 16], strides = [1, 1]} : vector<8x128xf32> to vector<8x16xf32>
    %155 = vector.extract_strided_slice %149 {offsets = [0, 80], sizes = [8, 16], strides = [1, 1]} : vector<8x128xf32> to vector<8x16xf32>
    %156 = vector.extract_strided_slice %149 {offsets = [0, 96], sizes = [8, 16], strides = [1, 1]} : vector<8x128xf32> to vector<8x16xf32>
    %157 = vector.extract_strided_slice %149 {offsets = [0, 112], sizes = [8, 16], strides = [1, 1]} : vector<8x128xf32> to vector<8x16xf32>
    %158 = vector.shape_cast %150 : vector<8x16xf32> to vector<1x8x16xf32>
    %159 = vector.shape_cast %151 : vector<8x16xf32> to vector<1x8x16xf32>
    %160 = vector.shape_cast %152 : vector<8x16xf32> to vector<1x8x16xf32>
    %161 = vector.shape_cast %153 : vector<8x16xf32> to vector<1x8x16xf32>
    %162 = vector.shape_cast %154 : vector<8x16xf32> to vector<1x8x16xf32>
    %163 = vector.shape_cast %155 : vector<8x16xf32> to vector<1x8x16xf32>
    %164 = vector.shape_cast %156 : vector<8x16xf32> to vector<1x8x16xf32>
    %165 = vector.shape_cast %157 : vector<8x16xf32> to vector<1x8x16xf32>
    %166 = tpu.concatenate %158, %159, %160, %161, %162, %163, %164, %165 in 0 : vector<1x8x16xf32>, vector<1x8x16xf32>, vector<1x8x16xf32>, vector<1x8x16xf32>, vector<1x8x16xf32>, vector<1x8x16xf32>, vector<1x8x16xf32>, vector<1x8x16xf32> -> vector<8x8x16xf32>
    %167 = arith.truncf %166 : vector<8x8x16xf32> to vector<8x8x16xbf16>
    %168 = vector.extract_strided_slice %60 {offsets = [16, 0], sizes = [16, 128], strides = [1, 1]} : vector<32x128xf32> to vector<16x128xf32>
    %169 = vector.extract_strided_slice %168 {offsets = [0, 0], sizes = [16, 16], strides = [1, 1]} : vector<16x128xf32> to vector<16x16xf32>
    %170 = vector.extract_strided_slice %168 {offsets = [0, 16], sizes = [16, 16], strides = [1, 1]} : vector<16x128xf32> to vector<16x16xf32>
    %171 = vector.extract_strided_slice %168 {offsets = [0, 32], sizes = [16, 16], strides = [1, 1]} : vector<16x128xf32> to vector<16x16xf32>
    %172 = vector.extract_strided_slice %168 {offsets = [0, 48], sizes = [16, 16], strides = [1, 1]} : vector<16x128xf32> to vector<16x16xf32>
    %173 = vector.extract_strided_slice %168 {offsets = [0, 64], sizes = [16, 16], strides = [1, 1]} : vector<16x128xf32> to vector<16x16xf32>
    %174 = vector.extract_strided_slice %168 {offsets = [0, 80], sizes = [16, 16], strides = [1, 1]} : vector<16x128xf32> to vector<16x16xf32>
    %175 = vector.extract_strided_slice %168 {offsets = [0, 96], sizes = [16, 16], strides = [1, 1]} : vector<16x128xf32> to vector<16x16xf32>
    %176 = vector.extract_strided_slice %168 {offsets = [0, 112], sizes = [16, 16], strides = [1, 1]} : vector<16x128xf32> to vector<16x16xf32>
    %177 = vector.shape_cast %169 : vector<16x16xf32> to vector<1x16x16xf32>
    %178 = vector.shape_cast %170 : vector<16x16xf32> to vector<1x16x16xf32>
    %179 = vector.shape_cast %171 : vector<16x16xf32> to vector<1x16x16xf32>
    %180 = vector.shape_cast %172 : vector<16x16xf32> to vector<1x16x16xf32>
    %181 = vector.shape_cast %173 : vector<16x16xf32> to vector<1x16x16xf32>
    %182 = vector.shape_cast %174 : vector<16x16xf32> to vector<1x16x16xf32>
    %183 = vector.shape_cast %175 : vector<16x16xf32> to vector<1x16x16xf32>
    %184 = vector.shape_cast %176 : vector<16x16xf32> to vector<1x16x16xf32>
    %185 = tpu.concatenate %177, %178, %179, %180, %181, %182, %183, %184 in 0 : vector<1x16x16xf32>, vector<1x16x16xf32>, vector<1x16x16xf32>, vector<1x16x16xf32>, vector<1x16x16xf32>, vector<1x16x16xf32>, vector<1x16x16xf32>, vector<1x16x16xf32> -> vector<8x16x16xf32>
    %186 = arith.truncf %185 : vector<8x16x16xf32> to vector<8x16x16xbf16>
    %187 = vector.extract_strided_slice %61 {offsets = [16, 0], sizes = [16, 128], strides = [1, 1]} : vector<32x128xf32> to vector<16x128xf32>
    %188 = vector.extract_strided_slice %187 {offsets = [0, 0], sizes = [16, 16], strides = [1, 1]} : vector<16x128xf32> to vector<16x16xf32>
    %189 = vector.extract_strided_slice %187 {offsets = [0, 16], sizes = [16, 16], strides = [1, 1]} : vector<16x128xf32> to vector<16x16xf32>
    %190 = vector.extract_strided_slice %187 {offsets = [0, 32], sizes = [16, 16], strides = [1, 1]} : vector<16x128xf32> to vector<16x16xf32>
    %191 = vector.extract_strided_slice %187 {offsets = [0, 48], sizes = [16, 16], strides = [1, 1]} : vector<16x128xf32> to vector<16x16xf32>
    %192 = vector.extract_strided_slice %187 {offsets = [0, 64], sizes = [16, 16], strides = [1, 1]} : vector<16x128xf32> to vector<16x16xf32>
    %193 = vector.extract_strided_slice %187 {offsets = [0, 80], sizes = [16, 16], strides = [1, 1]} : vector<16x128xf32> to vector<16x16xf32>
    %194 = vector.extract_strided_slice %187 {offsets = [0, 96], sizes = [16, 16], strides = [1, 1]} : vector<16x128xf32> to vector<16x16xf32>
    %195 = vector.extract_strided_slice %187 {offsets = [0, 112], sizes = [16, 16], strides = [1, 1]} : vector<16x128xf32> to vector<16x16xf32>
    %196 = vector.shape_cast %188 : vector<16x16xf32> to vector<1x16x16xf32>
    %197 = vector.shape_cast %189 : vector<16x16xf32> to vector<1x16x16xf32>
    %198 = vector.shape_cast %190 : vector<16x16xf32> to vector<1x16x16xf32>
    %199 = vector.shape_cast %191 : vector<16x16xf32> to vector<1x16x16xf32>
    %200 = vector.shape_cast %192 : vector<16x16xf32> to vector<1x16x16xf32>
    %201 = vector.shape_cast %193 : vector<16x16xf32> to vector<1x16x16xf32>
    %202 = vector.shape_cast %194 : vector<16x16xf32> to vector<1x16x16xf32>
    %203 = vector.shape_cast %195 : vector<16x16xf32> to vector<1x16x16xf32>
    %204 = tpu.concatenate %196, %197, %198, %199, %200, %201, %202, %203 in 0 : vector<1x16x16xf32>, vector<1x16x16xf32>, vector<1x16x16xf32>, vector<1x16x16xf32>, vector<1x16x16xf32>, vector<1x16x16xf32>, vector<1x16x16xf32>, vector<1x16x16xf32> -> vector<8x16x16xf32>
    %205 = arith.truncf %204 : vector<8x16x16xf32> to vector<8x16x16xbf16>
    "tpu.trace_start"() <{level = 10 : i32, message = "hqd,hkd->hqk"}> : () -> ()
    %cst_33 = arith.constant dense<0.000000e+00> : vector<8x8x16xf32>
    %206 = tpu.matmul %167, %186, %cst_33 {dimension_numbers = #tpu.dot_dimension_numbers<[2], [2], [1], [1], [0, 0, 0, 1, 1, 1], [0], [0]>} : vector<8x8x16xbf16>, vector<8x16x16xbf16>, vector<8x8x16xf32> -> vector<8x8x16xf32>
    "tpu.trace_stop"() : () -> ()
    %cst_34 = arith.constant dense<0xFF800000> : vector<8x8xf32>
    %207 = vector.multi_reduction <maximumf>, %206, %cst_34 [2] : vector<8x8x16xf32> to vector<8x8xf32>
    %208 = vector.shape_cast %207 : vector<8x8xf32> to vector<8x8x1xf32>
    %209 = vector.broadcast %208 : vector<8x8x1xf32> to vector<8x8x16xf32>
    %210 = arith.subf %206, %209 : vector<8x8x16xf32>
    %211 = math.exp %210 : vector<8x8x16xf32>
    %cst_35 = arith.constant dense<0.000000e+00> : vector<8x8xf32>
    %212 = vector.multi_reduction <add>, %211, %cst_35 [2] : vector<8x8x16xf32> to vector<8x8xf32>
    %213 = vector.shape_cast %212 : vector<8x8xf32> to vector<8x8x1xf32>
    %214 = tpu.reciprocal %213 {approx = true} : vector<8x8x1xf32> -> vector<8x8x1xf32>
    %215 = vector.broadcast %214 : vector<8x8x1xf32> to vector<8x8x16xf32>
    %216 = arith.mulf %211, %215 : vector<8x8x16xf32>
    %217 = arith.truncf %216 : vector<8x8x16xf32> to vector<8x8x16xbf16>
    "tpu.trace_start"() <{level = 10 : i32, message = "hqk,hkd->hqd"}> : () -> ()
    %cst_36 = arith.constant dense<0.000000e+00> : vector<8x8x16xf32>
    %218 = tpu.matmul %217, %205, %cst_36 {dimension_numbers = #tpu.dot_dimension_numbers<[2], [1], [1], [2], [0, 0, 0, 1, 1, 2], [0], [0]>} : vector<8x8x16xbf16>, vector<8x16x16xbf16>, vector<8x8x16xf32> -> vector<8x8x16xf32>
    "tpu.trace_stop"() : () -> ()
    %219 = vector.extract_strided_slice %218 {offsets = [0, 0, 0], sizes = [1, 8, 16], strides = [1, 1, 1]} : vector<8x8x16xf32> to vector<1x8x16xf32>
    %220 = vector.shape_cast %219 : vector<1x8x16xf32> to vector<8x16xf32>
    %221 = vector.extract_strided_slice %218 {offsets = [1, 0, 0], sizes = [1, 8, 16], strides = [1, 1, 1]} : vector<8x8x16xf32> to vector<1x8x16xf32>
    %222 = vector.shape_cast %221 : vector<1x8x16xf32> to vector<8x16xf32>
    %223 = vector.extract_strided_slice %218 {offsets = [2, 0, 0], sizes = [1, 8, 16], strides = [1, 1, 1]} : vector<8x8x16xf32> to vector<1x8x16xf32>
    %224 = vector.shape_cast %223 : vector<1x8x16xf32> to vector<8x16xf32>
    %225 = vector.extract_strided_slice %218 {offsets = [3, 0, 0], sizes = [1, 8, 16], strides = [1, 1, 1]} : vector<8x8x16xf32> to vector<1x8x16xf32>
    %226 = vector.shape_cast %225 : vector<1x8x16xf32> to vector<8x16xf32>
    %227 = vector.extract_strided_slice %218 {offsets = [4, 0, 0], sizes = [1, 8, 16], strides = [1, 1, 1]} : vector<8x8x16xf32> to vector<1x8x16xf32>
    %228 = vector.shape_cast %227 : vector<1x8x16xf32> to vector<8x16xf32>
    %229 = vector.extract_strided_slice %218 {offsets = [5, 0, 0], sizes = [1, 8, 16], strides = [1, 1, 1]} : vector<8x8x16xf32> to vector<1x8x16xf32>
    %230 = vector.shape_cast %229 : vector<1x8x16xf32> to vector<8x16xf32>
    %231 = vector.extract_strided_slice %218 {offsets = [6, 0, 0], sizes = [1, 8, 16], strides = [1, 1, 1]} : vector<8x8x16xf32> to vector<1x8x16xf32>
    %232 = vector.shape_cast %231 : vector<1x8x16xf32> to vector<8x16xf32>
    %233 = vector.extract_strided_slice %218 {offsets = [7, 0, 0], sizes = [1, 8, 16], strides = [1, 1, 1]} : vector<8x8x16xf32> to vector<1x8x16xf32>
    %234 = vector.shape_cast %233 : vector<1x8x16xf32> to vector<8x16xf32>
    %235 = tpu.concatenate %220, %222, %224, %226, %228, %230, %232, %234 in 1 : vector<8x16xf32>, vector<8x16xf32>, vector<8x16xf32>, vector<8x16xf32>, vector<8x16xf32>, vector<8x16xf32>, vector<8x16xf32>, vector<8x16xf32> -> vector<8x128xf32>
    %236 = tpu.concatenate %148, %235 in 0 : vector<8x128xf32>, vector<8x128xf32> -> vector<16x128xf32>
    %237 = arith.truncf %236 : vector<16x128xf32> to vector<16x128xbf16>
    %c0_37 = arith.constant 0 : index
    %c0_38 = arith.constant 0 : index
    %238 = vector.load %arg9[%c0_37, %c0_38] : memref<128x128xbf16, #tpu.memory_space<vmem>>, vector<128x128xbf16>
    %cst_39 = arith.constant dense<0.000000e+00> : vector<16x128xf32>
    %239 = tpu.matmul %237, %238, %cst_39 {dimension_numbers = #tpu.dot_dimension_numbers<[1], [0], [0], [1], [0, 0, 1, 1], [], []>} : vector<16x128xbf16>, vector<128x128xbf16>, vector<16x128xf32> -> vector<16x128xf32>
    %c0_40 = arith.constant 0 : index
    %c0_41 = arith.constant 0 : index
    %240 = vector.load %arg10[%c0_40, %c0_41] : memref<1x128xf32, #tpu.memory_space<vmem>>, vector<1x128xf32>
    %241 = vector.broadcast %240 : vector<1x128xf32> to vector<16x128xf32>
    %242 = arith.addf %239, %241 : vector<16x128xf32>
    %243 = vector.shape_cast %242 : vector<16x128xf32> to vector<2x8x128xf32>
    %244 = arith.addf %0, %243 : vector<2x8x128xf32>
    %c0_42 = arith.constant 0 : index
    %c0_43 = arith.constant 0 : index
    %c0_44 = arith.constant 0 : index
    %245 = vector.load %arg11[%c0_42, %c0_43, %c0_44] : memref<2x8x128xf32, #tpu.memory_space<vmem>>, vector<2x8x128xf32>
    tpu.vector_store %arg11[%c0_42, %c0_43, %c0_44], %244 {strides = array<i32>} : memref<2x8x128xf32, #tpu.memory_space<vmem>>, vector<2x8x128xf32>,
    return
  }
  func.func @transform_0(%arg0: i32) -> (i32, i32, i32) {
    %c0_i32 = arith.constant 0 : i32
    %c0_i32_0 = arith.constant 0 : i32
    %c0_i32_1 = arith.constant 0 : i32
    return %arg0, %c0_i32, %c0_i32_0 : i32, i32, i32
  }
  func.func @transform_1(%arg0: i32) -> (i32, i32, i32) {
    %c0_i32 = arith.constant 0 : i32
    %c0_i32_0 = arith.constant 0 : i32
    %c0_i32_1 = arith.constant 0 : i32
    return %arg0, %c0_i32, %c0_i32_0 : i32, i32, i32
  }
  func.func @transform_2(%arg0: i32) -> (i32, i32) {
    %c0_i32 = arith.constant 0 : i32
    %c0_i32_0 = arith.constant 0 : i32
    %c0_i32_1 = arith.constant 0 : i32
    return %c0_i32, %c0_i32_0 : i32, i32
  }
  func.func @transform_3(%arg0: i32) -> (i32, i32) {
    %c0_i32 = arith.constant 0 : i32
    %c0_i32_0 = arith.constant 0 : i32
    %c0_i32_1 = arith.constant 0 : i32
    return %c0_i32, %c0_i32_0 : i32, i32
  }
  func.func @transform_4(%arg0: i32) -> (i32, i32) {
    %c0_i32 = arith.constant 0 : i32
    %c0_i32_0 = arith.constant 0 : i32
    %c0_i32_1 = arith.constant 0 : i32
    return %c0_i32, %c0_i32_0 : i32, i32
  }
  func.func @transform_5(%arg0: i32) -> (i32, i32) {
    %c0_i32 = arith.constant 0 : i32
    %c0_i32_0 = arith.constant 0 : i32
    %c0_i32_1 = arith.constant 0 : i32
    return %c0_i32, %c0_i32_0 : i32, i32
  }
  func.func @transform_6(%arg0: i32) -> (i32, i32) {
    %c0_i32 = arith.constant 0 : i32
    %c0_i32_0 = arith.constant 0 : i32
    %c0_i32_1 = arith.constant 0 : i32
    return %c0_i32, %c0_i32_0 : i32, i32
  }
  func.func @transform_7(%arg0: i32) -> (i32, i32) {
    %c0_i32 = arith.constant 0 : i32
    %c0_i32_0 = arith.constant 0 : i32
    %c0_i32_1 = arith.constant 0 : i32
    return %c0_i32, %c0_i32_0 : i32, i32
  }
  func.func @transform_8(%arg0: i32) -> (i32, i32) {
    %c0_i32 = arith.constant 0 : i32
    %c0_i32_0 = arith.constant 0 : i32
    %c0_i32_1 = arith.constant 0 : i32
    return %c0_i32, %c0_i32_0 : i32, i32
  }
  func.func @transform_9(%arg0: i32) -> (i32, i32) {
    %c0_i32 = arith.constant 0 : i32
    %c0_i32_0 = arith.constant 0 : i32
    %c0_i32_1 = arith.constant 0 : i32
    return %c0_i32, %c0_i32_0 : i32, i32
  }
  func.func @transform_10(%arg0: i32) -> (i32, i32, i32) {
    %c0_i32 = arith.constant 0 : i32
    %c0_i32_0 = arith.constant 0 : i32
    %c0_i32_1 = arith.constant 0 : i32
    return %arg0, %c0_i32, %c0_i32_0 : i32, i32, i32
  }
}

</mosaic_0001>

<llo_original>
// kernel: tpu_custom_call.1
$region0: #{tpu_custom_call.1}
  #allocation0 [shape = 'u32[]', space=smem, size = 0x4, offset = 0x4, fixed_abs, tag = 'smem constant byte address 0x4 - core index']
  #allocation1 [shape = 'u32[144,128]{1,0:T(1,128)}', space=vmem, size = 0x12000, scoped, tag = 'internal scratch']
  %s0 = inlined_call_operand.hbm [shape: f32[4,8,128], index: 0, kind: input, shape index: {}]
  %s1 = inlined_call_operand.hbm [shape: f32[4,16,128], index: 1, kind: input, shape index: {}]
  %s2 = inlined_call_operand.hbm [shape: f32[1,128], index: 2, kind: input, shape index: {}]
  %s3 = inlined_call_operand.hbm [shape: f32[1,128], index: 3, kind: input, shape index: {}]
  %s4 = inlined_call_operand.hbm [shape: bf16[128,128], index: 4, kind: input, shape index: {}]
  %s5 = inlined_call_operand.hbm [shape: f32[1,128], index: 5, kind: input, shape index: {}]
  %s6 = inlined_call_operand.hbm [shape: bf16[128,256], index: 6, kind: input, shape index: {}]
  %s7 = inlined_call_operand.hbm [shape: f32[1,256], index: 7, kind: input, shape index: {}]
  %s8 = inlined_call_operand.hbm [shape: bf16[128,128], index: 8, kind: input, shape index: {}]
  %s9 = inlined_call_operand.hbm [shape: f32[1,128], index: 9, kind: input, shape index: {}]
  %s10 = inlined_call_operand.hbm [shape: f32[4,8,128], index: 10, kind: output, shape index: {}]
  %s11 = sld [smem:[#allocation0]]
  $region113: #{tpu_custom_call.1} parent=0
    _
  %s13 = ssub.s32 1, %s11
  %s14 = scalar_select 0, %s13, %s11
  $region1: #{tpu_custom_call.1} parent=0
    #allocation2 [shape = 'u8[16384]{0}', space=vmem, size = 0x4000, scoped, tag = 'input window, operand 0']
    #allocation3 [shape = 's32[2]{0}', space=sflag, size = 0x8, scoped, tag = 'scoped memory for tpu_custom_call.1']
    #allocation4 [shape = 's32[2]{0}', space=sflag, size = 0x8, scoped, tag = 'scoped memory for tpu_custom_call.1']
    #allocation5 [shape = 'u8[32768]{0}', space=vmem, size = 0x8000, scoped, tag = 'input window, operand 1']
    #allocation6 [shape = 's32[2]{0}', space=sflag, size = 0x8, scoped, tag = 'scoped memory for tpu_custom_call.1']
    #allocation7 [shape = 'u8[512]{0}', space=vmem, size = 0x400, scoped, tag = 'input window, operand 2, single buffered']
    #allocation8 [shape = 'u8[512]{0}', space=vmem, size = 0x400, scoped, tag = 'input window, operand 3, single buffered']
    #allocation9 [shape = 's32[1]{0}', space=sflag, size = 0x4, scoped, tag = 'scoped memory for tpu_custom_call.1']
    #allocation10 [shape = 'u8[32768]{0}', space=vmem, size = 0x8000, scoped, tag = 'input window, operand 4, single buffered']
    #allocation11 [shape = 'u8[512]{0}', space=vmem, size = 0x400, scoped, tag = 'input window, operand 5, single buffered']
    #allocation12 [shape = 's32[1]{0}', space=sflag, size = 0x4, scoped, tag = 'scoped memory for tpu_custom_call.1']
    #allocation13 [shape = 'u8[65536]{0}', space=vmem, size = 0x10000, scoped, tag = 'input window, operand 6, single buffered']
    #allocation14 [shape = 'u8[1024]{0}', space=vmem, size = 0x400, scoped, tag = 'input window, operand 7, single buffered']
    #allocation15 [shape = 's32[1]{0}', space=sflag, size = 0x4, scoped, tag = 'scoped memory for tpu_custom_call.1']
    #allocation16 [shape = 'u8[32768]{0}', space=vmem, size = 0x8000, scoped, tag = 'input window, operand 8, single buffered']
    #allocation17 [shape = 'u8[512]{0}', space=vmem, size = 0x400, scoped, tag = 'input window, operand 9, single buffered']
    #allocation18 [shape = 's32[1]{0}', space=sflag, size = 0x4, scoped, tag = 'scoped memory for tpu_custom_call.1']
    #allocation19 [shape = 'u8[16384]{0}', space=vmem, size = 0x4000, scoped, tag = 'output window, operand 0']
    %15 = vsyncpa [#allocation3], 0
    %s16 = scalar_lea.sflag [#allocation3], 1
    %17 = vsyncpa %s16, 0
    %18 = vsyncpa [#allocation6], 0
    %s19 = scalar_lea.sflag [#allocation6], 1
    %20 = vsyncpa %s19, 0
    %21 = vsyncpa [#allocation9], 0
    %22 = vsyncpa [#allocation12], 0
    %23 = vsyncpa [#allocation15], 0
    %24 = vsyncpa [#allocation18], 0
    %25 = vsyncpa [#allocation4], 0
    %s26 = scalar_lea.sflag [#allocation4], 1
    %27 = vsyncpa %s26, 0
    loop: start=0, step=1, limit=4
    $region2: #{tpu_custom_call.1} parent=1 // loop_pre_header
      _
    $region3: #{tpu_custom_call.1} parent=1 // loop_header
      %s29 = sphi 0, %s33
      %p30 = scmp.ge.s32.totalorder %s29, 4
      %s39 = sphi 0, %s41
      %s42 = sphi 0, %s39
      %s43 = sphi 0, %s42
      %s59 = sphi 0, %s43
      %s65 = sphi 0, %s67
      %s68 = sphi 0, %s65
      %s69 = sphi 0, %s68
      %s85 = sphi 0, %s69
      %s89 = sphi 0, %s89
      %s91 = sphi 0, %s89
      %s92 = sphi 0, %s91
      %s106 = sphi 0, %s92
      %s110 = sphi 0, %s110
      %s112 = sphi 0, %s110
      %s113 = sphi 0, %s112
      %s127 = sphi 0, %s113
      %s131 = sphi 0, %s131
      %s133 = sphi 0, %s131
      %s134 = sphi 0, %s133
      %s148 = sphi 0, %s134
      %s152 = sphi 0, %s152
      %s154 = sphi 0, %s152
      %s155 = sphi 0, %s154
      %s169 = sphi 0, %s155
      %s173 = sphi 0, %s173
      %s175 = sphi 0, %s173
      %s176 = sphi 0, %s175
      %s190 = sphi 0, %s176
      %s194 = sphi 0, %s194
      %s196 = sphi 0, %s194
      %s197 = sphi 0, %s196
      %s211 = sphi 0, %s197
      %s215 = sphi 0, %s215
      %s217 = sphi 0, %s215
      %s218 = sphi 0, %s217
      %s232 = sphi 0, %s218
      %s236 = sphi 0, %s236
      %s238 = sphi 0, %s236
      %s239 = sphi 0, %s238
      %s253 = sphi 0, %s239
      %s259 = sphi 0, %s261
      %s262 = sphi 0, %s259
      %s263 = sphi 0, %s262
      %s279 = sphi 0, %s263
    $region4: #{tpu_custom_call.1} parent=1 // loop_header_branch
      %32 = sbr.rel (%p30) target = $region8
    $region5: #{tpu_custom_call.1} parent=1 // loop_body
      %s34 = ssub.s32 %s29, 1
      %s35 = ssub.s32 %s29, 2
      %s36 = sadd.s32 %s29, 1
      %s37 = ssub.s32 %s29, %s36
      %p38 = scmp.eq.s32.totalorder %s37, 0
      %s40 = sadd.s32 %s39, 1
      %s41 = scalar_select %p38, %s39, %s40
      %p44 = pneg %p38
      %p45 = scmp.eq.s32.totalorder %s29, 1
      %p46 = por %p44, %p45
      %p47 = scmp.ne.s32.totalorder %s39, %s42
      %p48 = scmp.eq.s32.totalorder %s29, 0
      %p49 = por %p47, %p48
      %p50 = scmp.ne.s32.totalorder %s39, %s42
      %p51 = scmp.eq.s32.totalorder %s34, 1
      %p52 = por %p50, %p51
      %p53 = scmp.ne.s32.totalorder %s42, %s43
      %p54 = scmp.eq.s32.totalorder %s34, 0
      %p55 = por %p53, %p54
      %p56 = scmp.ne.s32.totalorder %s42, %s43
      %p57 = scmp.eq.s32.totalorder %s35, 1
      %p58 = por %p56, %p57
      %p60 = scmp.ne.s32.totalorder %s43, %s59
      %p61 = scmp.eq.s32.totalorder %s35, 0
      %p62 = por %p60, %p61
      %s63 = ssub.s32 %s29, %s36
      %p64 = scmp.eq.s32.totalorder %s63, 0
      %s66 = sadd.s32 %s65, 1
      %s67 = scalar_select %p64, %s65, %s66
      %p70 = pneg %p64
      %p71 = scmp.eq.s32.totalorder %s29, 1
      %p72 = por %p70, %p71
      %p73 = scmp.ne.s32.totalorder %s65, %s68
      %p74 = scmp.eq.s32.totalorder %s29, 0
      %p75 = por %p73, %p74
      %p76 = scmp.ne.s32.totalorder %s65, %s68
      %p77 = scmp.eq.s32.totalorder %s34, 1
      %p78 = por %p76, %p77
      %p79 = scmp.ne.s32.totalorder %s68, %s69
      %p80 = scmp.eq.s32.totalorder %s34, 0
      %p81 = por %p79, %p80
      %p82 = scmp.ne.s32.totalorder %s68, %s69
      %p83 = scmp.eq.s32.totalorder %s35, 1
      %p84 = por %p82, %p83
      %p86 = scmp.ne.s32.totalorder %s69, %s85
      %p87 = scmp.eq.s32.totalorder %s35, 0
      %p88 = por %p86, %p87
      %s90 = sadd.s32 %s89, 1
      %p93 = scmp.eq.s32.totalorder %s29, 1
      %p94 = scmp.ne.s32.totalorder %s89, %s91
      %p95 = scmp.eq.s32.totalorder %s29, 0
      %p96 = por %p94, %p95
      %p97 = scmp.ne.s32.totalorder %s89, %s91
      %p98 = scmp.eq.s32.totalorder %s34, 1
      %p99 = por %p97, %p98
      %p100 = scmp.ne.s32.totalorder %s91, %s92
      %p101 = scmp.eq.s32.totalorder %s34, 0
      %p102 = por %p100, %p101
      %p103 = scmp.ne.s32.totalorder %s91, %s92
      %p104 = scmp.eq.s32.totalorder %s35, 1
      %p105 = por %p103, %p104
      %p107 = scmp.ne.s32.totalorder %s92, %s106
      %p108 = scmp.eq.s32.totalorder %s35, 0
      %p109 = por %p107, %p108
      %s111 = sadd.s32 %s110, 1
      %p114 = scmp.eq.s32.totalorder %s29, 1
      %p115 = scmp.ne.s32.totalorder %s110, %s112
      %p116 = scmp.eq.s32.totalorder %s29, 0
      %p117 = por %p115, %p116
      %p118 = scmp.ne.s32.totalorder %s110, %s112
      %p119 = scmp.eq.s32.totalorder %s34, 1
      %p120 = por %p118, %p119
      %p121 = scmp.ne.s32.totalorder %s112, %s113
      %p122 = scmp.eq.s32.totalorder %s34, 0
      %p123 = por %p121, %p122
      %p124 = scmp.ne.s32.totalorder %s112, %s113
      %p125 = scmp.eq.s32.totalorder %s35, 1
      %p126 = por %p124, %p125
      %p128 = scmp.ne.s32.totalorder %s113, %s127
      %p129 = scmp.eq.s32.totalorder %s35, 0
      %p130 = por %p128, %p129
      %s132 = sadd.s32 %s131, 1
      %p135 = scmp.eq.s32.totalorder %s29, 1
      %p136 = scmp.ne.s32.totalorder %s131, %s133
      %p137 = scmp.eq.s32.totalorder %s29, 0
      %p138 = por %p136, %p137
      %p139 = scmp.ne.s32.totalorder %s131, %s133
      %p140 = scmp.eq.s32.totalorder %s34, 1
      %p141 = por %p139, %p140
      %p142 = scmp.ne.s32.totalorder %s133, %s134
      %p143 = scmp.eq.s32.totalorder %s34, 0
      %p144 = por %p142, %p143
      %p145 = scmp.ne.s32.totalorder %s133, %s134
      %p146 = scmp.eq.s32.totalorder %s35, 1
      %p147 = por %p145, %p146
      %p149 = scmp.ne.s32.totalorder %s134, %s148
      %p150 = scmp.eq.s32.totalorder %s35, 0
      %p151 = por %p149, %p150
      %s153 = sadd.s32 %s152, 1
      %p156 = scmp.eq.s32.totalorder %s29, 1
      %p157 = scmp.ne.s32.totalorder %s152, %s154
      %p158 = scmp.eq.s32.totalorder %s29, 0
      %p159 = por %p157, %p158
      %p160 = scmp.ne.s32.totalorder %s152, %s154
      %p161 = scmp.eq.s32.totalorder %s34, 1
      %p162 = por %p160, %p161
      %p163 = scmp.ne.s32.totalorder %s154, %s155
      %p164 = scmp.eq.s32.totalorder %s34, 0
      %p165 = por %p163, %p164
      %p166 = scmp.ne.s32.totalorder %s154, %s155
      %p167 = scmp.eq.s32.totalorder %s35, 1
      %p168 = por %p166, %p167
      %p170 = scmp.ne.s32.totalorder %s155, %s169
      %p171 = scmp.eq.s32.totalorder %s35, 0
      %p172 = por %p170, %p171
      %s174 = sadd.s32 %s173, 1
      %p177 = scmp.eq.s32.totalorder %s29, 1
      %p178 = scmp.ne.s32.totalorder %s173, %s175
      %p179 = scmp.eq.s32.totalorder %s29, 0
      %p180 = por %p178, %p179
      %p181 = scmp.ne.s32.totalorder %s173, %s175
      %p182 = scmp.eq.s32.totalorder %s34, 1
      %p183 = por %p181, %p182
      %p184 = scmp.ne.s32.totalorder %s175, %s176
      %p185 = scmp.eq.s32.totalorder %s34, 0
      %p186 = por %p184, %p185
      %p187 = scmp.ne.s32.totalorder %s175, %s176
      %p188 = scmp.eq.s32.totalorder %s35, 1
      %p189 = por %p187, %p188
      %p191 = scmp.ne.s32.totalorder %s176, %s190
      %p192 = scmp.eq.s32.totalorder %s35, 0
      %p193 = por %p191, %p192
      %s195 = sadd.s32 %s194, 1
      %p198 = scmp.eq.s32.totalorder %s29, 1
      %p199 = scmp.ne.s32.totalorder %s194, %s196
      %p200 = scmp.eq.s32.totalorder %s29, 0
      %p201 = por %p199, %p200
      %p202 = scmp.ne.s32.totalorder %s194, %s196
      %p203 = scmp.eq.s32.totalorder %s34, 1
      %p204 = por %p202, %p203
      %p205 = scmp.ne.s32.totalorder %s196, %s197
      %p206 = scmp.eq.s32.totalorder %s34, 0
      %p207 = por %p205, %p206
      %p208 = scmp.ne.s32.totalorder %s196, %s197
      %p209 = scmp.eq.s32.totalorder %s35, 1
      %p210 = por %p208, %p209
      %p212 = scmp.ne.s32.totalorder %s197, %s211
      %p213 = scmp.eq.s32.totalorder %s35, 0
      %p214 = por %p212, %p213
      %s216 = sadd.s32 %s215, 1
      %p219 = scmp.eq.s32.totalorder %s29, 1
      %p220 = scmp.ne.s32.totalorder %s215, %s217
      %p221 = scmp.eq.s32.totalorder %s29, 0
      %p222 = por %p220, %p221
      %p223 = scmp.ne.s32.totalorder %s215, %s217
      %p224 = scmp.eq.s32.totalorder %s34, 1
      %p225 = por %p223, %p224
      %p226 = scmp.ne.s32.totalorder %s217, %s218
      %p227 = scmp.eq.s32.totalorder %s34, 0
      %p228 = por %p226, %p227
      %p229 = scmp.ne.s32.totalorder %s217, %s218
      %p230 = scmp.eq.s32.totalorder %s35, 1
      %p231 = por %p229, %p230
      %p233 = scmp.ne.s32.totalorder %s218, %s232
      %p234 = scmp.eq.s32.totalorder %s35, 0
      %p235 = por %p233, %p234
      %s237 = sadd.s32 %s236, 1
      %p240 = scmp.eq.s32.totalorder %s29, 1
      %p241 = scmp.ne.s32.totalorder %s236, %s238
      %p242 = scmp.eq.s32.totalorder %s29, 0
      %p243 = por %p241, %p242
      %p244 = scmp.ne.s32.totalorder %s236, %s238
      %p245 = scmp.eq.s32.totalorder %s34, 1
      %p246 = por %p244, %p245
      %p247 = scmp.ne.s32.totalorder %s238, %s239
      %p248 = scmp.eq.s32.totalorder %s34, 0
      %p249 = por %p247, %p248
      %p250 = scmp.ne.s32.totalorder %s238, %s239
      %p251 = scmp.eq.s32.totalorder %s35, 1
      %p252 = por %p250, %p251
      %p254 = scmp.ne.s32.totalorder %s239, %s253
      %p255 = scmp.eq.s32.totalorder %s35, 0
      %p256 = por %p254, %p255
      %s257 = ssub.s32 %s29, %s36
      %p258 = scmp.eq.s32.totalorder %s257, 0
      %s260 = sadd.s32 %s259, 1
      %s261 = scalar_select %p258, %s259, %s260
      %p264 = pneg %p258
      %p265 = scmp.eq.s32.totalorder %s29, 1
      %p266 = por %p264, %p265
      %p267 = scmp.ne.s32.totalorder %s259, %s262
      %p268 = scmp.eq.s32.totalorder %s29, 0
      %p269 = por %p267, %p268
      %p270 = scmp.ne.s32.totalorder %s259, %s262
      %p271 = scmp.eq.s32.totalorder %s34, 1
      %p272 = por %p270, %p271
      %p273 = scmp.ne.s32.totalorder %s262, %s263
      %p274 = scmp.eq.s32.totalorder %s34, 0
      %p275 = por %p273, %p274
      %p276 = scmp.ne.s32.totalorder %s262, %s263
      %p277 = scmp.eq.s32.totalorder %s35, 1
      %p278 = por %p276, %p277
      %p280 = scmp.ne.s32.totalorder %s263, %s279
      %p281 = scmp.eq.s32.totalorder %s35, 0
      %p282 = por %p280, %p281
      %p283 = scmp.le.s32.totalorder 1, %s29
      %p284 = scmp.lt.s32.totalorder %s29, 3
      %p285 = pnand %p283, %p284
      %p286 = pneg %p285
      // Predicated region
      $region9: #{tpu_custom_call.1} parent=5 // pred_check
        _
      $region10: #{tpu_custom_call.1} parent=5 // pred_check_branch
        %288 = sbr.rel (%p285) target = $region12
      $region11: #{tpu_custom_call.1} parent=5 // pred_region
        %s289 = ssub.s32 %s29, 1
        // Predicated region
        $region13: #{tpu_custom_call.1} parent=11 // pred_check
          %p290 = pneg %p102
        $region14: #{tpu_custom_call.1} parent=11 // pred_check_branch
          %292 = sbr.rel (%p290) target = $region16
        $region15: #{tpu_custom_call.1} parent=11 // pred_region
          %s294 = ssub.s32 16, 16
          %295 = vsyncadd [#allocation6], %s294
          %s297 = sshll.u32 [#allocation7], 4
          %s298 = int_to_ptr.vmem [resolvable:$true] %s297
          %300 = dma.hbm_to_vmem [thread:$0]  %s2, 16, %s298, [#allocation6]
        $region16: #{tpu_custom_call.1} parent=11 // pred_fallthru
          _
        // Predicated region
        $region17: #{tpu_custom_call.1} parent=11 // pred_check
          %p301 = pneg %p123
        $region18: #{tpu_custom_call.1} parent=11 // pred_check_branch
          %303 = sbr.rel (%p301) target = $region20
        $region19: #{tpu_custom_call.1} parent=11 // pred_region
          %s305 = ssub.s32 16, 16
          %306 = vsyncadd [#allocation9], %s305
          %s308 = sshll.u32 [#allocation8], 4
          %s309 = int_to_ptr.vmem [resolvable:$true] %s308
          %311 = dma.hbm_to_vmem [thread:$0]  %s3, 16, %s309, [#allocation9]
        $region20: #{tpu_custom_call.1} parent=11 // pred_fallthru
          _
        // Predicated region
        $region21: #{tpu_custom_call.1} parent=11 // pred_check
          %p312 = pneg %p144
        $region22: #{tpu_custom_call.1} parent=11 // pred_check_branch
          %314 = sbr.rel (%p312) target = $region24
        $region23: #{tpu_custom_call.1} parent=11 // pred_region
          %s316 = ssub.s32 1024, 1024
          %317 = vsyncadd [#allocation9], %s316
          %s318 = sshll.u32 [#allocation10], 4
          %s319 = int_to_ptr.vmem [resolvable:$true] %s318
          %324 = dma.hbm_to_vmem [thread:$0]  %s4, 1024, %s319, [#allocation9], 64, 64, 4
        $region24: #{tpu_custom_call.1} parent=11 // pred_fallthru
          _
        // Predicated region
        $region25: #{tpu_custom_call.1} parent=11 // pred_check
          %p325 = pneg %p165
        $region26: #{tpu_custom_call.1} parent=11 // pred_check_branch
          %327 = sbr.rel (%p325) target = $region28
        $region27: #{tpu_custom_call.1} parent=11 // pred_region
          %s329 = ssub.s32 16, 16
          %330 = vsyncadd [#allocation12], %s329
          %s332 = sshll.u32 [#allocation11], 4
          %s333 = int_to_ptr.vmem [resolvable:$true] %s332
          %335 = dma.hbm_to_vmem [thread:$0]  %s5, 16, %s333, [#allocation12]
        $region28: #{tpu_custom_call.1} parent=11 // pred_fallthru
          _
        // Predicated region
        $region29: #{tpu_custom_call.1} parent=11 // pred_check
          %p336 = pneg %p186
        $region30: #{tpu_custom_call.1} parent=11 // pred_check_branch
          %338 = sbr.rel (%p336) target = $region32
        $region31: #{tpu_custom_call.1} parent=11 // pred_region
          %s340 = ssub.s32 2048, 2048
          %341 = vsyncadd [#allocation12], %s340
          %s342 = sshll.u32 [#allocation13], 4
          %s343 = int_to_ptr.vmem [resolvable:$true] %s342
          %348 = dma.hbm_to_vmem [thread:$0]  %s6, 2048, %s343, [#allocation12], 128, 128, 8
        $region32: #{tpu_custom_call.1} parent=11 // pred_fallthru
          _
        // Predicated region
        $region33: #{tpu_custom_call.1} parent=11 // pred_check
          %p349 = pneg %p207
        $region34: #{tpu_custom_call.1} parent=11 // pred_check_branch
          %351 = sbr.rel (%p349) target = $region36
        $region35: #{tpu_custom_call.1} parent=11 // pred_region
          %s353 = ssub.s32 32, 32
          %354 = vsyncadd [#allocation15], %s353
          %s356 = sshll.u32 [#allocation14], 4
          %s357 = int_to_ptr.vmem [resolvable:$true] %s356
          %359 = dma.hbm_to_vmem [thread:$0]  %s7, 32, %s357, [#allocation15]
        $region36: #{tpu_custom_call.1} parent=11 // pred_fallthru
          _
        // Predicated region
        $region37: #{tpu_custom_call.1} parent=11 // pred_check
          %p360 = pneg %p228
        $region38: #{tpu_custom_call.1} parent=11 // pred_check_branch
          %362 = sbr.rel (%p360) target = $region40
        $region39: #{tpu_custom_call.1} parent=11 // pred_region
          %s364 = ssub.s32 1024, 1024
          %365 = vsyncadd [#allocation15], %s364
          %s366 = sshll.u32 [#allocation16], 4
          %s367 = int_to_ptr.vmem [resolvable:$true] %s366
          %372 = dma.hbm_to_vmem [thread:$0]  %s8, 1024, %s367, [#allocation15], 64, 64, 4
        $region40: #{tpu_custom_call.1} parent=11 // pred_fallthru
          _
        // Predicated region
        $region41: #{tpu_custom_call.1} parent=11 // pred_check
          %p373 = pneg %p249
        $region42: #{tpu_custom_call.1} parent=11 // pred_check_branch
          %375 = sbr.rel (%p373) target = $region44
        $region43: #{tpu_custom_call.1} parent=11 // pred_region
          %s377 = ssub.s32 16, 16
          %378 = vsyncadd [#allocation18], %s377
          %s380 = sshll.u32 [#allocation17], 4
          %s381 = int_to_ptr.vmem [resolvable:$true] %s380
          %383 = dma.hbm_to_vmem [thread:$0]  %s9, 16, %s381, [#allocation18]
        $region44: #{tpu_custom_call.1} parent=11 // pred_fallthru
          _
      $region12: #{tpu_custom_call.1} parent=5 // pred_fallthru
        _
      %p384 = scmp.lt.s32.totalorder %s29, 2
      // Predicated region
      $region45: #{tpu_custom_call.1} parent=5 // pred_check
        %p385 = pneg %p384
      $region46: #{tpu_custom_call.1} parent=5 // pred_check_branch
        %387 = sbr.rel (%p385) target = $region48
      $region47: #{tpu_custom_call.1} parent=5 // pred_region
        // Predicated region
        $region49: #{tpu_custom_call.1} parent=47 // pred_check
          %p388 = pneg %p49
        $region50: #{tpu_custom_call.1} parent=47 // pred_check_branch
          %390 = sbr.rel (%p388) target = $region52
        $region51: #{tpu_custom_call.1} parent=47 // pred_region
          %s391 = sand.u32 %s39, 1
          %s392 = scalar_lea.sflag [#allocation3], %s391
          %s393 = sand.u32 %s39, 1
          %s394 = smul.addr %s393, 16
          %s395 = scalar_lea.vmem [#allocation2], %s394
          %s396 = smul.u32 2, %s29
          %s398 = ssub.s32 256, 256
          %399 = vsyncadd %s392, %s398
          %s400 = smul.addr %s396, 128
          %s401 = scalar_lea.hbm %s0, %s400
          %s402 = sshll.u32 %s395, 4
          %s403 = int_to_ptr.vmem [resolvable:$true] %s402
          %408 = dma.hbm_to_vmem [thread:$0]  %s401, 256, %s403, %s392, 128, 128, 8
        $region52: #{tpu_custom_call.1} parent=47 // pred_fallthru
          _
        // Predicated region
        $region53: #{tpu_custom_call.1} parent=47 // pred_check
          %p409 = pneg %p75
        $region54: #{tpu_custom_call.1} parent=47 // pred_check_branch
          %411 = sbr.rel (%p409) target = $region56
        $region55: #{tpu_custom_call.1} parent=47 // pred_region
          %s412 = sand.u32 %s29, 1
          %s413 = scalar_lea.sflag [#allocation6], %s412
          %s414 = sand.u32 %s65, 1
          %s415 = smul.addr %s414, 32
          %s416 = scalar_lea.vmem [#allocation5], %s415
          %s417 = smul.u32 2, %s29
          %s419 = ssub.s32 512, 512
          %420 = vsyncadd %s413, %s419
          %s421 = smul.addr %s417, 2
          %s422 = smul.addr %s421, 128
          %s423 = scalar_lea.hbm %s1, %s422
          %s424 = sshll.u32 %s416, 4
          %s425 = int_to_ptr.vmem [resolvable:$true] %s424
          %430 = dma.hbm_to_vmem [thread:$0]  %s423, 512, %s425, %s413, 128, 128, 8
        $region56: #{tpu_custom_call.1} parent=47 // pred_fallthru
          _
      $region48: #{tpu_custom_call.1} parent=5 // pred_fallthru
        _
      %p431 = scmp.le.s32.totalorder 1, %s29
      %p432 = scmp.lt.s32.totalorder %s29, 3
      %p433 = pnand %p431, %p432
      %p434 = pneg %p433
      // Predicated region
      $region57: #{tpu_custom_call.1} parent=5 // pred_check
        _
      $region58: #{tpu_custom_call.1} parent=5 // pred_check_branch
        %436 = sbr.rel (%p433) target = $region60
      $region59: #{tpu_custom_call.1} parent=5 // pred_region
        %s437 = ssub.s32 %s29, 1
        %s438 = sand.u32 %s42, 1
        %s439 = scalar_lea.sflag [#allocation3], %s438
        %s440 = sand.u32 %s42, 1
        %s441 = smul.addr %s440, 16
        %s442 = scalar_lea.vmem [#allocation2], %s441
        // Predicated region
        $region61: #{tpu_custom_call.1} parent=59 // pred_check
          %p443 = pneg %p55
        $region62: #{tpu_custom_call.1} parent=59 // pred_check_branch
          %445 = sbr.rel (%p443) target = $region64
        $region63: #{tpu_custom_call.1} parent=59 // pred_region
          %446 = dma.done %s439, 256
        $region64: #{tpu_custom_call.1} parent=59 // pred_fallthru
          _
        %s447 = sand.u32 %s34, 1
        %s448 = scalar_lea.sflag [#allocation6], %s447
        %s449 = sand.u32 %s68, 1
        %s450 = smul.addr %s449, 32
        %s451 = scalar_lea.vmem [#allocation5], %s450
        // Predicated region
        $region65: #{tpu_custom_call.1} parent=59 // pred_check
          %p452 = pneg %p81
        $region66: #{tpu_custom_call.1} parent=59 // pred_check_branch
          %454 = sbr.rel (%p452) target = $region68
        $region67: #{tpu_custom_call.1} parent=59 // pred_region
          %455 = dma.done %s448, 512
        $region68: #{tpu_custom_call.1} parent=59 // pred_fallthru
          _
        // Predicated region
        $region69: #{tpu_custom_call.1} parent=59 // pred_check
          %p456 = pneg %p102
        $region70: #{tpu_custom_call.1} parent=59 // pred_check_branch
          %458 = sbr.rel (%p456) target = $region72
        $region71: #{tpu_custom_call.1} parent=59 // pred_region
          %459 = dma.done [#allocation6], 16
        $region72: #{tpu_custom_call.1} parent=59 // pred_fallthru
          _
        // Predicated region
        $region73: #{tpu_custom_call.1} parent=59 // pred_check
          %p460 = pneg %p123
        $region74: #{tpu_custom_call.1} parent=59 // pred_check_branch
          %462 = sbr.rel (%p460) target = $region76
        $region75: #{tpu_custom_call.1} parent=59 // pred_region
          %463 = dma.done [#allocation9], 16
        $region76: #{tpu_custom_call.1} parent=59 // pred_fallthru
          _
        // Predicated region
        $region77: #{tpu_custom_call.1} parent=59 // pred_check
          %p464 = pneg %p144
        $region78: #{tpu_custom_call.1} parent=59 // pred_check_branch
          %466 = sbr.rel (%p464) target = $region80
        $region79: #{tpu_custom_call.1} parent=59 // pred_region
          %467 = dma.done [#allocation9], 1024
        $region80: #{tpu_custom_call.1} parent=59 // pred_fallthru
          _
        // Predicated region
        $region81: #{tpu_custom_call.1} parent=59 // pred_check
          %p468 = pneg %p165
        $region82: #{tpu_custom_call.1} parent=59 // pred_check_branch
          %470 = sbr.rel (%p468) target = $region84
        $region83: #{tpu_custom_call.1} parent=59 // pred_region
          %471 = dma.done [#allocation12], 16
        $region84: #{tpu_custom_call.1} parent=59 // pred_fallthru
          _
        // Predicated region
        $region85: #{tpu_custom_call.1} parent=59 // pred_check
          %p472 = pneg %p186
        $region86: #{tpu_custom_call.1} parent=59 // pred_check_branch
          %474 = sbr.rel (%p472) target = $region88
        $region87: #{tpu_custom_call.1} parent=59 // pred_region
          %475 = dma.done [#allocation12], 2048
        $region88: #{tpu_custom_call.1} parent=59 // pred_fallthru
          _
        // Predicated region
        $region89: #{tpu_custom_call.1} parent=59 // pred_check
          %p476 = pneg %p207
        $region90: #{tpu_custom_call.1} parent=59 // pred_check_branch
          %478 = sbr.rel (%p476) target = $region92
        $region91: #{tpu_custom_call.1} parent=59 // pred_region
          %479 = dma.done [#allocation15], 32
        $region92: #{tpu_custom_call.1} parent=59 // pred_fallthru
          _
        // Predicated region
        $region93: #{tpu_custom_call.1} parent=59 // pred_check
          %p480 = pneg %p228
        $region94: #{tpu_custom_call.1} parent=59 // pred_check_branch
          %482 = sbr.rel (%p480) target = $region96
        $region95: #{tpu_custom_call.1} parent=59 // pred_region
          %483 = dma.done [#allocation15], 1024
        $region96: #{tpu_custom_call.1} parent=59 // pred_fallthru
          _
        // Predicated region
        $region97: #{tpu_custom_call.1} parent=59 // pred_check
          %p484 = pneg %p249
        $region98: #{tpu_custom_call.1} parent=59 // pred_check_branch
          %486 = sbr.rel (%p484) target = $region100
        $region99: #{tpu_custom_call.1} parent=59 // pred_region
          %487 = dma.done [#allocation18], 16
        $region100: #{tpu_custom_call.1} parent=59 // pred_fallthru
          _
        %s488 = sand.u32 %s42, 1
        %s489 = scalar_lea.sflag [#allocation3], %s488
        %s490 = sand.u32 %s42, 1
        %s491 = smul.addr %s490, 16
        %s492 = scalar_lea.vmem [#allocation2], %s491
        %p493 = pneg %p55
        %p494 = pneg %p52
        %s495 = sand.u32 %s34, 1
        %s496 = scalar_lea.sflag [#allocation6], %s495
        %s497 = sand.u32 %s68, 1
        %s498 = smul.addr %s497, 32
        %s499 = scalar_lea.vmem [#allocation5], %s498
        %p500 = pneg %p81
        %p501 = pneg %p78
        %p502 = pneg %p102
        %p503 = pneg %p99
        %p504 = pneg %p123
        %p505 = pneg %p120
        %p506 = pneg %p144
        %p507 = pneg %p141
        %p508 = pneg %p165
        %p509 = pneg %p162
        %p510 = pneg %p186
        %p511 = pneg %p183
        %p512 = pneg %p207
        %p513 = pneg %p204
        %p514 = pneg %p228
        %p515 = pneg %p225
        %p516 = pneg %p249
        %p517 = pneg %p246
        %p518 = pneg %p275
        %p519 = pneg %p272
        %s520 = sand.u32 %s262, 1
        %s521 = scalar_lea.sflag [#allocation4], %s520
        %s522 = sand.u32 %s262, 1
        %s523 = smul.addr %s522, 16
        %s524 = scalar_lea.vmem [#allocation19], %s523
        %s525 = smul.u32 2, %s34
        %s526 = smul.u32 2, %s34
        %s527 = smul.u32 2, %s34
        %v529 = vld [vmem:[%s442] sm:$0xff]
        %v530 = vld [vmem:[%s442 + $0x8] sm:$0xff]
        %v531 = vld [vmem:[%s451] sm:$0xff]
        %v532 = vld [vmem:[%s451 + $0x8] sm:$0xff]
        %v533 = vld [vmem:[%s451 + $0x10] sm:$0xff]
        %v534 = vld [vmem:[%s451 + $0x18] sm:$0xff]
        %v535 = vld [vmem:[#allocation7] sm:$0x1]
        %v536 = vld [vmem:[#allocation8] sm:$0x1]
        %537 = vadd.xlane.f32.xlu0 %v529
        %v538 = vpop.xlane.xlu0 %537
        %539 = vadd.xlane.f32.xlu0 %v530
        %v540 = vpop.xlane.xlu0 %539
        %v541 = vrcp.pop 128.0
        %v542 = vmul.f32 %v538, %v541
        %v543 = vmul.f32 %v540, %v541
        %v544 = vsub.f32 %v529, %v542
        %v545 = vsub.f32 %v530, %v543
        %v546 = vmul.f32 %v544, %v544
        %v547 = vmul.f32 %v545, %v545
        %548 = vadd.xlane.f32.xlu0 %v546
        %v549 = vpop.xlane.xlu0 %548
        %550 = vadd.xlane.f32.xlu0 %v547
        %v551 = vpop.xlane.xlu0 %550
        %v552 = vmul.f32 %v549, %v541
        %v553 = vmul.f32 %v551, %v541
        %v554 = vadd.f32 %v552, 1e-06
        %v555 = vadd.f32 %v553, 1e-06
        %v556 = vrsqrt.pop %v554
        %v557 = vrsqrt.pop %v555
        %v558 = vmul.f32 %v544, %v556
        %v559 = vmul.f32 %v545, %v557
        %v561 = vlaneseq
        %v562 = vshrl.u32 %v561, 7
        %v563 = vsub.s32 0, %v562
        %v564 = vrot.slane %v535, %v563
        %v566 = vmul.f32 %v558, %v564
        %v567 = vmul.f32 %v559, %v564
        %v569 = vlaneseq
        %v570 = vshrl.u32 %v569, 7
        %v571 = vsub.s32 0, %v570
        %v572 = vrot.slane %v536, %v571
        %v574 = vadd.f32 %v566, %v572
        %v575 = vadd.f32 %v567, %v572
        %v576 = vpack.c.bf16 %v575, %v574
        %577 = vadd.xlane.f32.xlu0 %v531
        %v578 = vpop.xlane.xlu0 %577
        %579 = vadd.xlane.f32.xlu0 %v532
        %v580 = vpop.xlane.xlu0 %579
        %581 = vadd.xlane.f32.xlu0 %v533
        %v582 = vpop.xlane.xlu0 %581
        %583 = vadd.xlane.f32.xlu0 %v534
        %v584 = vpop.xlane.xlu0 %583
        %v585 = vmul.f32 %v578, %v541
        %v586 = vmul.f32 %v580, %v541
        %v587 = vmul.f32 %v582, %v541
        %v588 = vmul.f32 %v584, %v541
        %v589 = vsub.f32 %v531, %v585
        %v590 = vsub.f32 %v532, %v586
        %v591 = vsub.f32 %v533, %v587
        %v592 = vsub.f32 %v534, %v588
        %v593 = vmul.f32 %v589, %v589
        %v594 = vmul.f32 %v590, %v590
        %v595 = vmul.f32 %v591, %v591
        %v596 = vmul.f32 %v592, %v592
        %597 = vadd.xlane.f32.xlu0 %v593
        %v598 = vpop.xlane.xlu0 %597
        %599 = vadd.xlane.f32.xlu0 %v594
        %v600 = vpop.xlane.xlu0 %599
        %601 = vadd.xlane.f32.xlu0 %v595
        %v602 = vpop.xlane.xlu0 %601
        %603 = vadd.xlane.f32.xlu0 %v596
        %v604 = vpop.xlane.xlu0 %603
        %v605 = vmul.f32 %v598, %v541
        %v606 = vmul.f32 %v600, %v541
        %v607 = vmul.f32 %v602, %v541
        %v608 = vmul.f32 %v604, %v541
        %v609 = vadd.f32 %v605, 1e-06
        %v610 = vadd.f32 %v606, 1e-06
        %v611 = vadd.f32 %v607, 1e-06
        %v612 = vadd.f32 %v608, 1e-06
        %v613 = vrsqrt.pop %v609
        %v614 = vrsqrt.pop %v610
        %v615 = vrsqrt.pop %v611
        %v616 = vrsqrt.pop %v612
        %v617 = vmul.f32 %v589, %v613
        %v618 = vmul.f32 %v590, %v614
        %v619 = vmul.f32 %v591, %v615
        %v620 = vmul.f32 %v592, %v616
        %v621 = vmul.f32 %v617, %v564
        %v622 = vmul.f32 %v618, %v564
        %v623 = vmul.f32 %v619, %v564
        %v624 = vmul.f32 %v620, %v564
        %v625 = vadd.f32 %v621, %v572
        %v626 = vadd.f32 %v622, %v572
        %v627 = vadd.f32 %v623, %v572
        %v628 = vadd.f32 %v624, %v572
        %v629 = vpack.c.bf16 %v626, %v625
        %v630 = vpack.c.bf16 %v628, %v627
        %v631 = vld [vmem:[#allocation10] sm:$0xf]
        %v632 = vld [vmem:[#allocation10 + $0x4] sm:$0xf]
        %v633 = vld [vmem:[#allocation10 + $0x8] sm:$0xf]
        %v634 = vld [vmem:[#allocation10 + $0xc] sm:$0xf]
        %v635 = vld [vmem:[#allocation10 + $0x10] sm:$0xf]
        %v636 = vld [vmem:[#allocation10 + $0x14] sm:$0xf]
        %v637 = vld [vmem:[#allocation10 + $0x18] sm:$0xf]
        %v638 = vld [vmem:[#allocation10 + $0x1c] sm:$0xf]
        %v639 = vld [vmem:[#allocation10 + $0x20] sm:$0xf]
        %v640 = vld [vmem:[#allocation10 + $0x24] sm:$0xf]
        %v641 = vld [vmem:[#allocation10 + $0x28] sm:$0xf]
        %v642 = vld [vmem:[#allocation10 + $0x2c] sm:$0xf]
        %v643 = vld [vmem:[#allocation10 + $0x30] sm:$0xf]
        %v644 = vld [vmem:[#allocation10 + $0x34] sm:$0xf]
        %v645 = vld [vmem:[#allocation10 + $0x38] sm:$0xf]
        %v646 = vld [vmem:[#allocation10 + $0x3c] sm:$0xf]
        %v647 = vld [vmem:[#allocation11] sm:$0x1]
        %v649 = vlaneseq
        %v650 = vshrl.u32 %v649, 7
        %v651 = vsub.s32 0, %v650
        %v652 = vrot.slane %v647, %v651
        %v670 = vunpack.c.l.b16 %v631
        %v671 = vunpack.c.l.b16 %v632
        %v672 = vunpack.c.l.b16 %v633
        %v673 = vunpack.c.l.b16 %v634
        %v674 = vunpack.c.l.b16 %v635
        %v675 = vunpack.c.l.b16 %v636
        %v676 = vunpack.c.l.b16 %v637
        %v677 = vunpack.c.l.b16 %v638
        %v678 = vunpack.c.l.b16 %v639
        %v679 = vunpack.c.l.b16 %v640
        %v680 = vunpack.c.l.b16 %v641
        %v681 = vunpack.c.l.b16 %v642
        %v682 = vunpack.c.l.b16 %v643
        %v683 = vunpack.c.l.b16 %v644
        %v684 = vunpack.c.l.b16 %v645
        %v685 = vunpack.c.l.b16 %v646
        %v686 = vpack.c.b16 %v671, %v670
        %v687 = vpack.c.b16 %v673, %v672
        %v688 = vpack.c.b16 %v675, %v674
        %v689 = vpack.c.b16 %v677, %v676
        %v690 = vpack.c.b16 %v679, %v678
        %v691 = vpack.c.b16 %v681, %v680
        %v692 = vpack.c.b16 %v683, %v682
        %v693 = vpack.c.b16 %v685, %v684
        %702 = vmatprep.subr.bf16.mxu0 0
        %703 = vmatpush1.bf16.msra.mxu0 %v686
        %704 = vmatprep.subr.bf16.mxu0 0
        %705 = vmatpush1.bf16.msra.mxu0 %v687
        %706 = vmatprep.subr.bf16.mxu0 0
        %707 = vmatpush1.bf16.msra.mxu0 %v688
        %708 = vmatprep.subr.bf16.mxu0 0
        %709 = vmatpush1.bf16.msra.mxu0 %v689
        %710 = vmatprep.subr.bf16.mxu0 0
        %711 = vmatpush1.bf16.msra.mxu0 %v690
        %712 = vmatprep.subr.bf16.mxu0 0
        %713 = vmatpush1.bf16.msra.mxu0 %v691
        %714 = vmatprep.subr.bf16.mxu0 0
        %715 = vmatpush1.bf16.msra.mxu0 %v692
        %716 = vmatprep.subr.bf16.mxu0 0
        %717 = vmatpush1.bf16.msra.mxu0 %v693
        %718 = vmatprep.subr.bf16.mxu0 0
        %719 = vmatpush1.bf16.msra.mxu0 0
        %720 = vmatprep.subr.bf16.mxu0 0
        %721 = vmatpush1.bf16.msra.mxu0 0
        %722 = vmatprep.subr.bf16.mxu0 0
        %723 = vmatpush1.bf16.msra.mxu0 0
        %724 = vmatprep.subr.bf16.mxu0 0
        %725 = vmatpush1.bf16.msra.mxu0 0
        %726 = vmatprep.subr.bf16.mxu0 0
        %727 = vmatpush1.bf16.msra.mxu0 0
        %728 = vmatprep.subr.bf16.mxu0 0
        %729 = vmatpush1.bf16.msra.mxu0 0
        %730 = vmatprep.subr.bf16.mxu0 0
        %731 = vmatpush1.bf16.msra.mxu0 0
        %732 = vmatprep.subr.bf16.mxu0 0
        %733 = vmatpush1.bf16.msra.mxu0 0
        %734 = vmatprep.mubr.bf16.mxu0 0
        %735 = vmatmul.mubr.bf16.gmra.mrb[0].mxu0 %v576
        %v736 = vpop.f32.mrb[0].mxu0
        %v737 = vadd.f32 %v652, %v736
        %v738 = vpop.f32.mrb[0].mxu0
        %v739 = vpop.f32.mrb[0].mxu0
        %v740 = vadd.f32 %v652, %v739
        %v741 = vpop.f32.mrb[0].mxu0
        %742 = vdwg.mxu0
        %v743 = vmul.f32 %v737, 0.25
        %v744 = vmul.f32 %v740, 0.25
        %v745 = vld [vmem:[#allocation13] sm:$0xff]
        %v746 = vld [vmem:[#allocation13 + $0x8] sm:$0xff]
        %v747 = vld [vmem:[#allocation13 + $0x10] sm:$0xff]
        %v748 = vld [vmem:[#allocation13 + $0x18] sm:$0xff]
        %v749 = vld [vmem:[#allocation13 + $0x20] sm:$0xff]
        %v750 = vld [vmem:[#allocation13 + $0x28] sm:$0xff]
        %v751 = vld [vmem:[#allocation13 + $0x30] sm:$0xff]
        %v752 = vld [vmem:[#allocation13 + $0x38] sm:$0xff]
        %v753 = vld [vmem:[#allocation13 + $0x40] sm:$0xff]
        %v754 = vld [vmem:[#allocation13 + $0x48] sm:$0xff]
        %v755 = vld [vmem:[#allocation13 + $0x50] sm:$0xff]
        %v756 = vld [vmem:[#allocation13 + $0x58] sm:$0xff]
        %v757 = vld [vmem:[#allocation13 + $0x60] sm:$0xff]
        %v758 = vld [vmem:[#allocation13 + $0x68] sm:$0xff]
        %v759 = vld [vmem:[#allocation13 + $0x70] sm:$0xff]
        %v760 = vld [vmem:[#allocation13 + $0x78] sm:$0xff]
        %v761 = vld [vmem:[#allocation14] sm:$0x3]
        %v763 = vlaneseq
        %v764 = vshrl.u32 %v763, 7
        %v765 = vsub.s32 0, %v764
        %v766 = vrot.slane %v761, %v765
        %v767 = vlaneseq
        %v768 = vshrl.u32 %v767, 7
        %v769 = vsub.s32 1, %v768
        %v770 = vrot.slane %v761, %v769
        %v789 = vunpack.c.l.b16 %v745
        %v790 = vunpack.c.h.b16 %v745
        %v791 = vunpack.c.l.b16 %v746
        %v792 = vunpack.c.h.b16 %v746
        %v793 = vunpack.c.l.b16 %v747
        %v794 = vunpack.c.h.b16 %v747
        %v795 = vunpack.c.l.b16 %v748
        %v796 = vunpack.c.h.b16 %v748
        %v797 = vunpack.c.l.b16 %v749
        %v798 = vunpack.c.h.b16 %v749
        %v799 = vunpack.c.l.b16 %v750
        %v800 = vunpack.c.h.b16 %v750
        %v801 = vunpack.c.l.b16 %v751
        %v802 = vunpack.c.h.b16 %v751
        %v803 = vunpack.c.l.b16 %v752
        %v804 = vunpack.c.h.b16 %v752
        %v805 = vunpack.c.l.b16 %v753
        %v806 = vunpack.c.h.b16 %v753
        %v807 = vunpack.c.l.b16 %v754
        %v808 = vunpack.c.h.b16 %v754
        %v809 = vunpack.c.l.b16 %v755
        %v810 = vunpack.c.h.b16 %v755
        %v811 = vunpack.c.l.b16 %v756
        %v812 = vunpack.c.h.b16 %v756
        %v813 = vunpack.c.l.b16 %v757
        %v814 = vunpack.c.h.b16 %v757
        %v815 = vunpack.c.l.b16 %v758
        %v816 = vunpack.c.h.b16 %v758
        %v817 = vunpack.c.l.b16 %v759
        %v818 = vunpack.c.h.b16 %v759
        %v819 = vunpack.c.l.b16 %v760
        %v820 = vunpack.c.h.b16 %v760
        %v821 = vpack.c.b16 %v791, %v789
        %v822 = vpack.c.b16 %v792, %v790
        %v823 = vpack.c.b16 %v795, %v793
        %v824 = vpack.c.b16 %v796, %v794
        %v825 = vpack.c.b16 %v799, %v797
        %v826 = vpack.c.b16 %v800, %v798
        %v827 = vpack.c.b16 %v803, %v801
        %v828 = vpack.c.b16 %v804, %v802
        %v829 = vpack.c.b16 %v807, %v805
        %v830 = vpack.c.b16 %v808, %v806
        %v831 = vpack.c.b16 %v811, %v809
        %v832 = vpack.c.b16 %v812, %v810
        %v833 = vpack.c.b16 %v815, %v813
        %v834 = vpack.c.b16 %v816, %v814
        %v835 = vpack.c.b16 %v819, %v817
        %v836 = vpack.c.b16 %v820, %v818
        %853 = vmatprep.subr.bf16.mxu0 %v822
        %854 = vmatpush1.bf16.msra.mxu0 %v821
        %855 = vmatprep.subr.bf16.mxu0 %v824
        %856 = vmatpush1.bf16.msra.mxu0 %v823
        %857 = vmatprep.subr.bf16.mxu0 %v826
        %858 = vmatpush1.bf16.msra.mxu0 %v825
        %859 = vmatprep.subr.bf16.mxu0 %v828
        %860 = vmatpush1.bf16.msra.mxu0 %v827
        %861 = vmatprep.subr.bf16.mxu0 %v830
        %862 = vmatpush1.bf16.msra.mxu0 %v829
        %863 = vmatprep.subr.bf16.mxu0 %v832
        %864 = vmatpush1.bf16.msra.mxu0 %v831
        %865 = vmatprep.subr.bf16.mxu0 %v834
        %866 = vmatpush1.bf16.msra.mxu0 %v833
        %867 = vmatprep.subr.bf16.mxu0 %v836
        %868 = vmatpush1.bf16.msra.mxu0 %v835
        %869 = vmatprep.subr.bf16.mxu0 0
        %870 = vmatpush1.bf16.msra.mxu0 0
        %871 = vmatprep.subr.bf16.mxu0 0
        %872 = vmatpush1.bf16.msra.mxu0 0
        %873 = vmatprep.subr.bf16.mxu0 0
        %874 = vmatpush1.bf16.msra.mxu0 0
        %875 = vmatprep.subr.bf16.mxu0 0
        %876 = vmatpush1.bf16.msra.mxu0 0
        %877 = vmatprep.subr.bf16.mxu0 0
        %878 = vmatpush1.bf16.msra.mxu0 0
        %879 = vmatprep.subr.bf16.mxu0 0
        %880 = vmatpush1.bf16.msra.mxu0 0
        %881 = vmatprep.subr.bf16.mxu0 0
        %882 = vmatpush1.bf16.msra.mxu0 0
        %883 = vmatprep.subr.bf16.mxu0 0
        %884 = vmatpush1.bf16.msra.mxu0 0
        %885 = vmatprep.mubr.bf16.mxu0 0
        %886 = vmatmul.mubr.bf16.gmra.mrb[0].mxu0 %v629
        %v887 = vpop.f32.mrb[0].mxu0
        %v888 = vadd.f32 %v766, %v887
        %v889 = vpop.f32.mrb[0].mxu0
        %v890 = vadd.f32 %v770, %v889
        %v891 = vpop.f32.mrb[0].mxu0
        %v892 = vadd.f32 %v766, %v891
        %v893 = vpop.f32.mrb[0].mxu0
        %v894 = vadd.f32 %v770, %v893
        %895 = vmatprep.mubr.bf16.mxu0 0
        %896 = vmatmul.mubr.bf16.gmra.mrb[0].mxu0 %v630
        %v897 = vpop.f32.mrb[0].mxu0
        %v898 = vadd.f32 %v766, %v897
        %v899 = vpop.f32.mrb[0].mxu0
        %v900 = vadd.f32 %v770, %v899
        %v901 = vpop.f32.mrb[0].mxu0
        %v902 = vadd.f32 %v766, %v901
        %v903 = vpop.f32.mrb[0].mxu0
        %v904 = vadd.f32 %v770, %v903
        %905 = vdwg.mxu0
        %907 = vrot.lane.b32.xlu0 %v743, 112
        %v908 = vpop.permute.xlu0 %907
        %910 = vrot.lane.b32.xlu0 %v743, 96
        %v911 = vpop.permute.xlu0 %910
        %913 = vrot.lane.b32.xlu0 %v743, 80
        %v914 = vpop.permute.xlu0 %913
        %916 = vrot.lane.b32.xlu0 %v743, 64
        %v917 = vpop.permute.xlu0 %916
        %919 = vrot.lane.b32.xlu0 %v743, 48
        %v920 = vpop.permute.xlu0 %919
        %922 = vrot.lane.b32.xlu0 %v743, 32
        %v923 = vpop.permute.xlu0 %922
        %925 = vrot.lane.b32.xlu0 %v743, 16
        %v926 = vpop.permute.xlu0 %925
        %v928 = vpack.c.bf16 %v743, %v743
        %v929 = vpack.c.bf16 %v908, %v908
        %v930 = vpack.c.bf16 %v911, %v911
        %v931 = vpack.c.bf16 %v914, %v914
        %v932 = vpack.c.bf16 %v917, %v917
        %v933 = vpack.c.bf16 %v920, %v920
        %v934 = vpack.c.bf16 %v923, %v923
        %v935 = vpack.c.bf16 %v926, %v926
        %938 = vrot.lane.b32.xlu0 %v888, 112
        %v939 = vpop.permute.xlu0 %938
        %940 = vrot.lane.b32.xlu0 %v892, 112
        %v941 = vpop.permute.xlu0 %940
        %944 = vrot.lane.b32.xlu0 %v888, 96
        %v945 = vpop.permute.xlu0 %944
        %946 = vrot.lane.b32.xlu0 %v892, 96
        %v947 = vpop.permute.xlu0 %946
        %950 = vrot.lane.b32.xlu0 %v888, 80
        %v951 = vpop.permute.xlu0 %950
        %952 = vrot.lane.b32.xlu0 %v892, 80
        %v953 = vpop.permute.xlu0 %952
        %956 = vrot.lane.b32.xlu0 %v888, 64
        %v957 = vpop.permute.xlu0 %956
        %958 = vrot.lane.b32.xlu0 %v892, 64
        %v959 = vpop.permute.xlu0 %958
        %962 = vrot.lane.b32.xlu0 %v888, 48
        %v963 = vpop.permute.xlu0 %962
        %964 = vrot.lane.b32.xlu0 %v892, 48
        %v965 = vpop.permute.xlu0 %964
        %968 = vrot.lane.b32.xlu0 %v888, 32
        %v969 = vpop.permute.xlu0 %968
        %970 = vrot.lane.b32.xlu0 %v892, 32
        %v971 = vpop.permute.xlu0 %970
        %974 = vrot.lane.b32.xlu0 %v888, 16
        %v975 = vpop.permute.xlu0 %974
        %976 = vrot.lane.b32.xlu0 %v892, 16
        %v977 = vpop.permute.xlu0 %976
        %v980 = vpack.c.bf16 %v892, %v888
        %v981 = vpack.c.bf16 %v941, %v939
        %v982 = vpack.c.bf16 %v947, %v945
        %v983 = vpack.c.bf16 %v953, %v951
        %v984 = vpack.c.bf16 %v959, %v957
        %v985 = vpack.c.bf16 %v965, %v963
        %v986 = vpack.c.bf16 %v971, %v969
        %v987 = vpack.c.bf16 %v977, %v975
        %990 = vrot.lane.b32.xlu0 %v890, 112
        %v991 = vpop.permute.xlu0 %990
        %992 = vrot.lane.b32.xlu0 %v894, 112
        %v993 = vpop.permute.xlu0 %992
        %996 = vrot.lane.b32.xlu0 %v890, 96
        %v997 = vpop.permute.xlu0 %996
        %998 = vrot.lane.b32.xlu0 %v894, 96
        %v999 = vpop.permute.xlu0 %998
        %1002 = vrot.lane.b32.xlu0 %v890, 80
        %v1003 = vpop.permute.xlu0 %1002
        %1004 = vrot.lane.b32.xlu0 %v894, 80
        %v1005 = vpop.permute.xlu0 %1004
        %1008 = vrot.lane.b32.xlu0 %v890, 64
        %v1009 = vpop.permute.xlu0 %1008
        %1010 = vrot.lane.b32.xlu0 %v894, 64
        %v1011 = vpop.permute.xlu0 %1010
        %1014 = vrot.lane.b32.xlu0 %v890, 48
        %v1015 = vpop.permute.xlu0 %1014
        %1016 = vrot.lane.b32.xlu0 %v894, 48
        %v1017 = vpop.permute.xlu0 %1016
        %1020 = vrot.lane.b32.xlu0 %v890, 32
        %v1021 = vpop.permute.xlu0 %1020
        %1022 = vrot.lane.b32.xlu0 %v894, 32
        %v1023 = vpop.permute.xlu0 %1022
        %1026 = vrot.lane.b32.xlu0 %v890, 16
        %v1027 = vpop.permute.xlu0 %1026
        %1028 = vrot.lane.b32.xlu0 %v894, 16
        %v1029 = vpop.permute.xlu0 %1028
        %v1032 = vpack.c.bf16 %v894, %v890
        %v1033 = vpack.c.bf16 %v993, %v991
        %v1034 = vpack.c.bf16 %v999, %v997
        %v1035 = vpack.c.bf16 %v1005, %v1003
        %v1036 = vpack.c.bf16 %v1011, %v1009
        %v1037 = vpack.c.bf16 %v1017, %v1015
        %v1038 = vpack.c.bf16 %v1023, %v1021
        %v1039 = vpack.c.bf16 %v1029, %v1027
        %vm1040 = vcmask 130048
        %v1042 = vsel %vm1040, %v928, 0
        %v1045 = vsel %vm1040, %v980, 0
        %1047 = vmatprep.subr.bf16.mxu0 0
        %1048 = vmatpush1.bf16.xpose.msra.mxu0 %v1045
        %1049 = vmatprep.subr.bf16.mxu0 0
        %1050 = vmatpush1.bf16.xpose.msra.mxu0 0
        %1051 = vmatprep.subr.bf16.mxu0 0
        %1052 = vmatpush1.bf16.xpose.msra.mxu0 0
        %1053 = vmatprep.subr.bf16.mxu0 0
        %1054 = vmatpush1.bf16.xpose.msra.mxu0 0
        %1055 = vmatprep.subr.bf16.mxu0 0
        %1056 = vmatpush1.bf16.xpose.msra.mxu0 0
        %1057 = vmatprep.subr.bf16.mxu0 0
        %1058 = vmatpush1.bf16.xpose.msra.mxu0 0
        %1059 = vmatprep.subr.bf16.mxu0 0
        %1060 = vmatpush1.bf16.xpose.msra.mxu0 0
        %1061 = vmatprep.subr.bf16.mxu0 0
        %1062 = vmatpush1.bf16.xpose.msra.mxu0 0
        %1063 = vmatprep.subr.bf16.mxu0 0
        %1064 = vmatpush1.bf16.xpose.msra.mxu0 0
        %1065 = vmatprep.subr.bf16.mxu0 0
        %1066 = vmatpush1.bf16.xpose.msra.mxu0 0
        %1067 = vmatprep.subr.bf16.mxu0 0
        %1068 = vmatpush1.bf16.xpose.msra.mxu0 0
        %1069 = vmatprep.subr.bf16.mxu0 0
        %1070 = vmatpush1.bf16.xpose.msra.mxu0 0
        %1071 = vmatprep.subr.bf16.mxu0 0
        %1072 = vmatpush1.bf16.xpose.msra.mxu0 0
        %1073 = vmatprep.subr.bf16.mxu0 0
        %1074 = vmatpush1.bf16.xpose.msra.mxu0 0
        %1075 = vmatprep.subr.bf16.mxu0 0
        %1076 = vmatpush1.bf16.xpose.msra.mxu0 0
        %1077 = vmatprep.subr.bf16.mxu0 0
        %1078 = vmatpush1.bf16.xpose.msra.mxu0 0
        %1079 = vmatprep.mubr.bf16.mxu0 0
        %1080 = vmatmul.mubr.bf16.gmra.mrb[0].mxu0 %v1042
        %v1081 = vpop.f32.mrb[0].mxu0
        %v1082 = vadd.f32 0.0, %v1081
        %v1083 = vpop.f32.mrb[0].mxu0
        %v1084 = vpop.f32.mrb[0].mxu0
        %v1085 = vpop.f32.mrb[0].mxu0
        %1086 = vdwg.mxu0
        %v1088 = vsel %vm1040, %v929, 0
        %v1091 = vsel %vm1040, %v981, 0
        %1093 = vmatprep.subr.bf16.mxu0 0
        %1094 = vmatpush1.bf16.xpose.msra.mxu0 %v1091
        %1095 = vmatprep.subr.bf16.mxu0 0
        %1096 = vmatpush1.bf16.xpose.msra.mxu0 0
        %1097 = vmatprep.subr.bf16.mxu0 0
        %1098 = vmatpush1.bf16.xpose.msra.mxu0 0
        %1099 = vmatprep.subr.bf16.mxu0 0
        %1100 = vmatpush1.bf16.xpose.msra.mxu0 0
        %1101 = vmatprep.subr.bf16.mxu0 0
        %1102 = vmatpush1.bf16.xpose.msra.mxu0 0
        %1103 = vmatprep.subr.bf16.mxu0 0
        %1104 = vmatpush1.bf16.xpose.msra.mxu0 0
        %1105 = vmatprep.subr.bf16.mxu0 0
        %1106 = vmatpush1.bf16.xpose.msra.mxu0 0
        %1107 = vmatprep.subr.bf16.mxu0 0
        %1108 = vmatpush1.bf16.xpose.msra.mxu0 0
        %1109 = vmatprep.subr.bf16.mxu0 0
        %1110 = vmatpush1.bf16.xpose.msra.mxu0 0
        %1111 = vmatprep.subr.bf16.mxu0 0
        %1112 = vmatpush1.bf16.xpose.msra.mxu0 0
        %1113 = vmatprep.subr.bf16.mxu0 0
        %1114 = vmatpush1.bf16.xpose.msra.mxu0 0
        %1115 = vmatprep.subr.bf16.mxu0 0
        %1116 = vmatpush1.bf16.xpose.msra.mxu0 0
        %1117 = vmatprep.subr.bf16.mxu0 0
        %1118 = vmatpush1.bf16.xpose.msra.mxu0 0
        %1119 = vmatprep.subr.bf16.mxu0 0
        %1120 = vmatpush1.bf16.xpose.msra.mxu0 0
        %1121 = vmatprep.subr.bf16.mxu0 0
        %1122 = vmatpush1.bf16.xpose.msra.mxu0 0
        %1123 = vmatprep.subr.bf16.mxu0 0
        %1124 = vmatpush1.bf16.xpose.msra.mxu0 0
        %1125 = vmatprep.mubr.bf16.mxu0 0
        %1126 = vmatmul.mubr.bf16.gmra.mrb[0].mxu0 %v1088
        %v1127 = vpop.f32.mrb[0].mxu0
        %v1128 = vadd.f32 0.0, %v1127
        %v1129 = vpop.f32.mrb[0].mxu0
        %v1130 = vpop.f32.mrb[0].mxu0
        %v1131 = vpop.f32.mrb[0].mxu0
        %1132 = vdwg.mxu0
        %v1134 = vsel %vm1040, %v930, 0
        %v1137 = vsel %vm1040, %v982, 0
        %1139 = vmatprep.subr.bf16.mxu0 0
        %1140 = vmatpush1.bf16.xpose.msra.mxu0 %v1137
        %1141 = vmatprep.subr.bf16.mxu0 0
        %1142 = vmatpush1.bf16.xpose.msra.mxu0 0
        %1143 = vmatprep.subr.bf16.mxu0 0
        %1144 = vmatpush1.bf16.xpose.msra.mxu0 0
        %1145 = vmatprep.subr.bf16.mxu0 0
        %1146 = vmatpush1.bf16.xpose.msra.mxu0 0
        %1147 = vmatprep.subr.bf16.mxu0 0
        %1148 = vmatpush1.bf16.xpose.msra.mxu0 0
        %1149 = vmatprep.subr.bf16.mxu0 0
        %1150 = vmatpush1.bf16.xpose.msra.mxu0 0
        %1151 = vmatprep.subr.bf16.mxu0 0
        %1152 = vmatpush1.bf16.xpose.msra.mxu0 0
        %1153 = vmatprep.subr.bf16.mxu0 0
        %1154 = vmatpush1.bf16.xpose.msra.mxu0 0
        %1155 = vmatprep.subr.bf16.mxu0 0
        %1156 = vmatpush1.bf16.xpose.msra.mxu0 0
        %1157 = vmatprep.subr.bf16.mxu0 0
        %1158 = vmatpush1.bf16.xpose.msra.mxu0 0
        %1159 = vmatprep.subr.bf16.mxu0 0
        %1160 = vmatpush1.bf16.xpose.msra.mxu0 0
        %1161 = vmatprep.subr.bf16.mxu0 0
        %1162 = vmatpush1.bf16.xpose.msra.mxu0 0
        %1163 = vmatprep.subr.bf16.mxu0 0
        %1164 = vmatpush1.bf16.xpose.msra.mxu0 0
        %1165 = vmatprep.subr.bf16.mxu0 0
        %1166 = vmatpush1.bf16.xpose.msra.mxu0 0
        %1167 = vmatprep.subr.bf16.mxu0 0
        %1168 = vmatpush1.bf16.xpose.msra.mxu0 0
        %1169 = vmatprep.subr.bf16.mxu0 0
        %1170 = vmatpush1.bf16.xpose.msra.mxu0 0
        %1171 = vmatprep.mubr.bf16.mxu0 0
        %1172 = vmatmul.mubr.bf16.gmra.mrb[0].mxu0 %v1134
        %v1173 = vpop.f32.mrb[0].mxu0
        %v1174 = vadd.f32 0.0, %v1173
        %v1175 = vpop.f32.mrb[0].mxu0
        %v1176 = vpop.f32.mrb[0].mxu0
        %v1177 = vpop.f32.mrb[0].mxu0
        %1178 = vdwg.mxu0
        %v1180 = vsel %vm1040, %v931, 0
        %v1183 = vsel %vm1040, %v983, 0
        %1185 = vmatprep.subr.bf16.mxu0 0
        %1186 = vmatpush1.bf16.xpose.msra.mxu0 %v1183
        %1187 = vmatprep.subr.bf16.mxu0 0
        %1188 = vmatpush1.bf16.xpose.msra.mxu0 0
        %1189 = vmatprep.subr.bf16.mxu0 0
        %1190 = vmatpush1.bf16.xpose.msra.mxu0 0
        %1191 = vmatprep.subr.bf16.mxu0 0
        %1192 = vmatpush1.bf16.xpose.msra.mxu0 0
        %1193 = vmatprep.subr.bf16.mxu0 0
        %1194 = vmatpush1.bf16.xpose.msra.mxu0 0
        %1195 = vmatprep.subr.bf16.mxu0 0
        %1196 = vmatpush1.bf16.xpose.msra.mxu0 0
        %1197 = vmatprep.subr.bf16.mxu0 0
        %1198 = vmatpush1.bf16.xpose.msra.mxu0 0
        %1199 = vmatprep.subr.bf16.mxu0 0
        %1200 = vmatpush1.bf16.xpose.msra.mxu0 0
        %1201 = vmatprep.subr.bf16.mxu0 0
        %1202 = vmatpush1.bf16.xpose.msra.mxu0 0
        %1203 = vmatprep.subr.bf16.mxu0 0
        %1204 = vmatpush1.bf16.xpose.msra.mxu0 0
        %1205 = vmatprep.subr.bf16.mxu0 0
        %1206 = vmatpush1.bf16.xpose.msra.mxu0 0
        %1207 = vmatprep.subr.bf16.mxu0 0
        %1208 = vmatpush1.bf16.xpose.msra.mxu0 0
        %1209 = vmatprep.subr.bf16.mxu0 0
        %1210 = vmatpush1.bf16.xpose.msra.mxu0 0
        %1211 = vmatprep.subr.bf16.mxu0 0
        %1212 = vmatpush1.bf16.xpose.msra.mxu0 0
        %1213 = vmatprep.subr.bf16.mxu0 0
        %1214 = vmatpush1.bf16.xpose.msra.mxu0 0
        %1215 = vmatprep.subr.bf16.mxu0 0
        %1216 = vmatpush1.bf16.xpose.msra.mxu0 0
        %1217 = vmatprep.mubr.bf16.mxu0 0
        %1218 = vmatmul.mubr.bf16.gmra.mrb[0].mxu0 %v1180
        %v1219 = vpop.f32.mrb[0].mxu0
        %v1220 = vadd.f32 0.0, %v1219
        %v1221 = vpop.f32.mrb[0].mxu0
        %v1222 = vpop.f32.mrb[0].mxu0
        %v1223 = vpop.f32.mrb[0].mxu0
        %1224 = vdwg.mxu0
        %v1226 = vsel %vm1040, %v932, 0
        %v1229 = vsel %vm1040, %v984, 0
        %1231 = vmatprep.subr.bf16.mxu0 0
        %1232 = vmatpush1.bf16.xpose.msra.mxu0 %v1229
        %1233 = vmatprep.subr.bf16.mxu0 0
        %1234 = vmatpush1.bf16.xpose.msra.mxu0 0
        %1235 = vmatprep.subr.bf16.mxu0 0
        %1236 = vmatpush1.bf16.xpose.msra.mxu0 0
        %1237 = vmatprep.subr.bf16.mxu0 0
        %1238 = vmatpush1.bf16.xpose.msra.mxu0 0
        %1239 = vmatprep.subr.bf16.mxu0 0
        %1240 = vmatpush1.bf16.xpose.msra.mxu0 0
        %1241 = vmatprep.subr.bf16.mxu0 0
        %1242 = vmatpush1.bf16.xpose.msra.mxu0 0
        %1243 = vmatprep.subr.bf16.mxu0 0
        %1244 = vmatpush1.bf16.xpose.msra.mxu0 0
        %1245 = vmatprep.subr.bf16.mxu0 0
        %1246 = vmatpush1.bf16.xpose.msra.mxu0 0
        %1247 = vmatprep.subr.bf16.mxu0 0
        %1248 = vmatpush1.bf16.xpose.msra.mxu0 0
        %1249 = vmatprep.subr.bf16.mxu0 0
        %1250 = vmatpush1.bf16.xpose.msra.mxu0 0
        %1251 = vmatprep.subr.bf16.mxu0 0
        %1252 = vmatpush1.bf16.xpose.msra.mxu0 0
        %1253 = vmatprep.subr.bf16.mxu0 0
        %1254 = vmatpush1.bf16.xpose.msra.mxu0 0
        %1255 = vmatprep.subr.bf16.mxu0 0
        %1256 = vmatpush1.bf16.xpose.msra.mxu0 0
        %1257 = vmatprep.subr.bf16.mxu0 0
        %1258 = vmatpush1.bf16.xpose.msra.mxu0 0
        %1259 = vmatprep.subr.bf16.mxu0 0
        %1260 = vmatpush1.bf16.xpose.msra.mxu0 0
        %1261 = vmatprep.subr.bf16.mxu0 0
        %1262 = vmatpush1.bf16.xpose.msra.mxu0 0
        %1263 = vmatprep.mubr.bf16.mxu0 0
        %1264 = vmatmul.mubr.bf16.gmra.mrb[0].mxu0 %v1226
        %v1265 = vpop.f32.mrb[0].mxu0
        %v1266 = vadd.f32 0.0, %v1265
        %v1267 = vpop.f32.mrb[0].mxu0
        %v1268 = vpop.f32.mrb[0].mxu0
        %v1269 = vpop.f32.mrb[0].mxu0
        %1270 = vdwg.mxu0
        %v1272 = vsel %vm1040, %v933, 0
        %v1275 = vsel %vm1040, %v985, 0
        %1277 = vmatprep.subr.bf16.mxu0 0
        %1278 = vmatpush1.bf16.xpose.msra.mxu0 %v1275
        %1279 = vmatprep.subr.bf16.mxu0 0
        %1280 = vmatpush1.bf16.xpose.msra.mxu0 0
        %1281 = vmatprep.subr.bf16.mxu0 0
        %1282 = vmatpush1.bf16.xpose.msra.mxu0 0
        %1283 = vmatprep.subr.bf16.mxu0 0
        %1284 = vmatpush1.bf16.xpose.msra.mxu0 0
        %1285 = vmatprep.subr.bf16.mxu0 0
        %1286 = vmatpush1.bf16.xpose.msra.mxu0 0
        %1287 = vmatprep.subr.bf16.mxu0 0
        %1288 = vmatpush1.bf16.xpose.msra.mxu0 0
        %1289 = vmatprep.subr.bf16.mxu0 0
        %1290 = vmatpush1.bf16.xpose.msra.mxu0 0
        %1291 = vmatprep.subr.bf16.mxu0 0
        %1292 = vmatpush1.bf16.xpose.msra.mxu0 0
        %1293 = vmatprep.subr.bf16.mxu0 0
        %1294 = vmatpush1.bf16.xpose.msra.mxu0 0
        %1295 = vmatprep.subr.bf16.mxu0 0
        %1296 = vmatpush1.bf16.xpose.msra.mxu0 0
        %1297 = vmatprep.subr.bf16.mxu0 0
        %1298 = vmatpush1.bf16.xpose.msra.mxu0 0
        %1299 = vmatprep.subr.bf16.mxu0 0
        %1300 = vmatpush1.bf16.xpose.msra.mxu0 0
        %1301 = vmatprep.subr.bf16.mxu0 0
        %1302 = vmatpush1.bf16.xpose.msra.mxu0 0
        %1303 = vmatprep.subr.bf16.mxu0 0
        %1304 = vmatpush1.bf16.xpose.msra.mxu0 0
        %1305 = vmatprep.subr.bf16.mxu0 0
        %1306 = vmatpush1.bf16.xpose.msra.mxu0 0
        %1307 = vmatprep.subr.bf16.mxu0 0
        %1308 = vmatpush1.bf16.xpose.msra.mxu0 0
        %1309 = vmatprep.mubr.bf16.mxu0 0
        %1310 = vmatmul.mubr.bf16.gmra.mrb[0].mxu0 %v1272
        %v1311 = vpop.f32.mrb[0].mxu0
        %v1312 = vadd.f32 0.0, %v1311
        %v1313 = vpop.f32.mrb[0].mxu0
        %v1314 = vpop.f32.mrb[0].mxu0
        %v1315 = vpop.f32.mrb[0].mxu0
        %1316 = vdwg.mxu0
        %v1318 = vsel %vm1040, %v934, 0
        %v1321 = vsel %vm1040, %v986, 0
        %1323 = vmatprep.subr.bf16.mxu0 0
        %1324 = vmatpush1.bf16.xpose.msra.mxu0 %v1321
        %1325 = vmatprep.subr.bf16.mxu0 0
        %1326 = vmatpush1.bf16.xpose.msra.mxu0 0
        %1327 = vmatprep.subr.bf16.mxu0 0
        %1328 = vmatpush1.bf16.xpose.msra.mxu0 0
        %1329 = vmatprep.subr.bf16.mxu0 0
        %1330 = vmatpush1.bf16.xpose.msra.mxu0 0
        %1331 = vmatprep.subr.bf16.mxu0 0
        %1332 = vmatpush1.bf16.xpose.msra.mxu0 0
        %1333 = vmatprep.subr.bf16.mxu0 0
        %1334 = vmatpush1.bf16.xpose.msra.mxu0 0
        %1335 = vmatprep.subr.bf16.mxu0 0
        %1336 = vmatpush1.bf16.xpose.msra.mxu0 0
        %1337 = vmatprep.subr.bf16.mxu0 0
        %1338 = vmatpush1.bf16.xpose.msra.mxu0 0
        %1339 = vmatprep.subr.bf16.mxu0 0
        %1340 = vmatpush1.bf16.xpose.msra.mxu0 0
        %1341 = vmatprep.subr.bf16.mxu0 0
        %1342 = vmatpush1.bf16.xpose.msra.mxu0 0
        %1343 = vmatprep.subr.bf16.mxu0 0
        %1344 = vmatpush1.bf16.xpose.msra.mxu0 0
        %1345 = vmatprep.subr.bf16.mxu0 0
        %1346 = vmatpush1.bf16.xpose.msra.mxu0 0
        %1347 = vmatprep.subr.bf16.mxu0 0
        %1348 = vmatpush1.bf16.xpose.msra.mxu0 0
        %1349 = vmatprep.subr.bf16.mxu0 0
        %1350 = vmatpush1.bf16.xpose.msra.mxu0 0
        %1351 = vmatprep.subr.bf16.mxu0 0
        %1352 = vmatpush1.bf16.xpose.msra.mxu0 0
        %1353 = vmatprep.subr.bf16.mxu0 0
        %1354 = vmatpush1.bf16.xpose.msra.mxu0 0
        %1355 = vmatprep.mubr.bf16.mxu0 0
        %1356 = vmatmul.mubr.bf16.gmra.mrb[0].mxu0 %v1318
        %v1357 = vpop.f32.mrb[0].mxu0
        %v1358 = vadd.f32 0.0, %v1357
        %v1359 = vpop.f32.mrb[0].mxu0
        %v1360 = vpop.f32.mrb[0].mxu0
        %v1361 = vpop.f32.mrb[0].mxu0
        %1362 = vdwg.mxu0
        %v1364 = vsel %vm1040, %v935, 0
        %v1367 = vsel %vm1040, %v987, 0
        %1369 = vmatprep.subr.bf16.mxu0 0
        %1370 = vmatpush1.bf16.xpose.msra.mxu0 %v1367
        %1371 = vmatprep.subr.bf16.mxu0 0
        %1372 = vmatpush1.bf16.xpose.msra.mxu0 0
        %1373 = vmatprep.subr.bf16.mxu0 0
        %1374 = vmatpush1.bf16.xpose.msra.mxu0 0
        %1375 = vmatprep.subr.bf16.mxu0 0
        %1376 = vmatpush1.bf16.xpose.msra.mxu0 0
        %1377 = vmatprep.subr.bf16.mxu0 0
        %1378 = vmatpush1.bf16.xpose.msra.mxu0 0
        %1379 = vmatprep.subr.bf16.mxu0 0
        %1380 = vmatpush1.bf16.xpose.msra.mxu0 0
        %1381 = vmatprep.subr.bf16.mxu0 0
        %1382 = vmatpush1.bf16.xpose.msra.mxu0 0
        %1383 = vmatprep.subr.bf16.mxu0 0
        %1384 = vmatpush1.bf16.xpose.msra.mxu0 0
        %1385 = vmatprep.subr.bf16.mxu0 0
        %1386 = vmatpush1.bf16.xpose.msra.mxu0 0
        %1387 = vmatprep.subr.bf16.mxu0 0
        %1388 = vmatpush1.bf16.xpose.msra.mxu0 0
        %1389 = vmatprep.subr.bf16.mxu0 0
        %1390 = vmatpush1.bf16.xpose.msra.mxu0 0
        %1391 = vmatprep.subr.bf16.mxu0 0
        %1392 = vmatpush1.bf16.xpose.msra.mxu0 0
        %1393 = vmatprep.subr.bf16.mxu0 0
        %1394 = vmatpush1.bf16.xpose.msra.mxu0 0
        %1395 = vmatprep.subr.bf16.mxu0 0
        %1396 = vmatpush1.bf16.xpose.msra.mxu0 0
        %1397 = vmatprep.subr.bf16.mxu0 0
        %1398 = vmatpush1.bf16.xpose.msra.mxu0 0
        %1399 = vmatprep.subr.bf16.mxu0 0
        %1400 = vmatpush1.bf16.xpose.msra.mxu0 0
        %1401 = vmatprep.mubr.bf16.mxu0 0
        %1402 = vmatmul.mubr.bf16.gmra.mrb[0].mxu0 %v1364
        %v1403 = vpop.f32.mrb[0].mxu0
        %v1404 = vadd.f32 0.0, %v1403
        %v1405 = vpop.f32.mrb[0].mxu0
        %v1406 = vpop.f32.mrb[0].mxu0
        %v1407 = vpop.f32.mrb[0].mxu0
        %1408 = vdwg.mxu0
        %v1409 = vsel %vm1040, %v1082, -inf
        %1410 = vmax.xlane.f32.xlu0 %v1409
        %v1411 = vpop.xlane.xlu0 %1410
        %v1412 = vsel %vm1040, %v1128, -inf
        %1413 = vmax.xlane.f32.xlu0 %v1412
        %v1414 = vpop.xlane.xlu0 %1413
        %v1415 = vsel %vm1040, %v1174, -inf
        %1416 = vmax.xlane.f32.xlu0 %v1415
        %v1417 = vpop.xlane.xlu0 %1416
        %v1418 = vsel %vm1040, %v1220, -inf
        %1419 = vmax.xlane.f32.xlu0 %v1418
        %v1420 = vpop.xlane.xlu0 %1419
        %v1421 = vsel %vm1040, %v1266, -inf
        %1422 = vmax.xlane.f32.xlu0 %v1421
        %v1423 = vpop.xlane.xlu0 %1422
        %v1424 = vsel %vm1040, %v1312, -inf
        %1425 = vmax.xlane.f32.xlu0 %v1424
        %v1426 = vpop.xlane.xlu0 %1425
        %v1427 = vsel %vm1040, %v1358, -inf
        %1428 = vmax.xlane.f32.xlu0 %v1427
        %v1429 = vpop.xlane.xlu0 %1428
        %v1430 = vsel %vm1040, %v1404, -inf
        %1431 = vmax.xlane.f32.xlu0 %v1430
        %v1432 = vpop.xlane.xlu0 %1431
        %v1433 = vsub.f32 %v1082, %v1411
        %v1434 = vsub.f32 %v1128, %v1414
        %v1435 = vsub.f32 %v1174, %v1417
        %v1436 = vsub.f32 %v1220, %v1420
        %v1437 = vsub.f32 %v1266, %v1423
        %v1438 = vsub.f32 %v1312, %v1426
        %v1439 = vsub.f32 %v1358, %v1429
        %v1440 = vsub.f32 %v1404, %v1432
        %v1441 = vmul.f32 %v1433, 1.442695
        %v1442 = vpow.pop %v1441
        %v1443 = vmul.f32 %v1434, 1.442695
        %v1444 = vpow.pop %v1443
        %v1445 = vmul.f32 %v1435, 1.442695
        %v1446 = vpow.pop %v1445
        %v1447 = vmul.f32 %v1436, 1.442695
        %v1448 = vpow.pop %v1447
        %v1449 = vmul.f32 %v1437, 1.442695
        %v1450 = vpow.pop %v1449
        %v1451 = vmul.f32 %v1438, 1.442695
        %v1452 = vpow.pop %v1451
        %v1453 = vmul.f32 %v1439, 1.442695
        %v1454 = vpow.pop %v1453
        %v1455 = vmul.f32 %v1440, 1.442695
        %v1456 = vpow.pop %v1455
        %v1457 = vsel %vm1040, %v1442, 0.0
        %1458 = vadd.xlane.f32.xlu0 %v1457
        %v1459 = vpop.xlane.xlu0 %1458
        %v1460 = vsel %vm1040, %v1444, 0.0
        %1461 = vadd.xlane.f32.xlu0 %v1460
        %v1462 = vpop.xlane.xlu0 %1461
        %v1463 = vsel %vm1040, %v1446, 0.0
        %1464 = vadd.xlane.f32.xlu0 %v1463
        %v1465 = vpop.xlane.xlu0 %1464
        %v1466 = vsel %vm1040, %v1448, 0.0
        %1467 = vadd.xlane.f32.xlu0 %v1466
        %v1468 = vpop.xlane.xlu0 %1467
        %v1469 = vsel %vm1040, %v1450, 0.0
        %1470 = vadd.xlane.f32.xlu0 %v1469
        %v1471 = vpop.xlane.xlu0 %1470
        %v1472 = vsel %vm1040, %v1452, 0.0
        %1473 = vadd.xlane.f32.xlu0 %v1472
        %v1474 = vpop.xlane.xlu0 %1473
        %v1475 = vsel %vm1040, %v1454, 0.0
        %1476 = vadd.xlane.f32.xlu0 %v1475
        %v1477 = vpop.xlane.xlu0 %1476
        %v1478 = vsel %vm1040, %v1456, 0.0
        %1479 = vadd.xlane.f32.xlu0 %v1478
        %v1480 = vpop.xlane.xlu0 %1479
        %v1481 = vrcp.pop %v1459
        %v1482 = vrcp.pop %v1462
        %v1483 = vrcp.pop %v1465
        %v1484 = vrcp.pop %v1468
        %v1485 = vrcp.pop %v1471
        %v1486 = vrcp.pop %v1474
        %v1487 = vrcp.pop %v1477
        %v1488 = vrcp.pop %v1480
        %v1489 = vmul.f32 %v1442, %v1481
        %v1490 = vmul.f32 %v1444, %v1482
        %v1491 = vmul.f32 %v1446, %v1483
        %v1492 = vmul.f32 %v1448, %v1484
        %v1493 = vmul.f32 %v1450, %v1485
        %v1494 = vmul.f32 %v1452, %v1486
        %v1495 = vmul.f32 %v1454, %v1487
        %v1496 = vmul.f32 %v1456, %v1488
        %v1497 = vpack.c.bf16 %v1489, %v1489
        %v1498 = vpack.c.bf16 %v1490, %v1490
        %v1499 = vpack.c.bf16 %v1491, %v1491
        %v1500 = vpack.c.bf16 %v1492, %v1492
        %v1501 = vpack.c.bf16 %v1493, %v1493
        %v1502 = vpack.c.bf16 %v1494, %v1494
        %v1503 = vpack.c.bf16 %v1495, %v1495
        %v1504 = vpack.c.bf16 %v1496, %v1496
        %v1506 = vsel %vm1040, %v1497, 0
        %1508 = vmatprep.subr.bf16.mxu0 0
        %1509 = vmatpush1.bf16.msra.mxu0 %v1032
        %1510 = vmatprep.subr.bf16.mxu0 0
        %1511 = vmatpush1.bf16.msra.mxu0 0
        %1512 = vmatprep.subr.bf16.mxu0 0
        %1513 = vmatpush1.bf16.msra.mxu0 0
        %1514 = vmatprep.subr.bf16.mxu0 0
        %1515 = vmatpush1.bf16.msra.mxu0 0
        %1516 = vmatprep.subr.bf16.mxu0 0
        %1517 = vmatpush1.bf16.msra.mxu0 0
        %1518 = vmatprep.subr.bf16.mxu0 0
        %1519 = vmatpush1.bf16.msra.mxu0 0
        %1520 = vmatprep.subr.bf16.mxu0 0
        %1521 = vmatpush1.bf16.msra.mxu0 0
        %1522 = vmatprep.subr.bf16.mxu0 0
        %1523 = vmatpush1.bf16.msra.mxu0 0
        %1524 = vmatprep.subr.bf16.mxu0 0
        %1525 = vmatpush1.bf16.msra.mxu0 0
        %1526 = vmatprep.subr.bf16.mxu0 0
        %1527 = vmatpush1.bf16.msra.mxu0 0
        %1528 = vmatprep.subr.bf16.mxu0 0
        %1529 = vmatpush1.bf16.msra.mxu0 0
        %1530 = vmatprep.subr.bf16.mxu0 0
        %1531 = vmatpush1.bf16.msra.mxu0 0
        %1532 = vmatprep.subr.bf16.mxu0 0
        %1533 = vmatpush1.bf16.msra.mxu0 0
        %1534 = vmatprep.subr.bf16.mxu0 0
        %1535 = vmatpush1.bf16.msra.mxu0 0
        %1536 = vmatprep.subr.bf16.mxu0 0
        %1537 = vmatpush1.bf16.msra.mxu0 0
        %1538 = vmatprep.subr.bf16.mxu0 0
        %1539 = vmatpush1.bf16.msra.mxu0 0
        %1540 = vmatprep.mubr.bf16.mxu0 0
        %1541 = vmatmul.mubr.bf16.gmra.mrb[0].mxu0 %v1506
        %v1542 = vpop.f32.mrb[0].mxu0
        %v1543 = vadd.f32 0.0, %v1542
        %v1544 = vpop.f32.mrb[0].mxu0
        %v1545 = vpop.f32.mrb[0].mxu0
        %v1546 = vpop.f32.mrb[0].mxu0
        %1547 = vdwg.mxu0
        %v1549 = vsel %vm1040, %v1498, 0
        %1551 = vmatprep.subr.bf16.mxu0 0
        %1552 = vmatpush1.bf16.msra.mxu0 %v1033
        %1553 = vmatprep.subr.bf16.mxu0 0
        %1554 = vmatpush1.bf16.msra.mxu0 0
        %1555 = vmatprep.subr.bf16.mxu0 0
        %1556 = vmatpush1.bf16.msra.mxu0 0
        %1557 = vmatprep.subr.bf16.mxu0 0
        %1558 = vmatpush1.bf16.msra.mxu0 0
        %1559 = vmatprep.subr.bf16.mxu0 0
        %1560 = vmatpush1.bf16.msra.mxu0 0
        %1561 = vmatprep.subr.bf16.mxu0 0
        %1562 = vmatpush1.bf16.msra.mxu0 0
        %1563 = vmatprep.subr.bf16.mxu0 0
        %1564 = vmatpush1.bf16.msra.mxu0 0
        %1565 = vmatprep.subr.bf16.mxu0 0
        %1566 = vmatpush1.bf16.msra.mxu0 0
        %1567 = vmatprep.subr.bf16.mxu0 0
        %1568 = vmatpush1.bf16.msra.mxu0 0
        %1569 = vmatprep.subr.bf16.mxu0 0
        %1570 = vmatpush1.bf16.msra.mxu0 0
        %1571 = vmatprep.subr.bf16.mxu0 0
        %1572 = vmatpush1.bf16.msra.mxu0 0
        %1573 = vmatprep.subr.bf16.mxu0 0
        %1574 = vmatpush1.bf16.msra.mxu0 0
        %1575 = vmatprep.subr.bf16.mxu0 0
        %1576 = vmatpush1.bf16.msra.mxu0 0
        %1577 = vmatprep.subr.bf16.mxu0 0
        %1578 = vmatpush1.bf16.msra.mxu0 0
        %1579 = vmatprep.subr.bf16.mxu0 0
        %1580 = vmatpush1.bf16.msra.mxu0 0
        %1581 = vmatprep.subr.bf16.mxu0 0
        %1582 = vmatpush1.bf16.msra.mxu0 0
        %1583 = vmatprep.mubr.bf16.mxu0 0
        %1584 = vmatmul.mubr.bf16.gmra.mrb[0].mxu0 %v1549
        %v1585 = vpop.f32.mrb[0].mxu0
        %v1586 = vadd.f32 0.0, %v1585
        %v1587 = vpop.f32.mrb[0].mxu0
        %v1588 = vpop.f32.mrb[0].mxu0
        %v1589 = vpop.f32.mrb[0].mxu0
        %1590 = vdwg.mxu0
        %v1592 = vsel %vm1040, %v1499, 0
        %1594 = vmatprep.subr.bf16.mxu0 0
        %1595 = vmatpush1.bf16.msra.mxu0 %v1034
        %1596 = vmatprep.subr.bf16.mxu0 0
        %1597 = vmatpush1.bf16.msra.mxu0 0
        %1598 = vmatprep.subr.bf16.mxu0 0
        %1599 = vmatpush1.bf16.msra.mxu0 0
        %1600 = vmatprep.subr.bf16.mxu0 0
        %1601 = vmatpush1.bf16.msra.mxu0 0
        %1602 = vmatprep.subr.bf16.mxu0 0
        %1603 = vmatpush1.bf16.msra.mxu0 0
        %1604 = vmatprep.subr.bf16.mxu0 0
        %1605 = vmatpush1.bf16.msra.mxu0 0
        %1606 = vmatprep.subr.bf16.mxu0 0
        %1607 = vmatpush1.bf16.msra.mxu0 0
        %1608 = vmatprep.subr.bf16.mxu0 0
        %1609 = vmatpush1.bf16.msra.mxu0 0
        %1610 = vmatprep.subr.bf16.mxu0 0
        %1611 = vmatpush1.bf16.msra.mxu0 0
        %1612 = vmatprep.subr.bf16.mxu0 0
        %1613 = vmatpush1.bf16.msra.mxu0 0
        %1614 = vmatprep.subr.bf16.mxu0 0
        %1615 = vmatpush1.bf16.msra.mxu0 0
        %1616 = vmatprep.subr.bf16.mxu0 0
        %1617 = vmatpush1.bf16.msra.mxu0 0
        %1618 = vmatprep.subr.bf16.mxu0 0
        %1619 = vmatpush1.bf16.msra.mxu0 0
        %1620 = vmatprep.subr.bf16.mxu0 0
        %1621 = vmatpush1.bf16.msra.mxu0 0
        %1622 = vmatprep.subr.bf16.mxu0 0
        %1623 = vmatpush1.bf16.msra.mxu0 0
        %1624 = vmatprep.subr.bf16.mxu0 0
        %1625 = vmatpush1.bf16.msra.mxu0 0
        %1626 = vmatprep.mubr.bf16.mxu0 0
        %1627 = vmatmul.mubr.bf16.gmra.mrb[0].mxu0 %v1592
        %v1628 = vpop.f32.mrb[0].mxu0
        %v1629 = vadd.f32 0.0, %v1628
        %v1630 = vpop.f32.mrb[0].mxu0
        %v1631 = vpop.f32.mrb[0].mxu0
        %v1632 = vpop.f32.mrb[0].mxu0
        %1633 = vdwg.mxu0
        %v1635 = vsel %vm1040, %v1500, 0
        %1637 = vmatprep.subr.bf16.mxu0 0
        %1638 = vmatpush1.bf16.msra.mxu0 %v1035
        %1639 = vmatprep.subr.bf16.mxu0 0
        %1640 = vmatpush1.bf16.msra.mxu0 0
        %1641 = vmatprep.subr.bf16.mxu0 0
        %1642 = vmatpush1.bf16.msra.mxu0 0
        %1643 = vmatprep.subr.bf16.mxu0 0
        %1644 = vmatpush1.bf16.msra.mxu0 0
        %1645 = vmatprep.subr.bf16.mxu0 0
        %1646 = vmatpush1.bf16.msra.mxu0 0
        %1647 = vmatprep.subr.bf16.mxu0 0
        %1648 = vmatpush1.bf16.msra.mxu0 0
        %1649 = vmatprep.subr.bf16.mxu0 0
        %1650 = vmatpush1.bf16.msra.mxu0 0
        %1651 = vmatprep.subr.bf16.mxu0 0
        %1652 = vmatpush1.bf16.msra.mxu0 0
        %1653 = vmatprep.subr.bf16.mxu0 0
        %1654 = vmatpush1.bf16.msra.mxu0 0
        %1655 = vmatprep.subr.bf16.mxu0 0
        %1656 = vmatpush1.bf16.msra.mxu0 0
        %1657 = vmatprep.subr.bf16.mxu0 0
        %1658 = vmatpush1.bf16.msra.mxu0 0
        %1659 = vmatprep.subr.bf16.mxu0 0
        %1660 = vmatpush1.bf16.msra.mxu0 0
        %1661 = vmatprep.subr.bf16.mxu0 0
        %1662 = vmatpush1.bf16.msra.mxu0 0
        %1663 = vmatprep.subr.bf16.mxu0 0
        %1664 = vmatpush1.bf16.msra.mxu0 0
        %1665 = vmatprep.subr.bf16.mxu0 0
        %1666 = vmatpush1.bf16.msra.mxu0 0
        %1667 = vmatprep.subr.bf16.mxu0 0
        %1668 = vmatpush1.bf16.msra.mxu0 0
        %1669 = vmatprep.mubr.bf16.mxu0 0
        %1670 = vmatmul.mubr.bf16.gmra.mrb[0].mxu0 %v1635
        %v1671 = vpop.f32.mrb[0].mxu0
        %v1672 = vadd.f32 0.0, %v1671
        %v1673 = vpop.f32.mrb[0].mxu0
        %v1674 = vpop.f32.mrb[0].mxu0
        %v1675 = vpop.f32.mrb[0].mxu0
        %1676 = vdwg.mxu0
        %v1678 = vsel %vm1040, %v1501, 0
        %1680 = vmatprep.subr.bf16.mxu0 0
        %1681 = vmatpush1.bf16.msra.mxu0 %v1036
        %1682 = vmatprep.subr.bf16.mxu0 0
        %1683 = vmatpush1.bf16.msra.mxu0 0
        %1684 = vmatprep.subr.bf16.mxu0 0
        %1685 = vmatpush1.bf16.msra.mxu0 0
        %1686 = vmatprep.subr.bf16.mxu0 0
        %1687 = vmatpush1.bf16.msra.mxu0 0
        %1688 = vmatprep.subr.bf16.mxu0 0
        %1689 = vmatpush1.bf16.msra.mxu0 0
        %1690 = vmatprep.subr.bf16.mxu0 0
        %1691 = vmatpush1.bf16.msra.mxu0 0
        %1692 = vmatprep.subr.bf16.mxu0 0
        %1693 = vmatpush1.bf16.msra.mxu0 0
        %1694 = vmatprep.subr.bf16.mxu0 0
        %1695 = vmatpush1.bf16.msra.mxu0 0
        %1696 = vmatprep.subr.bf16.mxu0 0
        %1697 = vmatpush1.bf16.msra.mxu0 0
        %1698 = vmatprep.subr.bf16.mxu0 0
        %1699 = vmatpush1.bf16.msra.mxu0 0
        %1700 = vmatprep.subr.bf16.mxu0 0
        %1701 = vmatpush1.bf16.msra.mxu0 0
        %1702 = vmatprep.subr.bf16.mxu0 0
        %1703 = vmatpush1.bf16.msra.mxu0 0
        %1704 = vmatprep.subr.bf16.mxu0 0
        %1705 = vmatpush1.bf16.msra.mxu0 0
        %1706 = vmatprep.subr.bf16.mxu0 0
        %1707 = vmatpush1.bf16.msra.mxu0 0
        %1708 = vmatprep.subr.bf16.mxu0 0
        %1709 = vmatpush1.bf16.msra.mxu0 0
        %1710 = vmatprep.subr.bf16.mxu0 0
        %1711 = vmatpush1.bf16.msra.mxu0 0
        %1712 = vmatprep.mubr.bf16.mxu0 0
        %1713 = vmatmul.mubr.bf16.gmra.mrb[0].mxu0 %v1678
        %v1714 = vpop.f32.mrb[0].mxu0
        %v1715 = vadd.f32 0.0, %v1714
        %v1716 = vpop.f32.mrb[0].mxu0
        %v1717 = vpop.f32.mrb[0].mxu0
        %v1718 = vpop.f32.mrb[0].mxu0
        %1719 = vdwg.mxu0
        %v1721 = vsel %vm1040, %v1502, 0
        %1723 = vmatprep.subr.bf16.mxu0 0
        %1724 = vmatpush1.bf16.msra.mxu0 %v1037
        %1725 = vmatprep.subr.bf16.mxu0 0
        %1726 = vmatpush1.bf16.msra.mxu0 0
        %1727 = vmatprep.subr.bf16.mxu0 0
        %1728 = vmatpush1.bf16.msra.mxu0 0
        %1729 = vmatprep.subr.bf16.mxu0 0
        %1730 = vmatpush1.bf16.msra.mxu0 0
        %1731 = vmatprep.subr.bf16.mxu0 0
        %1732 = vmatpush1.bf16.msra.mxu0 0
        %1733 = vmatprep.subr.bf16.mxu0 0
        %1734 = vmatpush1.bf16.msra.mxu0 0
        %1735 = vmatprep.subr.bf16.mxu0 0
        %1736 = vmatpush1.bf16.msra.mxu0 0
        %1737 = vmatprep.subr.bf16.mxu0 0
        %1738 = vmatpush1.bf16.msra.mxu0 0
        %1739 = vmatprep.subr.bf16.mxu0 0
        %1740 = vmatpush1.bf16.msra.mxu0 0
        %1741 = vmatprep.subr.bf16.mxu0 0
        %1742 = vmatpush1.bf16.msra.mxu0 0
        %1743 = vmatprep.subr.bf16.mxu0 0
        %1744 = vmatpush1.bf16.msra.mxu0 0
        %1745 = vmatprep.subr.bf16.mxu0 0
        %1746 = vmatpush1.bf16.msra.mxu0 0
        %1747 = vmatprep.subr.bf16.mxu0 0
        %1748 = vmatpush1.bf16.msra.mxu0 0
        %1749 = vmatprep.subr.bf16.mxu0 0
        %1750 = vmatpush1.bf16.msra.mxu0 0
        %1751 = vmatprep.subr.bf16.mxu0 0
        %1752 = vmatpush1.bf16.msra.mxu0 0
        %1753 = vmatprep.subr.bf16.mxu0 0
        %1754 = vmatpush1.bf16.msra.mxu0 0
        %1755 = vmatprep.mubr.bf16.mxu0 0
        %1756 = vmatmul.mubr.bf16.gmra.mrb[0].mxu0 %v1721
        %v1757 = vpop.f32.mrb[0].mxu0
        %v1758 = vadd.f32 0.0, %v1757
        %v1759 = vpop.f32.mrb[0].mxu0
        %v1760 = vpop.f32.mrb[0].mxu0
        %v1761 = vpop.f32.mrb[0].mxu0
        %1762 = vdwg.mxu0
        %v1764 = vsel %vm1040, %v1503, 0
        %1766 = vmatprep.subr.bf16.mxu0 0
        %1767 = vmatpush1.bf16.msra.mxu0 %v1038
        %1768 = vmatprep.subr.bf16.mxu0 0
        %1769 = vmatpush1.bf16.msra.mxu0 0
        %1770 = vmatprep.subr.bf16.mxu0 0
        %1771 = vmatpush1.bf16.msra.mxu0 0
        %1772 = vmatprep.subr.bf16.mxu0 0
        %1773 = vmatpush1.bf16.msra.mxu0 0
        %1774 = vmatprep.subr.bf16.mxu0 0
        %1775 = vmatpush1.bf16.msra.mxu0 0
        %1776 = vmatprep.subr.bf16.mxu0 0
        %1777 = vmatpush1.bf16.msra.mxu0 0
        %1778 = vmatprep.subr.bf16.mxu0 0
        %1779 = vmatpush1.bf16.msra.mxu0 0
        %1780 = vmatprep.subr.bf16.mxu0 0
        %1781 = vmatpush1.bf16.msra.mxu0 0
        %1782 = vmatprep.subr.bf16.mxu0 0
        %1783 = vmatpush1.bf16.msra.mxu0 0
        %1784 = vmatprep.subr.bf16.mxu0 0
        %1785 = vmatpush1.bf16.msra.mxu0 0
        %1786 = vmatprep.subr.bf16.mxu0 0
        %1787 = vmatpush1.bf16.msra.mxu0 0
        %1788 = vmatprep.subr.bf16.mxu0 0
        %1789 = vmatpush1.bf16.msra.mxu0 0
        %1790 = vmatprep.subr.bf16.mxu0 0
        %1791 = vmatpush1.bf16.msra.mxu0 0
        %1792 = vmatprep.subr.bf16.mxu0 0
        %1793 = vmatpush1.bf16.msra.mxu0 0
        %1794 = vmatprep.subr.bf16.mxu0 0
        %1795 = vmatpush1.bf16.msra.mxu0 0
        %1796 = vmatprep.subr.bf16.mxu0 0
        %1797 = vmatpush1.bf16.msra.mxu0 0
        %1798 = vmatprep.mubr.bf16.mxu0 0
        %1799 = vmatmul.mubr.bf16.gmra.mrb[0].mxu0 %v1764
        %v1800 = vpop.f32.mrb[0].mxu0
        %v1801 = vadd.f32 0.0, %v1800
        %v1802 = vpop.f32.mrb[0].mxu0
        %v1803 = vpop.f32.mrb[0].mxu0
        %v1804 = vpop.f32.mrb[0].mxu0
        %1805 = vdwg.mxu0
        %v1807 = vsel %vm1040, %v1504, 0
        %1809 = vmatprep.subr.bf16.mxu0 0
        %1810 = vmatpush1.bf16.msra.mxu0 %v1039
        %1811 = vmatprep.subr.bf16.mxu0 0
        %1812 = vmatpush1.bf16.msra.mxu0 0
        %1813 = vmatprep.subr.bf16.mxu0 0
        %1814 = vmatpush1.bf16.msra.mxu0 0
        %1815 = vmatprep.subr.bf16.mxu0 0
        %1816 = vmatpush1.bf16.msra.mxu0 0
        %1817 = vmatprep.subr.bf16.mxu0 0
        %1818 = vmatpush1.bf16.msra.mxu0 0
        %1819 = vmatprep.subr.bf16.mxu0 0
        %1820 = vmatpush1.bf16.msra.mxu0 0
        %1821 = vmatprep.subr.bf16.mxu0 0
        %1822 = vmatpush1.bf16.msra.mxu0 0
        %1823 = vmatprep.subr.bf16.mxu0 0
        %1824 = vmatpush1.bf16.msra.mxu0 0
        %1825 = vmatprep.subr.bf16.mxu0 0
        %1826 = vmatpush1.bf16.msra.mxu0 0
        %1827 = vmatprep.subr.bf16.mxu0 0
        %1828 = vmatpush1.bf16.msra.mxu0 0
        %1829 = vmatprep.subr.bf16.mxu0 0
        %1830 = vmatpush1.bf16.msra.mxu0 0
        %1831 = vmatprep.subr.bf16.mxu0 0
        %1832 = vmatpush1.bf16.msra.mxu0 0
        %1833 = vmatprep.subr.bf16.mxu0 0
        %1834 = vmatpush1.bf16.msra.mxu0 0
        %1835 = vmatprep.subr.bf16.mxu0 0
        %1836 = vmatpush1.bf16.msra.mxu0 0
        %1837 = vmatprep.subr.bf16.mxu0 0
        %1838 = vmatpush1.bf16.msra.mxu0 0
        %1839 = vmatprep.subr.bf16.mxu0 0
        %1840 = vmatpush1.bf16.msra.mxu0 0
        %1841 = vmatprep.mubr.bf16.mxu0 0
        %1842 = vmatmul.mubr.bf16.gmra.mrb[0].mxu0 %v1807
        %v1843 = vpop.f32.mrb[0].mxu0
        %v1844 = vadd.f32 0.0, %v1843
        %v1845 = vpop.f32.mrb[0].mxu0
        %v1846 = vpop.f32.mrb[0].mxu0
        %v1847 = vpop.f32.mrb[0].mxu0
        %1848 = vdwg.mxu0
        %1850 = vrot.lane.b32.xlu0 %v1586, 16
        %v1851 = vpop.permute.xlu0 %1850
        %1854 = vrot.lane.b32.xlu0 %v1629, 32
        %v1855 = vpop.permute.xlu0 %1854
        %1858 = vrot.lane.b32.xlu0 %v1672, 48
        %v1859 = vpop.permute.xlu0 %1858
        %1862 = vrot.lane.b32.xlu0 %v1715, 64
        %v1863 = vpop.permute.xlu0 %1862
        %1866 = vrot.lane.b32.xlu0 %v1758, 80
        %v1867 = vpop.permute.xlu0 %1866
        %1870 = vrot.lane.b32.xlu0 %v1801, 96
        %v1871 = vpop.permute.xlu0 %1870
        %1874 = vrot.lane.b32.xlu0 %v1844, 112
        %v1875 = vpop.permute.xlu0 %1874
        %v1877 = vsel %vm1040, %v1543, %v1851
        %vm1878 = vcmask 261120
        %v1879 = vsel %vm1878, %v1877, %v1855
        %vm1880 = vcmask 392192
        %v1881 = vsel %vm1880, %v1879, %v1859
        %vm1882 = vcmask 523264
        %v1883 = vsel %vm1882, %v1881, %v1863
        %vm1884 = vcmask 654336
        %v1885 = vsel %vm1884, %v1883, %v1867
        %vm1886 = vcmask 785408
        %v1887 = vsel %vm1886, %v1885, %v1871
        %vm1888 = vcmask 916480
        %v1889 = vsel %vm1888, %v1887, %v1875
        %1891 = vrot.lane.b32.xlu0 %v744, 112
        %v1892 = vpop.permute.xlu0 %1891
        %1894 = vrot.lane.b32.xlu0 %v744, 96
        %v1895 = vpop.permute.xlu0 %1894
        %1897 = vrot.lane.b32.xlu0 %v744, 80
        %v1898 = vpop.permute.xlu0 %1897
        %1900 = vrot.lane.b32.xlu0 %v744, 64
        %v1901 = vpop.permute.xlu0 %1900
        %1903 = vrot.lane.b32.xlu0 %v744, 48
        %v1904 = vpop.permute.xlu0 %1903
        %1906 = vrot.lane.b32.xlu0 %v744, 32
        %v1907 = vpop.permute.xlu0 %1906
        %1909 = vrot.lane.b32.xlu0 %v744, 16
        %v1910 = vpop.permute.xlu0 %1909
        %v1912 = vpack.c.bf16 %v744, %v744
        %v1913 = vpack.c.bf16 %v1892, %v1892
        %v1914 = vpack.c.bf16 %v1895, %v1895
        %v1915 = vpack.c.bf16 %v1898, %v1898
        %v1916 = vpack.c.bf16 %v1901, %v1901
        %v1917 = vpack.c.bf16 %v1904, %v1904
        %v1918 = vpack.c.bf16 %v1907, %v1907
        %v1919 = vpack.c.bf16 %v1910, %v1910
        %1922 = vrot.lane.b32.xlu0 %v898, 112
        %v1923 = vpop.permute.xlu0 %1922
        %1924 = vrot.lane.b32.xlu0 %v902, 112
        %v1925 = vpop.permute.xlu0 %1924
        %1928 = vrot.lane.b32.xlu0 %v898, 96
        %v1929 = vpop.permute.xlu0 %1928
        %1930 = vrot.lane.b32.xlu0 %v902, 96
        %v1931 = vpop.permute.xlu0 %1930
        %1934 = vrot.lane.b32.xlu0 %v898, 80
        %v1935 = vpop.permute.xlu0 %1934
        %1936 = vrot.lane.b32.xlu0 %v902, 80
        %v1937 = vpop.permute.xlu0 %1936
        %1940 = vrot.lane.b32.xlu0 %v898, 64
        %v1941 = vpop.permute.xlu0 %1940
        %1942 = vrot.lane.b32.xlu0 %v902, 64
        %v1943 = vpop.permute.xlu0 %1942
        %1946 = vrot.lane.b32.xlu0 %v898, 48
        %v1947 = vpop.permute.xlu0 %1946
        %1948 = vrot.lane.b32.xlu0 %v902, 48
        %v1949 = vpop.permute.xlu0 %1948
        %1952 = vrot.lane.b32.xlu0 %v898, 32
        %v1953 = vpop.permute.xlu0 %1952
        %1954 = vrot.lane.b32.xlu0 %v902, 32
        %v1955 = vpop.permute.xlu0 %1954
        %1958 = vrot.lane.b32.xlu0 %v898, 16
        %v1959 = vpop.permute.xlu0 %1958
        %1960 = vrot.lane.b32.xlu0 %v902, 16
        %v1961 = vpop.permute.xlu0 %1960
        %v1964 = vpack.c.bf16 %v902, %v898
        %v1965 = vpack.c.bf16 %v1925, %v1923
        %v1966 = vpack.c.bf16 %v1931, %v1929
        %v1967 = vpack.c.bf16 %v1937, %v1935
        %v1968 = vpack.c.bf16 %v1943, %v1941
        %v1969 = vpack.c.bf16 %v1949, %v1947
        %v1970 = vpack.c.bf16 %v1955, %v1953
        %v1971 = vpack.c.bf16 %v1961, %v1959
        %1974 = vrot.lane.b32.xlu0 %v900, 112
        %v1975 = vpop.permute.xlu0 %1974
        %1976 = vrot.lane.b32.xlu0 %v904, 112
        %v1977 = vpop.permute.xlu0 %1976
        %1980 = vrot.lane.b32.xlu0 %v900, 96
        %v1981 = vpop.permute.xlu0 %1980
        %1982 = vrot.lane.b32.xlu0 %v904, 96
        %v1983 = vpop.permute.xlu0 %1982
        %1986 = vrot.lane.b32.xlu0 %v900, 80
        %v1987 = vpop.permute.xlu0 %1986
        %1988 = vrot.lane.b32.xlu0 %v904, 80
        %v1989 = vpop.permute.xlu0 %1988
        %1992 = vrot.lane.b32.xlu0 %v900, 64
        %v1993 = vpop.permute.xlu0 %1992
        %1994 = vrot.lane.b32.xlu0 %v904, 64
        %v1995 = vpop.permute.xlu0 %1994
        %1998 = vrot.lane.b32.xlu0 %v900, 48
        %v1999 = vpop.permute.xlu0 %1998
        %2000 = vrot.lane.b32.xlu0 %v904, 48
        %v2001 = vpop.permute.xlu0 %2000
        %2004 = vrot.lane.b32.xlu0 %v900, 32
        %v2005 = vpop.permute.xlu0 %2004
        %2006 = vrot.lane.b32.xlu0 %v904, 32
        %v2007 = vpop.permute.xlu0 %2006
        %2010 = vrot.lane.b32.xlu0 %v900, 16
        %v2011 = vpop.permute.xlu0 %2010
        %2012 = vrot.lane.b32.xlu0 %v904, 16
        %v2013 = vpop.permute.xlu0 %2012
        %v2016 = vpack.c.bf16 %v904, %v900
        %v2017 = vpack.c.bf16 %v1977, %v1975
        %v2018 = vpack.c.bf16 %v1983, %v1981
        %v2019 = vpack.c.bf16 %v1989, %v1987
        %v2020 = vpack.c.bf16 %v1995, %v1993
        %v2021 = vpack.c.bf16 %v2001, %v1999
        %v2022 = vpack.c.bf16 %v2007, %v2005
        %v2023 = vpack.c.bf16 %v2013, %v2011
        %v2025 = vsel %vm1040, %v1912, 0
        %v2028 = vsel %vm1040, %v1964, 0
        %2030 = vmatprep.subr.bf16.mxu0 0
        %2031 = vmatpush1.bf16.xpose.msra.mxu0 %v2028
        %2032 = vmatprep.subr.bf16.mxu0 0
        %2033 = vmatpush1.bf16.xpose.msra.mxu0 0
        %2034 = vmatprep.subr.bf16.mxu0 0
        %2035 = vmatpush1.bf16.xpose.msra.mxu0 0
        %2036 = vmatprep.subr.bf16.mxu0 0
        %2037 = vmatpush1.bf16.xpose.msra.mxu0 0
        %2038 = vmatprep.subr.bf16.mxu0 0
        %2039 = vmatpush1.bf16.xpose.msra.mxu0 0
        %2040 = vmatprep.subr.bf16.mxu0 0
        %2041 = vmatpush1.bf16.xpose.msra.mxu0 0
        %2042 = vmatprep.subr.bf16.mxu0 0
        %2043 = vmatpush1.bf16.xpose.msra.mxu0 0
        %2044 = vmatprep.subr.bf16.mxu0 0
        %2045 = vmatpush1.bf16.xpose.msra.mxu0 0
        %2046 = vmatprep.subr.bf16.mxu0 0
        %2047 = vmatpush1.bf16.xpose.msra.mxu0 0
        %2048 = vmatprep.subr.bf16.mxu0 0
        %2049 = vmatpush1.bf16.xpose.msra.mxu0 0
        %2050 = vmatprep.subr.bf16.mxu0 0
        %2051 = vmatpush1.bf16.xpose.msra.mxu0 0
        %2052 = vmatprep.subr.bf16.mxu0 0
        %2053 = vmatpush1.bf16.xpose.msra.mxu0 0
        %2054 = vmatprep.subr.bf16.mxu0 0
        %2055 = vmatpush1.bf16.xpose.msra.mxu0 0
        %2056 = vmatprep.subr.bf16.mxu0 0
        %2057 = vmatpush1.bf16.xpose.msra.mxu0 0
        %2058 = vmatprep.subr.bf16.mxu0 0
        %2059 = vmatpush1.bf16.xpose.msra.mxu0 0
        %2060 = vmatprep.subr.bf16.mxu0 0
        %2061 = vmatpush1.bf16.xpose.msra.mxu0 0
        %2062 = vmatprep.mubr.bf16.mxu0 0
        %2063 = vmatmul.mubr.bf16.gmra.mrb[0].mxu0 %v2025
        %v2064 = vpop.f32.mrb[0].mxu0
        %v2065 = vadd.f32 0.0, %v2064
        %v2066 = vpop.f32.mrb[0].mxu0
        %v2067 = vpop.f32.mrb[0].mxu0
        %v2068 = vpop.f32.mrb[0].mxu0
        %2069 = vdwg.mxu0
        %v2071 = vsel %vm1040, %v1913, 0
        %v2074 = vsel %vm1040, %v1965, 0
        %2076 = vmatprep.subr.bf16.mxu0 0
        %2077 = vmatpush1.bf16.xpose.msra.mxu0 %v2074
        %2078 = vmatprep.subr.bf16.mxu0 0
        %2079 = vmatpush1.bf16.xpose.msra.mxu0 0
        %2080 = vmatprep.subr.bf16.mxu0 0
        %2081 = vmatpush1.bf16.xpose.msra.mxu0 0
        %2082 = vmatprep.subr.bf16.mxu0 0
        %2083 = vmatpush1.bf16.xpose.msra.mxu0 0
        %2084 = vmatprep.subr.bf16.mxu0 0
        %2085 = vmatpush1.bf16.xpose.msra.mxu0 0
        %2086 = vmatprep.subr.bf16.mxu0 0
        %2087 = vmatpush1.bf16.xpose.msra.mxu0 0
        %2088 = vmatprep.subr.bf16.mxu0 0
        %2089 = vmatpush1.bf16.xpose.msra.mxu0 0
        %2090 = vmatprep.subr.bf16.mxu0 0
        %2091 = vmatpush1.bf16.xpose.msra.mxu0 0
        %2092 = vmatprep.subr.bf16.mxu0 0
        %2093 = vmatpush1.bf16.xpose.msra.mxu0 0
        %2094 = vmatprep.subr.bf16.mxu0 0
        %2095 = vmatpush1.bf16.xpose.msra.mxu0 0
        %2096 = vmatprep.subr.bf16.mxu0 0
        %2097 = vmatpush1.bf16.xpose.msra.mxu0 0
        %2098 = vmatprep.subr.bf16.mxu0 0
        %2099 = vmatpush1.bf16.xpose.msra.mxu0 0
        %2100 = vmatprep.subr.bf16.mxu0 0
        %2101 = vmatpush1.bf16.xpose.msra.mxu0 0
        %2102 = vmatprep.subr.bf16.mxu0 0
        %2103 = vmatpush1.bf16.xpose.msra.mxu0 0
        %2104 = vmatprep.subr.bf16.mxu0 0
        %2105 = vmatpush1.bf16.xpose.msra.mxu0 0
        %2106 = vmatprep.subr.bf16.mxu0 0
        %2107 = vmatpush1.bf16.xpose.msra.mxu0 0
        %2108 = vmatprep.mubr.bf16.mxu0 0
        %2109 = vmatmul.mubr.bf16.gmra.mrb[0].mxu0 %v2071
        %v2110 = vpop.f32.mrb[0].mxu0
        %v2111 = vadd.f32 0.0, %v2110
        %v2112 = vpop.f32.mrb[0].mxu0
        %v2113 = vpop.f32.mrb[0].mxu0
        %v2114 = vpop.f32.mrb[0].mxu0
        %2115 = vdwg.mxu0
        %v2117 = vsel %vm1040, %v1914, 0
        %v2120 = vsel %vm1040, %v1966, 0
        %2122 = vmatprep.subr.bf16.mxu0 0
        %2123 = vmatpush1.bf16.xpose.msra.mxu0 %v2120
        %2124 = vmatprep.subr.bf16.mxu0 0
        %2125 = vmatpush1.bf16.xpose.msra.mxu0 0
        %2126 = vmatprep.subr.bf16.mxu0 0
        %2127 = vmatpush1.bf16.xpose.msra.mxu0 0
        %2128 = vmatprep.subr.bf16.mxu0 0
        %2129 = vmatpush1.bf16.xpose.msra.mxu0 0
        %2130 = vmatprep.subr.bf16.mxu0 0
        %2131 = vmatpush1.bf16.xpose.msra.mxu0 0
        %2132 = vmatprep.subr.bf16.mxu0 0
        %2133 = vmatpush1.bf16.xpose.msra.mxu0 0
        %2134 = vmatprep.subr.bf16.mxu0 0
        %2135 = vmatpush1.bf16.xpose.msra.mxu0 0
        %2136 = vmatprep.subr.bf16.mxu0 0
        %2137 = vmatpush1.bf16.xpose.msra.mxu0 0
        %2138 = vmatprep.subr.bf16.mxu0 0
        %2139 = vmatpush1.bf16.xpose.msra.mxu0 0
        %2140 = vmatprep.subr.bf16.mxu0 0
        %2141 = vmatpush1.bf16.xpose.msra.mxu0 0
        %2142 = vmatprep.subr.bf16.mxu0 0
        %2143 = vmatpush1.bf16.xpose.msra.mxu0 0
        %2144 = vmatprep.subr.bf16.mxu0 0
        %2145 = vmatpush1.bf16.xpose.msra.mxu0 0
        %2146 = vmatprep.subr.bf16.mxu0 0
        %2147 = vmatpush1.bf16.xpose.msra.mxu0 0
        %2148 = vmatprep.subr.bf16.mxu0 0
        %2149 = vmatpush1.bf16.xpose.msra.mxu0 0
        %2150 = vmatprep.subr.bf16.mxu0 0
        %2151 = vmatpush1.bf16.xpose.msra.mxu0 0
        %2152 = vmatprep.subr.bf16.mxu0 0
        %2153 = vmatpush1.bf16.xpose.msra.mxu0 0
        %2154 = vmatprep.mubr.bf16.mxu0 0
        %2155 = vmatmul.mubr.bf16.gmra.mrb[0].mxu0 %v2117
        %v2156 = vpop.f32.mrb[0].mxu0
        %v2157 = vadd.f32 0.0, %v2156
        %v2158 = vpop.f32.mrb[0].mxu0
        %v2159 = vpop.f32.mrb[0].mxu0
        %v2160 = vpop.f32.mrb[0].mxu0
        %2161 = vdwg.mxu0
        %v2163 = vsel %vm1040, %v1915, 0
        %v2166 = vsel %vm1040, %v1967, 0
        %2168 = vmatprep.subr.bf16.mxu0 0
        %2169 = vmatpush1.bf16.xpose.msra.mxu0 %v2166
        %2170 = vmatprep.subr.bf16.mxu0 0
        %2171 = vmatpush1.bf16.xpose.msra.mxu0 0
        %2172 = vmatprep.subr.bf16.mxu0 0
        %2173 = vmatpush1.bf16.xpose.msra.mxu0 0
        %2174 = vmatprep.subr.bf16.mxu0 0
        %2175 = vmatpush1.bf16.xpose.msra.mxu0 0
        %2176 = vmatprep.subr.bf16.mxu0 0
        %2177 = vmatpush1.bf16.xpose.msra.mxu0 0
        %2178 = vmatprep.subr.bf16.mxu0 0
        %2179 = vmatpush1.bf16.xpose.msra.mxu0 0
        %2180 = vmatprep.subr.bf16.mxu0 0
        %2181 = vmatpush1.bf16.xpose.msra.mxu0 0
        %2182 = vmatprep.subr.bf16.mxu0 0
        %2183 = vmatpush1.bf16.xpose.msra.mxu0 0
        %2184 = vmatprep.subr.bf16.mxu0 0
        %2185 = vmatpush1.bf16.xpose.msra.mxu0 0
        %2186 = vmatprep.subr.bf16.mxu0 0
        %2187 = vmatpush1.bf16.xpose.msra.mxu0 0
        %2188 = vmatprep.subr.bf16.mxu0 0
        %2189 = vmatpush1.bf16.xpose.msra.mxu0 0
        %2190 = vmatprep.subr.bf16.mxu0 0
        %2191 = vmatpush1.bf16.xpose.msra.mxu0 0
        %2192 = vmatprep.subr.bf16.mxu0 0
        %2193 = vmatpush1.bf16.xpose.msra.mxu0 0
        %2194 = vmatprep.subr.bf16.mxu0 0
        %2195 = vmatpush1.bf16.xpose.msra.mxu0 0
        %2196 = vmatprep.subr.bf16.mxu0 0
        %2197 = vmatpush1.bf16.xpose.msra.mxu0 0
        %2198 = vmatprep.subr.bf16.mxu0 0
        %2199 = vmatpush1.bf16.xpose.msra.mxu0 0
        %2200 = vmatprep.mubr.bf16.mxu0 0
        %2201 = vmatmul.mubr.bf16.gmra.mrb[0].mxu0 %v2163
        %v2202 = vpop.f32.mrb[0].mxu0
        %v2203 = vadd.f32 0.0, %v2202
        %v2204 = vpop.f32.mrb[0].mxu0
        %v2205 = vpop.f32.mrb[0].mxu0
        %v2206 = vpop.f32.mrb[0].mxu0
        %2207 = vdwg.mxu0
        %v2209 = vsel %vm1040, %v1916, 0
        %v2212 = vsel %vm1040, %v1968, 0
        %2214 = vmatprep.subr.bf16.mxu0 0
        %2215 = vmatpush1.bf16.xpose.msra.mxu0 %v2212
        %2216 = vmatprep.subr.bf16.mxu0 0
        %2217 = vmatpush1.bf16.xpose.msra.mxu0 0
        %2218 = vmatprep.subr.bf16.mxu0 0
        %2219 = vmatpush1.bf16.xpose.msra.mxu0 0
        %2220 = vmatprep.subr.bf16.mxu0 0
        %2221 = vmatpush1.bf16.xpose.msra.mxu0 0
        %2222 = vmatprep.subr.bf16.mxu0 0
        %2223 = vmatpush1.bf16.xpose.msra.mxu0 0
        %2224 = vmatprep.subr.bf16.mxu0 0
        %2225 = vmatpush1.bf16.xpose.msra.mxu0 0
        %2226 = vmatprep.subr.bf16.mxu0 0
        %2227 = vmatpush1.bf16.xpose.msra.mxu0 0
        %2228 = vmatprep.subr.bf16.mxu0 0
        %2229 = vmatpush1.bf16.xpose.msra.mxu0 0
        %2230 = vmatprep.subr.bf16.mxu0 0
        %2231 = vmatpush1.bf16.xpose.msra.mxu0 0
        %2232 = vmatprep.subr.bf16.mxu0 0
        %2233 = vmatpush1.bf16.xpose.msra.mxu0 0
        %2234 = vmatprep.subr.bf16.mxu0 0
        %2235 = vmatpush1.bf16.xpose.msra.mxu0 0
        %2236 = vmatprep.subr.bf16.mxu0 0
        %2237 = vmatpush1.bf16.xpose.msra.mxu0 0
        %2238 = vmatprep.subr.bf16.mxu0 0
        %2239 = vmatpush1.bf16.xpose.msra.mxu0 0
        %2240 = vmatprep.subr.bf16.mxu0 0
        %2241 = vmatpush1.bf16.xpose.msra.mxu0 0
        %2242 = vmatprep.subr.bf16.mxu0 0
        %2243 = vmatpush1.bf16.xpose.msra.mxu0 0
        %2244 = vmatprep.subr.bf16.mxu0 0
        %2245 = vmatpush1.bf16.xpose.msra.mxu0 0
        %2246 = vmatprep.mubr.bf16.mxu0 0
        %2247 = vmatmul.mubr.bf16.gmra.mrb[0].mxu0 %v2209
        %v2248 = vpop.f32.mrb[0].mxu0
        %v2249 = vadd.f32 0.0, %v2248
        %v2250 = vpop.f32.mrb[0].mxu0
        %v2251 = vpop.f32.mrb[0].mxu0
        %v2252 = vpop.f32.mrb[0].mxu0
        %2253 = vdwg.mxu0
        %v2255 = vsel %vm1040, %v1917, 0
        %v2258 = vsel %vm1040, %v1969, 0
        %2260 = vmatprep.subr.bf16.mxu0 0
        %2261 = vmatpush1.bf16.xpose.msra.mxu0 %v2258
        %2262 = vmatprep.subr.bf16.mxu0 0
        %2263 = vmatpush1.bf16.xpose.msra.mxu0 0
        %2264 = vmatprep.subr.bf16.mxu0 0
        %2265 = vmatpush1.bf16.xpose.msra.mxu0 0
        %2266 = vmatprep.subr.bf16.mxu0 0
        %2267 = vmatpush1.bf16.xpose.msra.mxu0 0
        %2268 = vmatprep.subr.bf16.mxu0 0
        %2269 = vmatpush1.bf16.xpose.msra.mxu0 0
        %2270 = vmatprep.subr.bf16.mxu0 0
        %2271 = vmatpush1.bf16.xpose.msra.mxu0 0
        %2272 = vmatprep.subr.bf16.mxu0 0
        %2273 = vmatpush1.bf16.xpose.msra.mxu0 0
        %2274 = vmatprep.subr.bf16.mxu0 0
        %2275 = vmatpush1.bf16.xpose.msra.mxu0 0
        %2276 = vmatprep.subr.bf16.mxu0 0
        %2277 = vmatpush1.bf16.xpose.msra.mxu0 0
        %2278 = vmatprep.subr.bf16.mxu0 0
        %2279 = vmatpush1.bf16.xpose.msra.mxu0 0
        %2280 = vmatprep.subr.bf16.mxu0 0
        %2281 = vmatpush1.bf16.xpose.msra.mxu0 0
        %2282 = vmatprep.subr.bf16.mxu0 0
        %2283 = vmatpush1.bf16.xpose.msra.mxu0 0
        %2284 = vmatprep.subr.bf16.mxu0 0
        %2285 = vmatpush1.bf16.xpose.msra.mxu0 0
        %2286 = vmatprep.subr.bf16.mxu0 0
        %2287 = vmatpush1.bf16.xpose.msra.mxu0 0
        %2288 = vmatprep.subr.bf16.mxu0 0
        %2289 = vmatpush1.bf16.xpose.msra.mxu0 0
        %2290 = vmatprep.subr.bf16.mxu0 0
        %2291 = vmatpush1.bf16.xpose.msra.mxu0 0
        %2292 = vmatprep.mubr.bf16.mxu0 0
        %2293 = vmatmul.mubr.bf16.gmra.mrb[0].mxu0 %v2255
        %v2294 = vpop.f32.mrb[0].mxu0
        %v2295 = vadd.f32 0.0, %v2294
        %v2296 = vpop.f32.mrb[0].mxu0
        %v2297 = vpop.f32.mrb[0].mxu0
        %v2298 = vpop.f32.mrb[0].mxu0
        %2299 = vdwg.mxu0
        %v2301 = vsel %vm1040, %v1918, 0
        %v2304 = vsel %vm1040, %v1970, 0
        %2306 = vmatprep.subr.bf16.mxu0 0
        %2307 = vmatpush1.bf16.xpose.msra.mxu0 %v2304
        %2308 = vmatprep.subr.bf16.mxu0 0
        %2309 = vmatpush1.bf16.xpose.msra.mxu0 0
        %2310 = vmatprep.subr.bf16.mxu0 0
        %2311 = vmatpush1.bf16.xpose.msra.mxu0 0
        %2312 = vmatprep.subr.bf16.mxu0 0
        %2313 = vmatpush1.bf16.xpose.msra.mxu0 0
        %2314 = vmatprep.subr.bf16.mxu0 0
        %2315 = vmatpush1.bf16.xpose.msra.mxu0 0
        %2316 = vmatprep.subr.bf16.mxu0 0
        %2317 = vmatpush1.bf16.xpose.msra.mxu0 0
        %2318 = vmatprep.subr.bf16.mxu0 0
        %2319 = vmatpush1.bf16.xpose.msra.mxu0 0
        %2320 = vmatprep.subr.bf16.mxu0 0
        %2321 = vmatpush1.bf16.xpose.msra.mxu0 0
        %2322 = vmatprep.subr.bf16.mxu0 0
        %2323 = vmatpush1.bf16.xpose.msra.mxu0 0
        %2324 = vmatprep.subr.bf16.mxu0 0
        %2325 = vmatpush1.bf16.xpose.msra.mxu0 0
        %2326 = vmatprep.subr.bf16.mxu0 0
        %2327 = vmatpush1.bf16.xpose.msra.mxu0 0
        %2328 = vmatprep.subr.bf16.mxu0 0
        %2329 = vmatpush1.bf16.xpose.msra.mxu0 0
        %2330 = vmatprep.subr.bf16.mxu0 0
        %2331 = vmatpush1.bf16.xpose.msra.mxu0 0
        %2332 = vmatprep.subr.bf16.mxu0 0
        %2333 = vmatpush1.bf16.xpose.msra.mxu0 0
        %2334 = vmatprep.subr.bf16.mxu0 0
        %2335 = vmatpush1.bf16.xpose.msra.mxu0 0
        %2336 = vmatprep.subr.bf16.mxu0 0
        %2337 = vmatpush1.bf16.xpose.msra.mxu0 0
        %2338 = vmatprep.mubr.bf16.mxu0 0
        %2339 = vmatmul.mubr.bf16.gmra.mrb[0].mxu0 %v2301
        %v2340 = vpop.f32.mrb[0].mxu0
        %v2341 = vadd.f32 0.0, %v2340
        %v2342 = vpop.f32.mrb[0].mxu0
        %v2343 = vpop.f32.mrb[0].mxu0
        %v2344 = vpop.f32.mrb[0].mxu0
        %2345 = vdwg.mxu0
        %v2347 = vsel %vm1040, %v1919, 0
        %v2350 = vsel %vm1040, %v1971, 0
        %2352 = vmatprep.subr.bf16.mxu0 0
        %2353 = vmatpush1.bf16.xpose.msra.mxu0 %v2350
        %2354 = vmatprep.subr.bf16.mxu0 0
        %2355 = vmatpush1.bf16.xpose.msra.mxu0 0
        %2356 = vmatprep.subr.bf16.mxu0 0
        %2357 = vmatpush1.bf16.xpose.msra.mxu0 0
        %2358 = vmatprep.subr.bf16.mxu0 0
        %2359 = vmatpush1.bf16.xpose.msra.mxu0 0
        %2360 = vmatprep.subr.bf16.mxu0 0
        %2361 = vmatpush1.bf16.xpose.msra.mxu0 0
        %2362 = vmatprep.subr.bf16.mxu0 0
        %2363 = vmatpush1.bf16.xpose.msra.mxu0 0
        %2364 = vmatprep.subr.bf16.mxu0 0
        %2365 = vmatpush1.bf16.xpose.msra.mxu0 0
        %2366 = vmatprep.subr.bf16.mxu0 0
        %2367 = vmatpush1.bf16.xpose.msra.mxu0 0
        %2368 = vmatprep.subr.bf16.mxu0 0
        %2369 = vmatpush1.bf16.xpose.msra.mxu0 0
        %2370 = vmatprep.subr.bf16.mxu0 0
        %2371 = vmatpush1.bf16.xpose.msra.mxu0 0
        %2372 = vmatprep.subr.bf16.mxu0 0
        %2373 = vmatpush1.bf16.xpose.msra.mxu0 0
        %2374 = vmatprep.subr.bf16.mxu0 0
        %2375 = vmatpush1.bf16.xpose.msra.mxu0 0
        %2376 = vmatprep.subr.bf16.mxu0 0
        %2377 = vmatpush1.bf16.xpose.msra.mxu0 0
        %2378 = vmatprep.subr.bf16.mxu0 0
        %2379 = vmatpush1.bf16.xpose.msra.mxu0 0
        %2380 = vmatprep.subr.bf16.mxu0 0
        %2381 = vmatpush1.bf16.xpose.msra.mxu0 0
        %2382 = vmatprep.subr.bf16.mxu0 0
        %2383 = vmatpush1.bf16.xpose.msra.mxu0 0
        %2384 = vmatprep.mubr.bf16.mxu0 0
        %2385 = vmatmul.mubr.bf16.gmra.mrb[0].mxu0 %v2347
        %v2386 = vpop.f32.mrb[0].mxu0
        %v2387 = vadd.f32 0.0, %v2386
        %v2388 = vpop.f32.mrb[0].mxu0
        %v2389 = vpop.f32.mrb[0].mxu0
        %v2390 = vpop.f32.mrb[0].mxu0
        %2391 = vdwg.mxu0
        %v2392 = vsel %vm1040, %v2065, -inf
        %2393 = vmax.xlane.f32.xlu0 %v2392
        %v2394 = vpop.xlane.xlu0 %2393
        %v2395 = vsel %vm1040, %v2111, -inf
        %2396 = vmax.xlane.f32.xlu0 %v2395
        %v2397 = vpop.xlane.xlu0 %2396
        %v2398 = vsel %vm1040, %v2157, -inf
        %2399 = vmax.xlane.f32.xlu0 %v2398
        %v2400 = vpop.xlane.xlu0 %2399
        %v2401 = vsel %vm1040, %v2203, -inf
        %2402 = vmax.xlane.f32.xlu0 %v2401
        %v2403 = vpop.xlane.xlu0 %2402
        %v2404 = vsel %vm1040, %v2249, -inf
        %2405 = vmax.xlane.f32.xlu0 %v2404
        %v2406 = vpop.xlane.xlu0 %2405
        %v2407 = vsel %vm1040, %v2295, -inf
        %2408 = vmax.xlane.f32.xlu0 %v2407
        %v2409 = vpop.xlane.xlu0 %2408
        %v2410 = vsel %vm1040, %v2341, -inf
        %2411 = vmax.xlane.f32.xlu0 %v2410
        %v2412 = vpop.xlane.xlu0 %2411
        %v2413 = vsel %vm1040, %v2387, -inf
        %2414 = vmax.xlane.f32.xlu0 %v2413
        %v2415 = vpop.xlane.xlu0 %2414
        %v2416 = vsub.f32 %v2065, %v2394
        %v2417 = vsub.f32 %v2111, %v2397
        %v2418 = vsub.f32 %v2157, %v2400
        %v2419 = vsub.f32 %v2203, %v2403
        %v2420 = vsub.f32 %v2249, %v2406
        %v2421 = vsub.f32 %v2295, %v2409
        %v2422 = vsub.f32 %v2341, %v2412
        %v2423 = vsub.f32 %v2387, %v2415
        %v2424 = vmul.f32 %v2416, 1.442695
        %v2425 = vpow.pop %v2424
        %v2426 = vmul.f32 %v2417, 1.442695
        %v2427 = vpow.pop %v2426
        %v2428 = vmul.f32 %v2418, 1.442695
        %v2429 = vpow.pop %v2428
        %v2430 = vmul.f32 %v2419, 1.442695
        %v2431 = vpow.pop %v2430
        %v2432 = vmul.f32 %v2420, 1.442695
        %v2433 = vpow.pop %v2432
        %v2434 = vmul.f32 %v2421, 1.442695
        %v2435 = vpow.pop %v2434
        %v2436 = vmul.f32 %v2422, 1.442695
        %v2437 = vpow.pop %v2436
        %v2438 = vmul.f32 %v2423, 1.442695
        %v2439 = vpow.pop %v2438
        %v2440 = vsel %vm1040, %v2425, 0.0
        %2441 = vadd.xlane.f32.xlu0 %v2440
        %v2442 = vpop.xlane.xlu0 %2441
        %v2443 = vsel %vm1040, %v2427, 0.0
        %2444 = vadd.xlane.f32.xlu0 %v2443
        %v2445 = vpop.xlane.xlu0 %2444
        %v2446 = vsel %vm1040, %v2429, 0.0
        %2447 = vadd.xlane.f32.xlu0 %v2446
        %v2448 = vpop.xlane.xlu0 %2447
        %v2449 = vsel %vm1040, %v2431, 0.0
        %2450 = vadd.xlane.f32.xlu0 %v2449
        %v2451 = vpop.xlane.xlu0 %2450
        %v2452 = vsel %vm1040, %v2433, 0.0
        %2453 = vadd.xlane.f32.xlu0 %v2452
        %v2454 = vpop.xlane.xlu0 %2453
        %v2455 = vsel %vm1040, %v2435, 0.0
        %2456 = vadd.xlane.f32.xlu0 %v2455
        %v2457 = vpop.xlane.xlu0 %2456
        %v2458 = vsel %vm1040, %v2437, 0.0
        %2459 = vadd.xlane.f32.xlu0 %v2458
        %v2460 = vpop.xlane.xlu0 %2459
        %v2461 = vsel %vm1040, %v2439, 0.0
        %2462 = vadd.xlane.f32.xlu0 %v2461
        %v2463 = vpop.xlane.xlu0 %2462
        %v2464 = vrcp.pop %v2442
        %v2465 = vrcp.pop %v2445
        %v2466 = vrcp.pop %v2448
        %v2467 = vrcp.pop %v2451
        %v2468 = vrcp.pop %v2454
        %v2469 = vrcp.pop %v2457
        %v2470 = vrcp.pop %v2460
        %v2471 = vrcp.pop %v2463
        %v2472 = vmul.f32 %v2425, %v2464
        %v2473 = vmul.f32 %v2427, %v2465
        %v2474 = vmul.f32 %v2429, %v2466
        %v2475 = vmul.f32 %v2431, %v2467
        %v2476 = vmul.f32 %v2433, %v2468
        %v2477 = vmul.f32 %v2435, %v2469
        %v2478 = vmul.f32 %v2437, %v2470
        %v2479 = vmul.f32 %v2439, %v2471
        %v2480 = vpack.c.bf16 %v2472, %v2472
        %v2481 = vpack.c.bf16 %v2473, %v2473
        %v2482 = vpack.c.bf16 %v2474, %v2474
        %v2483 = vpack.c.bf16 %v2475, %v2475
        %v2484 = vpack.c.bf16 %v2476, %v2476
        %v2485 = vpack.c.bf16 %v2477, %v2477
        %v2486 = vpack.c.bf16 %v2478, %v2478
        %v2487 = vpack.c.bf16 %v2479, %v2479
        %v2489 = vsel %vm1040, %v2480, 0
        %2491 = vmatprep.subr.bf16.mxu0 0
        %2492 = vmatpush1.bf16.msra.mxu0 %v2016
        %2493 = vmatprep.subr.bf16.mxu0 0
        %2494 = vmatpush1.bf16.msra.mxu0 0
        %2495 = vmatprep.subr.bf16.mxu0 0
        %2496 = vmatpush1.bf16.msra.mxu0 0
        %2497 = vmatprep.subr.bf16.mxu0 0
        %2498 = vmatpush1.bf16.msra.mxu0 0
        %2499 = vmatprep.subr.bf16.mxu0 0
        %2500 = vmatpush1.bf16.msra.mxu0 0
        %2501 = vmatprep.subr.bf16.mxu0 0
        %2502 = vmatpush1.bf16.msra.mxu0 0
        %2503 = vmatprep.subr.bf16.mxu0 0
        %2504 = vmatpush1.bf16.msra.mxu0 0
        %2505 = vmatprep.subr.bf16.mxu0 0
        %2506 = vmatpush1.bf16.msra.mxu0 0
        %2507 = vmatprep.subr.bf16.mxu0 0
        %2508 = vmatpush1.bf16.msra.mxu0 0
        %2509 = vmatprep.subr.bf16.mxu0 0
        %2510 = vmatpush1.bf16.msra.mxu0 0
        %2511 = vmatprep.subr.bf16.mxu0 0
        %2512 = vmatpush1.bf16.msra.mxu0 0
        %2513 = vmatprep.subr.bf16.mxu0 0
        %2514 = vmatpush1.bf16.msra.mxu0 0
        %2515 = vmatprep.subr.bf16.mxu0 0
        %2516 = vmatpush1.bf16.msra.mxu0 0
        %2517 = vmatprep.subr.bf16.mxu0 0
        %2518 = vmatpush1.bf16.msra.mxu0 0
        %2519 = vmatprep.subr.bf16.mxu0 0
        %2520 = vmatpush1.bf16.msra.mxu0 0
        %2521 = vmatprep.subr.bf16.mxu0 0
        %2522 = vmatpush1.bf16.msra.mxu0 0
        %2523 = vmatprep.mubr.bf16.mxu0 0
        %2524 = vmatmul.mubr.bf16.gmra.mrb[0].mxu0 %v2489
        %v2525 = vpop.f32.mrb[0].mxu0
        %v2526 = vadd.f32 0.0, %v2525
        %v2527 = vpop.f32.mrb[0].mxu0
        %v2528 = vpop.f32.mrb[0].mxu0
        %v2529 = vpop.f32.mrb[0].mxu0
        %2530 = vdwg.mxu0
        %v2532 = vsel %vm1040, %v2481, 0
        %2534 = vmatprep.subr.bf16.mxu0 0
        %2535 = vmatpush1.bf16.msra.mxu0 %v2017
        %2536 = vmatprep.subr.bf16.mxu0 0
        %2537 = vmatpush1.bf16.msra.mxu0 0
        %2538 = vmatprep.subr.bf16.mxu0 0
        %2539 = vmatpush1.bf16.msra.mxu0 0
        %2540 = vmatprep.subr.bf16.mxu0 0
        %2541 = vmatpush1.bf16.msra.mxu0 0
        %2542 = vmatprep.subr.bf16.mxu0 0
        %2543 = vmatpush1.bf16.msra.mxu0 0
        %2544 = vmatprep.subr.bf16.mxu0 0
        %2545 = vmatpush1.bf16.msra.mxu0 0
        %2546 = vmatprep.subr.bf16.mxu0 0
        %2547 = vmatpush1.bf16.msra.mxu0 0
        %2548 = vmatprep.subr.bf16.mxu0 0
        %2549 = vmatpush1.bf16.msra.mxu0 0
        %2550 = vmatprep.subr.bf16.mxu0 0
        %2551 = vmatpush1.bf16.msra.mxu0 0
        %2552 = vmatprep.subr.bf16.mxu0 0
        %2553 = vmatpush1.bf16.msra.mxu0 0
        %2554 = vmatprep.subr.bf16.mxu0 0
        %2555 = vmatpush1.bf16.msra.mxu0 0
        %2556 = vmatprep.subr.bf16.mxu0 0
        %2557 = vmatpush1.bf16.msra.mxu0 0
        %2558 = vmatprep.subr.bf16.mxu0 0
        %2559 = vmatpush1.bf16.msra.mxu0 0
        %2560 = vmatprep.subr.bf16.mxu0 0
        %2561 = vmatpush1.bf16.msra.mxu0 0
        %2562 = vmatprep.subr.bf16.mxu0 0
        %2563 = vmatpush1.bf16.msra.mxu0 0
        %2564 = vmatprep.subr.bf16.mxu0 0
        %2565 = vmatpush1.bf16.msra.mxu0 0
        %2566 = vmatprep.mubr.bf16.mxu0 0
        %2567 = vmatmul.mubr.bf16.gmra.mrb[0].mxu0 %v2532
        %v2568 = vpop.f32.mrb[0].mxu0
        %v2569 = vadd.f32 0.0, %v2568
        %v2570 = vpop.f32.mrb[0].mxu0
        %v2571 = vpop.f32.mrb[0].mxu0
        %v2572 = vpop.f32.mrb[0].mxu0
        %2573 = vdwg.mxu0
        %v2575 = vsel %vm1040, %v2482, 0
        %2577 = vmatprep.subr.bf16.mxu0 0
        %2578 = vmatpush1.bf16.msra.mxu0 %v2018
        %2579 = vmatprep.subr.bf16.mxu0 0
        %2580 = vmatpush1.bf16.msra.mxu0 0
        %2581 = vmatprep.subr.bf16.mxu0 0
        %2582 = vmatpush1.bf16.msra.mxu0 0
        %2583 = vmatprep.subr.bf16.mxu0 0
        %2584 = vmatpush1.bf16.msra.mxu0 0
        %2585 = vmatprep.subr.bf16.mxu0 0
        %2586 = vmatpush1.bf16.msra.mxu0 0
        %2587 = vmatprep.subr.bf16.mxu0 0
        %2588 = vmatpush1.bf16.msra.mxu0 0
        %2589 = vmatprep.subr.bf16.mxu0 0
        %2590 = vmatpush1.bf16.msra.mxu0 0
        %2591 = vmatprep.subr.bf16.mxu0 0
        %2592 = vmatpush1.bf16.msra.mxu0 0
        %2593 = vmatprep.subr.bf16.mxu0 0
        %2594 = vmatpush1.bf16.msra.mxu0 0
        %2595 = vmatprep.subr.bf16.mxu0 0
        %2596 = vmatpush1.bf16.msra.mxu0 0
        %2597 = vmatprep.subr.bf16.mxu0 0
        %2598 = vmatpush1.bf16.msra.mxu0 0
        %2599 = vmatprep.subr.bf16.mxu0 0
        %2600 = vmatpush1.bf16.msra.mxu0 0
        %2601 = vmatprep.subr.bf16.mxu0 0
        %2602 = vmatpush1.bf16.msra.mxu0 0
        %2603 = vmatprep.subr.bf16.mxu0 0
        %2604 = vmatpush1.bf16.msra.mxu0 0
        %2605 = vmatprep.subr.bf16.mxu0 0
        %2606 = vmatpush1.bf16.msra.mxu0 0
        %2607 = vmatprep.subr.bf16.mxu0 0
        %2608 = vmatpush1.bf16.msra.mxu0 0
        %2609 = vmatprep.mubr.bf16.mxu0 0
        %2610 = vmatmul.mubr.bf16.gmra.mrb[0].mxu0 %v2575
        %v2611 = vpop.f32.mrb[0].mxu0
        %v2612 = vadd.f32 0.0, %v2611
        %v2613 = vpop.f32.mrb[0].mxu0
        %v2614 = vpop.f32.mrb[0].mxu0
        %v2615 = vpop.f32.mrb[0].mxu0
        %2616 = vdwg.mxu0
        %v2618 = vsel %vm1040, %v2483, 0
        %2620 = vmatprep.subr.bf16.mxu0 0
        %2621 = vmatpush1.bf16.msra.mxu0 %v2019
        %2622 = vmatprep.subr.bf16.mxu0 0
        %2623 = vmatpush1.bf16.msra.mxu0 0
        %2624 = vmatprep.subr.bf16.mxu0 0
        %2625 = vmatpush1.bf16.msra.mxu0 0
        %2626 = vmatprep.subr.bf16.mxu0 0
        %2627 = vmatpush1.bf16.msra.mxu0 0
        %2628 = vmatprep.subr.bf16.mxu0 0
        %2629 = vmatpush1.bf16.msra.mxu0 0
        %2630 = vmatprep.subr.bf16.mxu0 0
        %2631 = vmatpush1.bf16.msra.mxu0 0
        %2632 = vmatprep.subr.bf16.mxu0 0
        %2633 = vmatpush1.bf16.msra.mxu0 0
        %2634 = vmatprep.subr.bf16.mxu0 0
        %2635 = vmatpush1.bf16.msra.mxu0 0
        %2636 = vmatprep.subr.bf16.mxu0 0
        %2637 = vmatpush1.bf16.msra.mxu0 0
        %2638 = vmatprep.subr.bf16.mxu0 0
        %2639 = vmatpush1.bf16.msra.mxu0 0
        %2640 = vmatprep.subr.bf16.mxu0 0
        %2641 = vmatpush1.bf16.msra.mxu0 0
        %2642 = vmatprep.subr.bf16.mxu0 0
        %2643 = vmatpush1.bf16.msra.mxu0 0
        %2644 = vmatprep.subr.bf16.mxu0 0
        %2645 = vmatpush1.bf16.msra.mxu0 0
        %2646 = vmatprep.subr.bf16.mxu0 0
        %2647 = vmatpush1.bf16.msra.mxu0 0
        %2648 = vmatprep.subr.bf16.mxu0 0
        %2649 = vmatpush1.bf16.msra.mxu0 0
        %2650 = vmatprep.subr.bf16.mxu0 0
        %2651 = vmatpush1.bf16.msra.mxu0 0
        %2652 = vmatprep.mubr.bf16.mxu0 0
        %2653 = vmatmul.mubr.bf16.gmra.mrb[0].mxu0 %v2618
        %v2654 = vpop.f32.mrb[0].mxu0
        %v2655 = vadd.f32 0.0, %v2654
        %v2656 = vpop.f32.mrb[0].mxu0
        %v2657 = vpop.f32.mrb[0].mxu0
        %v2658 = vpop.f32.mrb[0].mxu0
        %2659 = vdwg.mxu0
        %v2661 = vsel %vm1040, %v2484, 0
        %2663 = vmatprep.subr.bf16.mxu0 0
        %2664 = vmatpush1.bf16.msra.mxu0 %v2020
        %2665 = vmatprep.subr.bf16.mxu0 0
        %2666 = vmatpush1.bf16.msra.mxu0 0
        %2667 = vmatprep.subr.bf16.mxu0 0
        %2668 = vmatpush1.bf16.msra.mxu0 0
        %2669 = vmatprep.subr.bf16.mxu0 0
        %2670 = vmatpush1.bf16.msra.mxu0 0
        %2671 = vmatprep.subr.bf16.mxu0 0
        %2672 = vmatpush1.bf16.msra.mxu0 0
        %2673 = vmatprep.subr.bf16.mxu0 0
        %2674 = vmatpush1.bf16.msra.mxu0 0
        %2675 = vmatprep.subr.bf16.mxu0 0
        %2676 = vmatpush1.bf16.msra.mxu0 0
        %2677 = vmatprep.subr.bf16.mxu0 0
        %2678 = vmatpush1.bf16.msra.mxu0 0
        %2679 = vmatprep.subr.bf16.mxu0 0
        %2680 = vmatpush1.bf16.msra.mxu0 0
        %2681 = vmatprep.subr.bf16.mxu0 0
        %2682 = vmatpush1.bf16.msra.mxu0 0
        %2683 = vmatprep.subr.bf16.mxu0 0
        %2684 = vmatpush1.bf16.msra.mxu0 0
        %2685 = vmatprep.subr.bf16.mxu0 0
        %2686 = vmatpush1.bf16.msra.mxu0 0
        %2687 = vmatprep.subr.bf16.mxu0 0
        %2688 = vmatpush1.bf16.msra.mxu0 0
        %2689 = vmatprep.subr.bf16.mxu0 0
        %2690 = vmatpush1.bf16.msra.mxu0 0
        %2691 = vmatprep.subr.bf16.mxu0 0
        %2692 = vmatpush1.bf16.msra.mxu0 0
        %2693 = vmatprep.subr.bf16.mxu0 0
        %2694 = vmatpush1.bf16.msra.mxu0 0
        %2695 = vmatprep.mubr.bf16.mxu0 0
        %2696 = vmatmul.mubr.bf16.gmra.mrb[0].mxu0 %v2661
        %v2697 = vpop.f32.mrb[0].mxu0
        %v2698 = vadd.f32 0.0, %v2697
        %v2699 = vpop.f32.mrb[0].mxu0
        %v2700 = vpop.f32.mrb[0].mxu0
        %v2701 = vpop.f32.mrb[0].mxu0
        %2702 = vdwg.mxu0
        %v2704 = vsel %vm1040, %v2485, 0
        %2706 = vmatprep.subr.bf16.mxu0 0
        %2707 = vmatpush1.bf16.msra.mxu0 %v2021
        %2708 = vmatprep.subr.bf16.mxu0 0
        %2709 = vmatpush1.bf16.msra.mxu0 0
        %2710 = vmatprep.subr.bf16.mxu0 0
        %2711 = vmatpush1.bf16.msra.mxu0 0
        %2712 = vmatprep.subr.bf16.mxu0 0
        %2713 = vmatpush1.bf16.msra.mxu0 0
        %2714 = vmatprep.subr.bf16.mxu0 0
        %2715 = vmatpush1.bf16.msra.mxu0 0
        %2716 = vmatprep.subr.bf16.mxu0 0
        %2717 = vmatpush1.bf16.msra.mxu0 0
        %2718 = vmatprep.subr.bf16.mxu0 0
        %2719 = vmatpush1.bf16.msra.mxu0 0
        %2720 = vmatprep.subr.bf16.mxu0 0
        %2721 = vmatpush1.bf16.msra.mxu0 0
        %2722 = vmatprep.subr.bf16.mxu0 0
        %2723 = vmatpush1.bf16.msra.mxu0 0
        %2724 = vmatprep.subr.bf16.mxu0 0
        %2725 = vmatpush1.bf16.msra.mxu0 0
        %2726 = vmatprep.subr.bf16.mxu0 0
        %2727 = vmatpush1.bf16.msra.mxu0 0
        %2728 = vmatprep.subr.bf16.mxu0 0
        %2729 = vmatpush1.bf16.msra.mxu0 0
        %2730 = vmatprep.subr.bf16.mxu0 0
        %2731 = vmatpush1.bf16.msra.mxu0 0
        %2732 = vmatprep.subr.bf16.mxu0 0
        %2733 = vmatpush1.bf16.msra.mxu0 0
        %2734 = vmatprep.subr.bf16.mxu0 0
        %2735 = vmatpush1.bf16.msra.mxu0 0
        %2736 = vmatprep.subr.bf16.mxu0 0
        %2737 = vmatpush1.bf16.msra.mxu0 0
        %2738 = vmatprep.mubr.bf16.mxu0 0
        %2739 = vmatmul.mubr.bf16.gmra.mrb[0].mxu0 %v2704
        %v2740 = vpop.f32.mrb[0].mxu0
        %v2741 = vadd.f32 0.0, %v2740
        %v2742 = vpop.f32.mrb[0].mxu0
        %v2743 = vpop.f32.mrb[0].mxu0
        %v2744 = vpop.f32.mrb[0].mxu0
        %2745 = vdwg.mxu0
        %v2747 = vsel %vm1040, %v2486, 0
        %2749 = vmatprep.subr.bf16.mxu0 0
        %2750 = vmatpush1.bf16.msra.mxu0 %v2022
        %2751 = vmatprep.subr.bf16.mxu0 0
        %2752 = vmatpush1.bf16.msra.mxu0 0
        %2753 = vmatprep.subr.bf16.mxu0 0
        %2754 = vmatpush1.bf16.msra.mxu0 0
        %2755 = vmatprep.subr.bf16.mxu0 0
        %2756 = vmatpush1.bf16.msra.mxu0 0
        %2757 = vmatprep.subr.bf16.mxu0 0
        %2758 = vmatpush1.bf16.msra.mxu0 0
        %2759 = vmatprep.subr.bf16.mxu0 0
        %2760 = vmatpush1.bf16.msra.mxu0 0
        %2761 = vmatprep.subr.bf16.mxu0 0
        %2762 = vmatpush1.bf16.msra.mxu0 0
        %2763 = vmatprep.subr.bf16.mxu0 0
        %2764 = vmatpush1.bf16.msra.mxu0 0
        %2765 = vmatprep.subr.bf16.mxu0 0
        %2766 = vmatpush1.bf16.msra.mxu0 0
        %2767 = vmatprep.subr.bf16.mxu0 0
        %2768 = vmatpush1.bf16.msra.mxu0 0
        %2769 = vmatprep.subr.bf16.mxu0 0
        %2770 = vmatpush1.bf16.msra.mxu0 0
        %2771 = vmatprep.subr.bf16.mxu0 0
        %2772 = vmatpush1.bf16.msra.mxu0 0
        %2773 = vmatprep.subr.bf16.mxu0 0
        %2774 = vmatpush1.bf16.msra.mxu0 0
        %2775 = vmatprep.subr.bf16.mxu0 0
        %2776 = vmatpush1.bf16.msra.mxu0 0
        %2777 = vmatprep.subr.bf16.mxu0 0
        %2778 = vmatpush1.bf16.msra.mxu0 0
        %2779 = vmatprep.subr.bf16.mxu0 0
        %2780 = vmatpush1.bf16.msra.mxu0 0
        %2781 = vmatprep.mubr.bf16.mxu0 0
        %2782 = vmatmul.mubr.bf16.gmra.mrb[0].mxu0 %v2747
        %v2783 = vpop.f32.mrb[0].mxu0
        %v2784 = vadd.f32 0.0, %v2783
        %v2785 = vpop.f32.mrb[0].mxu0
        %v2786 = vpop.f32.mrb[0].mxu0
        %v2787 = vpop.f32.mrb[0].mxu0
        %2788 = vdwg.mxu0
        %v2790 = vsel %vm1040, %v2487, 0
        %2792 = vmatprep.subr.bf16.mxu0 0
        %2793 = vmatpush1.bf16.msra.mxu0 %v2023
        %2794 = vmatprep.subr.bf16.mxu0 0
        %2795 = vmatpush1.bf16.msra.mxu0 0
        %2796 = vmatprep.subr.bf16.mxu0 0
        %2797 = vmatpush1.bf16.msra.mxu0 0
        %2798 = vmatprep.subr.bf16.mxu0 0
        %2799 = vmatpush1.bf16.msra.mxu0 0
        %2800 = vmatprep.subr.bf16.mxu0 0
        %2801 = vmatpush1.bf16.msra.mxu0 0
        %2802 = vmatprep.subr.bf16.mxu0 0
        %2803 = vmatpush1.bf16.msra.mxu0 0
        %2804 = vmatprep.subr.bf16.mxu0 0
        %2805 = vmatpush1.bf16.msra.mxu0 0
        %2806 = vmatprep.subr.bf16.mxu0 0
        %2807 = vmatpush1.bf16.msra.mxu0 0
        %2808 = vmatprep.subr.bf16.mxu0 0
        %2809 = vmatpush1.bf16.msra.mxu0 0
        %2810 = vmatprep.subr.bf16.mxu0 0
        %2811 = vmatpush1.bf16.msra.mxu0 0
        %2812 = vmatprep.subr.bf16.mxu0 0
        %2813 = vmatpush1.bf16.msra.mxu0 0
        %2814 = vmatprep.subr.bf16.mxu0 0
        %2815 = vmatpush1.bf16.msra.mxu0 0
        %2816 = vmatprep.subr.bf16.mxu0 0
        %2817 = vmatpush1.bf16.msra.mxu0 0
        %2818 = vmatprep.subr.bf16.mxu0 0
        %2819 = vmatpush1.bf16.msra.mxu0 0
        %2820 = vmatprep.subr.bf16.mxu0 0
        %2821 = vmatpush1.bf16.msra.mxu0 0
        %2822 = vmatprep.subr.bf16.mxu0 0
        %2823 = vmatpush1.bf16.msra.mxu0 0
        %2824 = vmatprep.mubr.bf16.mxu0 0
        %2825 = vmatmul.mubr.bf16.gmra.mrb[0].mxu0 %v2790
        %v2826 = vpop.f32.mrb[0].mxu0
        %v2827 = vadd.f32 0.0, %v2826
        %v2828 = vpop.f32.mrb[0].mxu0
        %v2829 = vpop.f32.mrb[0].mxu0
        %v2830 = vpop.f32.mrb[0].mxu0
        %2831 = vdwg.mxu0
        %2833 = vrot.lane.b32.xlu0 %v2569, 16
        %v2834 = vpop.permute.xlu0 %2833
        %2837 = vrot.lane.b32.xlu0 %v2612, 32
        %v2838 = vpop.permute.xlu0 %2837
        %2841 = vrot.lane.b32.xlu0 %v2655, 48
        %v2842 = vpop.permute.xlu0 %2841
        %2845 = vrot.lane.b32.xlu0 %v2698, 64
        %v2846 = vpop.permute.xlu0 %2845
        %2849 = vrot.lane.b32.xlu0 %v2741, 80
        %v2850 = vpop.permute.xlu0 %2849
        %2853 = vrot.lane.b32.xlu0 %v2784, 96
        %v2854 = vpop.permute.xlu0 %2853
        %2857 = vrot.lane.b32.xlu0 %v2827, 112
        %v2858 = vpop.permute.xlu0 %2857
        %v2860 = vsel %vm1040, %v2526, %v2834
        %v2861 = vsel %vm1878, %v2860, %v2838
        %v2862 = vsel %vm1880, %v2861, %v2842
        %v2863 = vsel %vm1882, %v2862, %v2846
        %v2864 = vsel %vm1884, %v2863, %v2850
        %v2865 = vsel %vm1886, %v2864, %v2854
        %v2866 = vsel %vm1888, %v2865, %v2858
        %v2867 = vpack.c.bf16 %v2866, %v1889
        %v2868 = vld [vmem:[#allocation16] sm:$0xf]
        %v2869 = vld [vmem:[#allocation16 + $0x4] sm:$0xf]
        %v2870 = vld [vmem:[#allocation16 + $0x8] sm:$0xf]
        %v2871 = vld [vmem:[#allocation16 + $0xc] sm:$0xf]
        %v2872 = vld [vmem:[#allocation16 + $0x10] sm:$0xf]
        %v2873 = vld [vmem:[#allocation16 + $0x14] sm:$0xf]
        %v2874 = vld [vmem:[#allocation16 + $0x18] sm:$0xf]
        %v2875 = vld [vmem:[#allocation16 + $0x1c] sm:$0xf]
        %v2876 = vld [vmem:[#allocation16 + $0x20] sm:$0xf]
        %v2877 = vld [vmem:[#allocation16 + $0x24] sm:$0xf]
        %v2878 = vld [vmem:[#allocation16 + $0x28] sm:$0xf]
        %v2879 = vld [vmem:[#allocation16 + $0x2c] sm:$0xf]
        %v2880 = vld [vmem:[#allocation16 + $0x30] sm:$0xf]
        %v2881 = vld [vmem:[#allocation16 + $0x34] sm:$0xf]
        %v2882 = vld [vmem:[#allocation16 + $0x38] sm:$0xf]
        %v2883 = vld [vmem:[#allocation16 + $0x3c] sm:$0xf]
        %v2884 = vld [vmem:[#allocation17] sm:$0x1]
        %v2886 = vlaneseq
        %v2887 = vshrl.u32 %v2886, 7
        %v2888 = vsub.s32 0, %v2887
        %v2889 = vrot.slane %v2884, %v2888
        %v2907 = vunpack.c.l.b16 %v2868
        %v2908 = vunpack.c.l.b16 %v2869
        %v2909 = vunpack.c.l.b16 %v2870
        %v2910 = vunpack.c.l.b16 %v2871
        %v2911 = vunpack.c.l.b16 %v2872
        %v2912 = vunpack.c.l.b16 %v2873
        %v2913 = vunpack.c.l.b16 %v2874
        %v2914 = vunpack.c.l.b16 %v2875
        %v2915 = vunpack.c.l.b16 %v2876
        %v2916 = vunpack.c.l.b16 %v2877
        %v2917 = vunpack.c.l.b16 %v2878
        %v2918 = vunpack.c.l.b16 %v2879
        %v2919 = vunpack.c.l.b16 %v2880
        %v2920 = vunpack.c.l.b16 %v2881
        %v2921 = vunpack.c.l.b16 %v2882
        %v2922 = vunpack.c.l.b16 %v2883
        %v2923 = vpack.c.b16 %v2908, %v2907
        %v2924 = vpack.c.b16 %v2910, %v2909
        %v2925 = vpack.c.b16 %v2912, %v2911
        %v2926 = vpack.c.b16 %v2914, %v2913
        %v2927 = vpack.c.b16 %v2916, %v2915
        %v2928 = vpack.c.b16 %v2918, %v2917
        %v2929 = vpack.c.b16 %v2920, %v2919
        %v2930 = vpack.c.b16 %v2922, %v2921
        %2939 = vmatprep.subr.bf16.mxu0 0
        %2940 = vmatpush1.bf16.msra.mxu0 %v2923
        %2941 = vmatprep.subr.bf16.mxu0 0
        %2942 = vmatpush1.bf16.msra.mxu0 %v2924
        %2943 = vmatprep.subr.bf16.mxu0 0
        %2944 = vmatpush1.bf16.msra.mxu0 %v2925
        %2945 = vmatprep.subr.bf16.mxu0 0
        %2946 = vmatpush1.bf16.msra.mxu0 %v2926
        %2947 = vmatprep.subr.bf16.mxu0 0
        %2948 = vmatpush1.bf16.msra.mxu0 %v2927
        %2949 = vmatprep.subr.bf16.mxu0 0
        %2950 = vmatpush1.bf16.msra.mxu0 %v2928
        %2951 = vmatprep.subr.bf16.mxu0 0
        %2952 = vmatpush1.bf16.msra.mxu0 %v2929
        %2953 = vmatprep.subr.bf16.mxu0 0
        %2954 = vmatpush1.bf16.msra.mxu0 %v2930
        %2955 = vmatprep.subr.bf16.mxu0 0
        %2956 = vmatpush1.bf16.msra.mxu0 0
        %2957 = vmatprep.subr.bf16.mxu0 0
        %2958 = vmatpush1.bf16.msra.mxu0 0
        %2959 = vmatprep.subr.bf16.mxu0 0
        %2960 = vmatpush1.bf16.msra.mxu0 0
        %2961 = vmatprep.subr.bf16.mxu0 0
        %2962 = vmatpush1.bf16.msra.mxu0 0
        %2963 = vmatprep.subr.bf16.mxu0 0
        %2964 = vmatpush1.bf16.msra.mxu0 0
        %2965 = vmatprep.subr.bf16.mxu0 0
        %2966 = vmatpush1.bf16.msra.mxu0 0
        %2967 = vmatprep.subr.bf16.mxu0 0
        %2968 = vmatpush1.bf16.msra.mxu0 0
        %2969 = vmatprep.subr.bf16.mxu0 0
        %2970 = vmatpush1.bf16.msra.mxu0 0
        %2971 = vmatprep.mubr.bf16.mxu0 0
        %2972 = vmatmul.mubr.bf16.gmra.mrb[0].mxu0 %v2867
        %v2973 = vpop.f32.mrb[0].mxu0
        %v2974 = vadd.f32 %v2889, %v2973
        %v2975 = vpop.f32.mrb[0].mxu0
        %v2976 = vpop.f32.mrb[0].mxu0
        %v2977 = vadd.f32 %v2889, %v2976
        %v2978 = vpop.f32.mrb[0].mxu0
        %2979 = vdwg.mxu0
        %v2980 = vadd.f32 %v529, %v2974
        %v2981 = vadd.f32 %v530, %v2977
        %2982 = vst [vmem:[%s524] sm:$0xff] %v2980
        %2983 = vst [vmem:[%s524 + $0x8] sm:$0xff] %v2981
        %s2984 = sand.u32 %s262, 1
        %s2985 = scalar_lea.sflag [#allocation4], %s2984
        %s2986 = sand.u32 %s262, 1
        %s2987 = smul.addr %s2986, 16
        %s2988 = scalar_lea.vmem [#allocation19], %s2987
        // Predicated region
        $region101: #{tpu_custom_call.1} parent=59 // pred_check
          %p2989 = pneg %p272
        $region102: #{tpu_custom_call.1} parent=59 // pred_check_branch
          %2991 = sbr.rel (%p2989) target = $region104
        $region103: #{tpu_custom_call.1} parent=59 // pred_region
          %s2992 = smul.u32 2, %s34
          %s2994 = ssub.s32 256, 256
          %2995 = vsyncadd %s2985, %s2994
          %s2996 = smul.addr %s2992, 128
          %s2997 = scalar_lea.hbm %s10, %s2996
          %s2998 = sshll.u32 %s2988, 4
          %s2999 = int_to_ptr.vmem [resolvable:$true] %s2998
          %3004 = dma.vmem_to_hbm [thread:$0]  %s2999, 256, %s2997, %s2985, 128, 128, 8
        $region104: #{tpu_custom_call.1} parent=59 // pred_fallthru
          _
      $region60: #{tpu_custom_call.1} parent=5 // pred_fallthru
        _
      %p3005 = scmp.le.s32.totalorder 2, %s29
      // Predicated region
      $region105: #{tpu_custom_call.1} parent=5 // pred_check
        %p3006 = pneg %p3005
      $region106: #{tpu_custom_call.1} parent=5 // pred_check_branch
        %3008 = sbr.rel (%p3006) target = $region108
      $region107: #{tpu_custom_call.1} parent=5 // pred_region
        %s3009 = ssub.s32 %s29, 2
        // Predicated region
        $region109: #{tpu_custom_call.1} parent=107 // pred_check
          %p3010 = pneg %p278
        $region110: #{tpu_custom_call.1} parent=107 // pred_check_branch
          %3012 = sbr.rel (%p3010) target = $region112
        $region111: #{tpu_custom_call.1} parent=107 // pred_region
          %s3013 = sand.u32 %s263, 1
          %s3014 = scalar_lea.sflag [#allocation4], %s3013
          %s3015 = sand.u32 %s263, 1
          %s3016 = smul.addr %s3015, 16
          %s3017 = scalar_lea.vmem [#allocation19], %s3016
          %3018 = dma.done %s3014, 256
        $region112: #{tpu_custom_call.1} parent=107 // pred_fallthru
          _
      $region108: #{tpu_custom_call.1} parent=5 // pred_fallthru
        _
    $region6: #{tpu_custom_call.1} parent=1 // loop_footer
      %s33 = sadd.s32 1, %s29
    $region7: #{tpu_custom_call.1} parent=1 // loop_footer_branch
      %28 = sbr.rel target = $region3
    $region8: #{tpu_custom_call.1} parent=1 // loop_exit
      _
    %3019 = vsyncpa [#allocation3], 1
    %s3020 = scalar_lea.sflag [#allocation3], 1
    %3021 = vsyncpa %s3020, 1
    %3022 = vsyncpa [#allocation6], 1
    %s3023 = scalar_lea.sflag [#allocation6], 1
    %3024 = vsyncpa %s3023, 1
    %3025 = vsyncpa [#allocation9], 1
    %3026 = vsyncpa [#allocation12], 1
    %3027 = vsyncpa [#allocation15], 1
    %3028 = vsyncpa [#allocation18], 1
    %3029 = vsyncpa [#allocation4], 1
    %s3030 = scalar_lea.sflag [#allocation4], 1
    %3031 = vsyncpa %s3030, 1

</llo_original>
